<compile_context>
chip_gen: v7x
topology: tpu7x:2x2x1
jax: 0.10.0
libtpu: 0.0.40
codegen_flags: <defaults>
</compile_context>

<pallas_src>
import jax
import jax.numpy as jnp
import numpy as np
from jax.experimental import pallas as pl
from jax.experimental.pallas import tpu as pltpu


# ----------------------------- config (small, synthetic) -----------------------------
class conf:
    num_words = 50
    word_dim = 32
    num_filters = 32
    kernel_size = 3          # padding=1 => output length == input length
    title_len = 8
    body_len = 16
    vert_num = 10
    vert_emb_dim = 16
    subvert_num = 12
    subvert_emb_dim = 16
    dropout = 0.2            # TODO(synk): F.dropout (training=True) is stochastic; treated as identity (eval mode).


F = conf.num_filters                                  # 32
DIN = conf.word_dim + 1                               # 33: embedding dims + mask channel
FX = 2 * conf.num_filters                             # 64: extended conv-output width (pads to 128 lanes anyway)
COL_ATTN = F                                          # 32: token-attention pre-score  (y @ wl + bl)
COL_WF = F + 1                                        # 33: y @ wf projection          (bf added after pooling)
COL_ONE = F + 2                                       # 34: constant-1 column -> attention denominator
COL_MASK = F + 3                                      # 35: token mask (1 valid / 0 pad), via center conv tap
E2 = conf.vert_emb_dim + conf.subvert_emb_dim         # 32: concat vert|subvert embedding
CX = 2 * F + 2                                        # 66: vert proj | subvert proj | vert@wf | subvert@wf
OUT_W = 128                                           # lane-dense output width (cols F.. are zero)


# ----------------------------- Pallas kernel -----------------------------
def _text_branch(x_ref, w_ref, bias_row, bf, L, bb):
    """Conv1d(K=3, pad=1) + token additive attention for one text field.

    x_ref:    (bb, L+2, DIN) bf16  zero seq-padded embeddings + mask channel
    w_ref:    (3, DIN, FX)   bf16  per-tap conv weights with folded score/mask/one columns
    bias_row: (1, FX)        f32
    Returns rep (bb, F) and the view-level attention score exp(tanh(rep@wf + bf)) (bb, 1).
    """
    # K=3 conv as three shifted 2-D matmuls, f32 accumulation on the MXU.
    acc = jnp.zeros((bb * L, FX), jnp.float32)
    for k in range(conf.kernel_size):
        xk = x_ref[:, k:k + L, :].reshape(bb * L, DIN)
        acc = acc + jnp.dot(xk, w_ref[k], preferred_element_type=jnp.float32)
    y3 = (acc + bias_row).reshape(bb, L, FX)                       # layout-free: L % 8 == 0

    # token attention: a = exp(tanh(y@wl + bl)) * mask  (both read from folded columns)
    a = jnp.exp(jnp.tanh(y3[:, :, COL_ATTN:COL_ATTN + 1])) * y3[:, :, COL_MASK:COL_MASK + 1]
    pooled = jnp.sum(a * y3, axis=1)                               # (bb, FX) sublane reduce
    inv = 1.0 / (pooled[:, COL_ONE:COL_ONE + 1] + 1e-6)            # exact division (sum a + 1e-6)
    rep = pooled[:, :F] * inv                                      # (bb, F)
    score = jnp.exp(jnp.tanh(pooled[:, COL_WF:COL_WF + 1] * inv + bf))
    return rep, score


def news_encoder_kernel(title_ref, body_ref, cat_ref, wt_ref, wb_ref, wcat_ref,
                        bias_ref, scalars_ref, out_ref):
    bb = out_ref.shape[0]
    bf = scalars_ref[0]                                            # SMEM scalar

    # title / body sub-encoders
    t_rep, t_sc = _text_branch(title_ref, wt_ref, bias_ref[0:1, :FX], bf, conf.title_len, bb)
    b_rep, b_sc = _text_branch(body_ref, wb_ref, bias_ref[1:2, :FX], bf, conf.body_len, bb)

    # vert + subvert sub-encoders: one block-diagonal matmul with folded wf columns
    cat = jnp.dot(cat_ref[...], wcat_ref[...],
                  preferred_element_type=jnp.float32) + bias_ref[2:3, :CX]     # (bb, CX)
    v_rep = cat[:, :F]
    s_rep = cat[:, F:2 * F]
    v_sc = jnp.exp(jnp.tanh(cat[:, 2 * F:2 * F + 1] + bf))
    s_sc = jnp.exp(jnp.tanh(cat[:, 2 * F + 1:2 * F + 2] + bf))

    # final view-level additive attention over the 4 representations (exact division)
    inv4 = 1.0 / (t_sc + b_sc + v_sc + s_sc + 1e-6)
    mix = (t_sc * t_rep + b_sc * b_rep + v_sc * v_rep + s_sc * s_rep) * inv4
    out_ref[:, :F] = mix.astype(out_ref.dtype)
    out_ref[:, F:] = jnp.zeros((bb, OUT_W - F), out_ref.dtype)


# ----------------------------- wrapper (glue + pallas_call) -----------------------------
def _prep_text(emb, ids):
    """(B, L, D) embeddings + ids -> (B, L+2, D+1) bf16: zero seq-padding + mask channel."""
    B, L, D = emb.shape
    x = jnp.zeros((B, L + 2, DIN), jnp.float32)
    x = x.at[:, 1:L + 1, :D].set(emb)
    x = x.at[:, 1:L + 1, D].set((ids > 0).astype(jnp.float32))
    return x.astype(jnp.bfloat16)


def _pad_rows(x, rows):
    if x.shape[0] == rows:
        return x
    return jnp.pad(x, ((0, rows - x.shape[0]),) + ((0, 0),) * (x.ndim - 1))


def pack_params(p):
    K, D = conf.kernel_size, conf.word_dim

    def text_weights(wc, bc, wl, bl, wf):
        # wc: (K, D, F).  Quantize base weight the same way the reference does, then fold.
        wc_q = wc.astype(jnp.bfloat16).astype(jnp.float32)
        w = jnp.zeros((K, DIN, FX), jnp.float32)
        w = w.at[:, :D, :F].set(wc_q)
        w = w.at[:, :D, COL_ATTN].set(jnp.einsum("kdf,f->kd", wc_q, wl))   # y@wl folded
        w = w.at[:, :D, COL_WF].set(jnp.einsum("kdf,f->kd", wc_q, wf))     # y@wf folded
        w = w.at[1, D, COL_MASK].set(1.0)                                  # mask via center tap
        b = jnp.zeros((FX,), jnp.float32)
        b = b.at[:F].set(bc)
        b = b.at[COL_ATTN].set(jnp.dot(bc, wl) + bl)
        b = b.at[COL_WF].set(jnp.dot(bc, wf))
        b = b.at[COL_ONE].set(1.0)                                         # constant-1 column
        return w.astype(jnp.bfloat16), b

    wt, bt = text_weights(p["wct"], p["bct"], p["wlt"], p["blt"], p["wf"])
    wb, bb_ = text_weights(p["wcb"], p["bcb"], p["wlb"], p["blb"], p["wf"])

    Ev = conf.vert_emb_dim
    wv_q = p["wv"].astype(jnp.bfloat16).astype(jnp.float32)
    ws_q = p["ws"].astype(jnp.bfloat16).astype(jnp.float32)
    wcat = jnp.zeros((E2, CX), jnp.float32)
    wcat = wcat.at[:Ev, :F].set(wv_q)
    wcat = wcat.at[Ev:, F:2 * F].set(ws_q)
    wcat = wcat.at[:Ev, 2 * F].set(wv_q @ p["wf"])                         # vert score folded
    wcat = wcat.at[Ev:, 2 * F + 1].set(ws_q @ p["wf"])                     # subvert score folded
    bcat = jnp.zeros((CX,), jnp.float32)
    bcat = bcat.at[:F].set(p["bv"]).at[F:2 * F].set(p["bs"])
    bcat = bcat.at[2 * F].set(jnp.dot(p["bv"], p["wf"]))
    bcat = bcat.at[2 * F + 1].set(jnp.dot(p["bs"], p["wf"]))

    bias = jnp.zeros((8, 128), jnp.float32)                                # lane-dense bias slab
    bias = bias.at[0, :FX].set(bt).at[1, :FX].set(bb_).at[2, :CX].set(bcat)
    scalars = jnp.stack([p["bf"], jnp.zeros((), jnp.float32),
                         jnp.zeros((), jnp.float32), jnp.zeros((), jnp.float32)])
    return wt, wb, wcat.astype(jnp.bfloat16), bias, scalars


def news_encoder_pallas(title_ids, body_ids, vert_ids, sub_ids, params, *, block_b=128):
    # block_b is the tuning knob: 128-512 in production (keep nb >= 4 on v7x so both
    # TensorCores get >= 2 pipelined steps); small values only for tiny test batches.
    assert block_b % 8 == 0
    B = title_ids.shape[0]
    Lt, Lb = conf.title_len, conf.body_len

    # glue: embedding gathers, seq zero-padding + mask channel, category concat
    title_x = _prep_text(jnp.take(params["word_emb"], title_ids, axis=0), title_ids)
    body_x = _prep_text(jnp.take(params["word_emb"], body_ids, axis=0), body_ids)
    cat_emb = jnp.concatenate(
        [jnp.take(params["vert_emb_table"], vert_ids, axis=0),
         jnp.take(params["sub_emb_table"], sub_ids, axis=0)], axis=-1).astype(jnp.bfloat16)

    wt, wb, wcat, bias, scalars = pack_params(params)

    nb = (B + block_b - 1) // block_b
    B_pad = nb * block_b
    title_x = _pad_rows(title_x, B_pad)
    body_x = _pad_rows(body_x, B_pad)
    cat_emb = _pad_rows(cat_emb, B_pad)

    in_specs = [
        # per-batch-block streamed data (pipelined over the grid)
        pl.BlockSpec((block_b, Lt + 2, DIN), lambda i: (i, 0, 0)),
        pl.BlockSpec((block_b, Lb + 2, DIN), lambda i: (i, 0, 0)),
        pl.BlockSpec((block_b, E2), lambda i: (i, 0)),
        # resident weights (same block every grid step)
        pl.BlockSpec((conf.kernel_size, DIN, FX), lambda i: (0, 0, 0)),
        pl.BlockSpec((conf.kernel_size, DIN, FX), lambda i: (0, 0, 0)),
        pl.BlockSpec((E2, CX), lambda i: (0, 0)),
        pl.BlockSpec((8, 128), lambda i: (0, 0)),
        pl.BlockSpec(memory_space=pltpu.MemorySpace.SMEM),      # scalar bias (bf)
    ]

    out = pl.pallas_call(
        news_encoder_kernel,
        out_shape=jax.ShapeDtypeStruct((B_pad, OUT_W), jnp.float32),
        grid=(nb,),
        in_specs=in_specs,
        out_specs=pl.BlockSpec((block_b, OUT_W), lambda i: (i, 0)),
        compiler_params=pltpu.CompilerParams(
            dimension_semantics=("parallel",),                  # megacore sharding
            vmem_limit_bytes=32 * 1024 * 1024),                 # fits v5e/v6e/v7x comfortably
    )(title_x, body_x, cat_emb, wt, wb, wcat, bias, scalars)
    return out[:B, :F]


# ----------------------------- pure-JAX reference -----------------------------
def news_encoder_ref(title_ids, body_ids, vert_ids, sub_ids, p):
    def conv_attn(ids, wc, bc, wl, bl):
        emb = jnp.take(p["word_emb"], ids, axis=0)
        B, L, D = emb.shape
        xp = jnp.pad(emb, ((0, 0), (1, 1), (0, 0)))
        win = jnp.concatenate([xp[:, k:k + L, :] for k in range(conf.kernel_size)], axis=-1)
        wcp = wc.reshape(-1, F)
        # same bf16 matmul inputs / f32 accumulation as the kernel
        y = jnp.einsum("blk,kf->blf", win.astype(jnp.bfloat16), wcp.astype(jnp.bfloat16),
                       preferred_element_type=jnp.float32) + bc[None, None, :]
        a = jnp.exp(jnp.tanh(jnp.einsum("blf,f->bl", y, wl) + bl)) * (ids > 0).astype(jnp.float32)
        alpha = a / (jnp.sum(a, 1, keepdims=True) + 1e-6)
        return jnp.sum(alpha[:, :, None] * y, axis=1)

    t = conv_attn(title_ids, p["wct"], p["bct"], p["wlt"], p["blt"])
    b = conv_attn(body_ids, p["wcb"], p["bcb"], p["wlb"], p["blb"])
    vert_emb = jnp.take(p["vert_emb_table"], vert_ids, axis=0)
    sub_emb = jnp.take(p["sub_emb_table"], sub_ids, axis=0)
    v = jnp.dot(vert_emb.astype(jnp.bfloat16), p["wv"].astype(jnp.bfloat16),
                preferred_element_type=jnp.float32) + p["bv"]
    s = jnp.dot(sub_emb.astype(jnp.bfloat16), p["ws"].astype(jnp.bfloat16),
                preferred_element_type=jnp.float32) + p["bs"]
    reps = jnp.stack([t, b, v, s], axis=1)
    a = jnp.exp(jnp.tanh(jnp.einsum("brf,f->br", reps, p["wf"]) + p["bf"]))
    alpha = a / (jnp.sum(a, 1, keepdims=True) + 1e-6)
    return jnp.sum(alpha[:, :, None] * reps, axis=1)


# ----------------------------- parameter init (deterministic) -----------------------------
def xavier_uniform(key, shape, fan_in, fan_out):
    bound = float(np.sqrt(6.0 / (fan_in + fan_out)))
    return jax.random.uniform(key, shape, jnp.float32, -bound, bound)


def make_params(key):
    ks = jax.random.split(key, 10)
    D, Fn, K = conf.word_dim, conf.num_filters, conf.kernel_size
    # Conv1d weights: PyTorch (F, D, K); store transposed as (K, D, F)
    wct = jnp.transpose(xavier_uniform(ks[0], (Fn, D, K), D * K, Fn * K), (2, 1, 0))
    wcb = jnp.transpose(xavier_uniform(ks[1], (Fn, D, K), D * K, Fn * K), (2, 1, 0))
    # attention linears (out=1, in=F) -> stored as (F,)
    wlt = xavier_uniform(ks[2], (Fn,), Fn, 1)
    wlb = xavier_uniform(ks[3], (Fn,), Fn, 1)
    # vert/subvert linears (out=F, in=E) -> stored transposed (E, F)
    wv = jnp.transpose(xavier_uniform(ks[4], (Fn, conf.vert_emb_dim), conf.vert_emb_dim, Fn))
    ws = jnp.transpose(xavier_uniform(ks[5], (Fn, conf.subvert_emb_dim), conf.subvert_emb_dim, Fn))
    wf = xavier_uniform(ks[6], (Fn,), Fn, 1)
    zF = jnp.zeros((Fn,), jnp.float32)
    z = jnp.zeros((), jnp.float32)
    return dict(
        wct=wct, bct=zF, wlt=wlt, blt=z,
        wcb=wcb, bcb=zF, wlb=wlb, blb=z,
        wv=wv, bv=zF, ws=ws, bs=zF,
        wf=wf, bf=z,
        word_emb=jax.random.normal(ks[7], (conf.num_words, conf.word_dim), jnp.float32),
        vert_emb_table=jax.random.normal(ks[8], (conf.vert_num, conf.vert_emb_dim), jnp.float32),
        sub_emb_table=jax.random.normal(ks[9], (conf.subvert_num, conf.subvert_emb_dim), jnp.float32),
    )


# ----------------------------- main -----------------------------
if __name__ == "__main__":
    key = jax.random.PRNGKey(0)
    kp, kt, kb, kv, ksub = jax.random.split(key, 5)
    params = make_params(kp)

    # small test shapes: block_b=16 with B=64 gives a 4-step grid (exercises the
    # pipelining + "parallel" path).  Production would use block_b=128..512.
    B = 64
    title_ids = jax.random.randint(kt, (B, conf.title_len), 0, conf.num_words, jnp.int32)
    body_ids = jax.random.randint(kb, (B, conf.body_len), 0, conf.num_words, jnp.int32)
    vert_ids = jax.random.randint(kv, (B,), 0, conf.vert_num, jnp.int32)
    sub_ids = jax.random.randint(ksub, (B,), 0, conf.subvert_num, jnp.int32)

    out = news_encoder_pallas(title_ids, body_ids, vert_ids, sub_ids, params, block_b=16)
    out = jax.block_until_ready(out)

    ref = news_encoder_ref(title_ids, body_ids, vert_ids, sub_ids, params)
    # tolerance covers bf16 matmul inputs and the bf16-rounded folded score columns
    np.testing.assert_allclose(np.asarray(out), np.asarray(ref), rtol=2e-2, atol=2e-2)
    assert out.shape == (B, conf.num_filters)
    print("KERNEL_OK")
</pallas_src>

<mosaic_0001>
module attributes {stable_mosaic.version = 11 : i64} {
  func.func @news_encoder_kernel(%arg0: i32, %arg1: memref<16x10x33xbf16, #tpu.memory_space<vmem>>, %arg2: memref<16x18x33xbf16, #tpu.memory_space<vmem>>, %arg3: memref<16x32xbf16, #tpu.memory_space<vmem>>, %arg4: memref<3x33x64xbf16, #tpu.memory_space<vmem>>, %arg5: memref<3x33x64xbf16, #tpu.memory_space<vmem>>, %arg6: memref<32x66xbf16, #tpu.memory_space<vmem>>, %arg7: memref<8x128xf32, #tpu.memory_space<vmem>>, %arg8: memref<4xf32, #tpu.memory_space<smem>>, %arg9: memref<16x128xf32, #tpu.memory_space<vmem>>) attributes {dimension_semantics = [#tpu.dimension_semantics<parallel>], iteration_bounds = array<i64: 4>, scalar_prefetch = 0 : i64, scratch_operands = 0 : i64, tpu.core_type = #tpu.core_type<tc>, window_params = [{transform_indices = @transform_0, window_bounds = array<i64: 16, 10, 33>}, {transform_indices = @transform_1, window_bounds = array<i64: 16, 18, 33>}, {transform_indices = @transform_2, window_bounds = array<i64: 16, 32>}, {pipeline_mode = #tpu.pipeline_mode<synchronous>, transform_indices = @transform_3, window_bounds = array<i64: 3, 33, 64>}, {pipeline_mode = #tpu.pipeline_mode<synchronous>, transform_indices = @transform_4, window_bounds = array<i64: 3, 33, 64>}, {pipeline_mode = #tpu.pipeline_mode<synchronous>, transform_indices = @transform_5, window_bounds = array<i64: 32, 66>}, {pipeline_mode = #tpu.pipeline_mode<synchronous>, transform_indices = @transform_6, window_bounds = array<i64: 8, 128>}, {transform_indices = @transform_7, window_bounds = array<i64: 4>}, {transform_indices = @transform_8, window_bounds = array<i64: 16, 128>}]} {
    %c0 = arith.constant 0 : index
    %0 = memref.load %arg8[%c0] : memref<4xf32, #tpu.memory_space<smem>>
    %c0_0 = arith.constant 0 : index
    %c0_1 = arith.constant 0 : index
    %1 = vector.load %arg7[%c0_0, %c0_1] : memref<8x128xf32, #tpu.memory_space<vmem>>, vector<1x64xf32>
    %cst = arith.constant 0.000000e+00 : f32
    %2 = vector.broadcast %cst : f32 to vector<128x64xf32>
    %c0_2 = arith.constant 0 : index
    %c0_3 = arith.constant 0 : index
    %c0_4 = arith.constant 0 : index
    %3 = vector.load %arg1[%c0_2, %c0_3, %c0_4] : memref<16x10x33xbf16, #tpu.memory_space<vmem>>, vector<16x8x33xbf16>
    %4 = vector.shape_cast %3 : vector<16x8x33xbf16> to vector<128x33xbf16>
    %c0_5 = arith.constant 0 : index
    %c0_6 = arith.constant 0 : index
    %c0_7 = arith.constant 0 : index
    %5 = vector.load %arg4[%c0_5, %c0_6, %c0_7] : memref<3x33x64xbf16, #tpu.memory_space<vmem>>, vector<1x33x64xbf16>
    %6 = vector.shape_cast %5 : vector<1x33x64xbf16> to vector<33x64xbf16>
    %cst_8 = arith.constant dense<0.000000e+00> : vector<128x64xf32>
    %7 = tpu.matmul %4, %6, %cst_8 {dimension_numbers = #tpu.dot_dimension_numbers<[1], [0], [0], [1], [0, 0, 1, 1], [], []>} : vector<128x33xbf16>, vector<33x64xbf16>, vector<128x64xf32> -> vector<128x64xf32>
    %8 = arith.addf %2, %7 : vector<128x64xf32>
    %c0_9 = arith.constant 0 : index
    %c1 = arith.constant 1 : index
    %c0_10 = arith.constant 0 : index
    %9 = vector.load %arg1[%c0_9, %c1, %c0_10] : memref<16x10x33xbf16, #tpu.memory_space<vmem>>, vector<16x8x33xbf16>
    %10 = vector.shape_cast %9 : vector<16x8x33xbf16> to vector<128x33xbf16>
    %c1_11 = arith.constant 1 : index
    %c0_12 = arith.constant 0 : index
    %c0_13 = arith.constant 0 : index
    %11 = vector.load %arg4[%c1_11, %c0_12, %c0_13] : memref<3x33x64xbf16, #tpu.memory_space<vmem>>, vector<1x33x64xbf16>
    %12 = vector.shape_cast %11 : vector<1x33x64xbf16> to vector<33x64xbf16>
    %cst_14 = arith.constant dense<0.000000e+00> : vector<128x64xf32>
    %13 = tpu.matmul %10, %12, %cst_14 {dimension_numbers = #tpu.dot_dimension_numbers<[1], [0], [0], [1], [0, 0, 1, 1], [], []>} : vector<128x33xbf16>, vector<33x64xbf16>, vector<128x64xf32> -> vector<128x64xf32>
    %14 = arith.addf %8, %13 : vector<128x64xf32>
    %c0_15 = arith.constant 0 : index
    %c2 = arith.constant 2 : index
    %c0_16 = arith.constant 0 : index
    %15 = vector.load %arg1[%c0_15, %c2, %c0_16] : memref<16x10x33xbf16, #tpu.memory_space<vmem>>, vector<16x8x33xbf16>
    %16 = vector.shape_cast %15 : vector<16x8x33xbf16> to vector<128x33xbf16>
    %c2_17 = arith.constant 2 : index
    %c0_18 = arith.constant 0 : index
    %c0_19 = arith.constant 0 : index
    %17 = vector.load %arg4[%c2_17, %c0_18, %c0_19] : memref<3x33x64xbf16, #tpu.memory_space<vmem>>, vector<1x33x64xbf16>
    %18 = vector.shape_cast %17 : vector<1x33x64xbf16> to vector<33x64xbf16>
    %cst_20 = arith.constant dense<0.000000e+00> : vector<128x64xf32>
    %19 = tpu.matmul %16, %18, %cst_20 {dimension_numbers = #tpu.dot_dimension_numbers<[1], [0], [0], [1], [0, 0, 1, 1], [], []>} : vector<128x33xbf16>, vector<33x64xbf16>, vector<128x64xf32> -> vector<128x64xf32>
    %20 = arith.addf %14, %19 : vector<128x64xf32>
    %21 = vector.broadcast %1 : vector<1x64xf32> to vector<128x64xf32>
    %22 = arith.addf %20, %21 : vector<128x64xf32>
    %23 = vector.shape_cast %22 : vector<128x64xf32> to vector<16x8x64xf32>
    %24 = vector.extract_strided_slice %23 {offsets = [0, 0, 32], sizes = [16, 8, 1], strides = [1, 1, 1]} : vector<16x8x64xf32> to vector<16x8x1xf32>
    %25 = math.tanh %24 : vector<16x8x1xf32>
    %26 = math.exp %25 : vector<16x8x1xf32>
    %27 = vector.extract_strided_slice %23 {offsets = [0, 0, 35], sizes = [16, 8, 1], strides = [1, 1, 1]} : vector<16x8x64xf32> to vector<16x8x1xf32>
    %28 = arith.mulf %26, %27 : vector<16x8x1xf32>
    %29 = vector.broadcast %28 : vector<16x8x1xf32> to vector<16x8x64xf32>
    %30 = arith.mulf %29, %23 : vector<16x8x64xf32>
    %cst_21 = arith.constant dense<0.000000e+00> : vector<16x64xf32>
    %31 = vector.multi_reduction <add>, %30, %cst_21 [1] : vector<16x8x64xf32> to vector<16x64xf32>
    %32 = vector.extract_strided_slice %31 {offsets = [0, 34], sizes = [16, 1], strides = [1, 1]} : vector<16x64xf32> to vector<16x1xf32>
    %cst_22 = arith.constant 9.99999997E-7 : f32
    %33 = vector.broadcast %cst_22 : f32 to vector<16x1xf32>
    %34 = arith.addf %32, %33 : vector<16x1xf32>
    %cst_23 = arith.constant 1.000000e+00 : f32
    %35 = vector.broadcast %cst_23 : f32 to vector<16x1xf32>
    %36 = arith.divf %35, %34 : vector<16x1xf32>
    %37 = vector.extract_strided_slice %31 {offsets = [0, 0], sizes = [16, 32], strides = [1, 1]} : vector<16x64xf32> to vector<16x32xf32>
    %38 = vector.broadcast %36 : vector<16x1xf32> to vector<16x32xf32>
    %39 = arith.mulf %37, %38 : vector<16x32xf32>
    %40 = vector.extract_strided_slice %31 {offsets = [0, 33], sizes = [16, 1], strides = [1, 1]} : vector<16x64xf32> to vector<16x1xf32>
    %41 = arith.mulf %40, %36 : vector<16x1xf32>
    %42 = vector.broadcast %0 : f32 to vector<16x1xf32>
    %43 = arith.addf %41, %42 : vector<16x1xf32>
    %44 = math.tanh %43 : vector<16x1xf32>
    %45 = math.exp %44 : vector<16x1xf32>
    %c1_24 = arith.constant 1 : index
    %c0_25 = arith.constant 0 : index
    %46 = vector.load %arg7[%c1_24, %c0_25] : memref<8x128xf32, #tpu.memory_space<vmem>>, vector<1x64xf32>
    %cst_26 = arith.constant 0.000000e+00 : f32
    %47 = vector.broadcast %cst_26 : f32 to vector<256x64xf32>
    %c0_27 = arith.constant 0 : index
    %c0_28 = arith.constant 0 : index
    %c0_29 = arith.constant 0 : index
    %48 = vector.load %arg2[%c0_27, %c0_28, %c0_29] : memref<16x18x33xbf16, #tpu.memory_space<vmem>>, vector<16x16x33xbf16>
    %49 = vector.shape_cast %48 : vector<16x16x33xbf16> to vector<256x33xbf16>
    %c0_30 = arith.constant 0 : index
    %c0_31 = arith.constant 0 : index
    %c0_32 = arith.constant 0 : index
    %50 = vector.load %arg5[%c0_30, %c0_31, %c0_32] : memref<3x33x64xbf16, #tpu.memory_space<vmem>>, vector<1x33x64xbf16>
    %51 = vector.shape_cast %50 : vector<1x33x64xbf16> to vector<33x64xbf16>
    %cst_33 = arith.constant dense<0.000000e+00> : vector<256x64xf32>
    %52 = tpu.matmul %49, %51, %cst_33 {dimension_numbers = #tpu.dot_dimension_numbers<[1], [0], [0], [1], [0, 0, 1, 1], [], []>} : vector<256x33xbf16>, vector<33x64xbf16>, vector<256x64xf32> -> vector<256x64xf32>
    %53 = arith.addf %47, %52 : vector<256x64xf32>
    %c0_34 = arith.constant 0 : index
    %c1_35 = arith.constant 1 : index
    %c0_36 = arith.constant 0 : index
    %54 = vector.load %arg2[%c0_34, %c1_35, %c0_36] : memref<16x18x33xbf16, #tpu.memory_space<vmem>>, vector<16x16x33xbf16>
    %55 = vector.shape_cast %54 : vector<16x16x33xbf16> to vector<256x33xbf16>
    %c1_37 = arith.constant 1 : index
    %c0_38 = arith.constant 0 : index
    %c0_39 = arith.constant 0 : index
    %56 = vector.load %arg5[%c1_37, %c0_38, %c0_39] : memref<3x33x64xbf16, #tpu.memory_space<vmem>>, vector<1x33x64xbf16>
    %57 = vector.shape_cast %56 : vector<1x33x64xbf16> to vector<33x64xbf16>
    %cst_40 = arith.constant dense<0.000000e+00> : vector<256x64xf32>
    %58 = tpu.matmul %55, %57, %cst_40 {dimension_numbers = #tpu.dot_dimension_numbers<[1], [0], [0], [1], [0, 0, 1, 1], [], []>} : vector<256x33xbf16>, vector<33x64xbf16>, vector<256x64xf32> -> vector<256x64xf32>
    %59 = arith.addf %53, %58 : vector<256x64xf32>
    %c0_41 = arith.constant 0 : index
    %c2_42 = arith.constant 2 : index
    %c0_43 = arith.constant 0 : index
    %60 = vector.load %arg2[%c0_41, %c2_42, %c0_43] : memref<16x18x33xbf16, #tpu.memory_space<vmem>>, vector<16x16x33xbf16>
    %61 = vector.shape_cast %60 : vector<16x16x33xbf16> to vector<256x33xbf16>
    %c2_44 = arith.constant 2 : index
    %c0_45 = arith.constant 0 : index
    %c0_46 = arith.constant 0 : index
    %62 = vector.load %arg5[%c2_44, %c0_45, %c0_46] : memref<3x33x64xbf16, #tpu.memory_space<vmem>>, vector<1x33x64xbf16>
    %63 = vector.shape_cast %62 : vector<1x33x64xbf16> to vector<33x64xbf16>
    %cst_47 = arith.constant dense<0.000000e+00> : vector<256x64xf32>
    %64 = tpu.matmul %61, %63, %cst_47 {dimension_numbers = #tpu.dot_dimension_numbers<[1], [0], [0], [1], [0, 0, 1, 1], [], []>} : vector<256x33xbf16>, vector<33x64xbf16>, vector<256x64xf32> -> vector<256x64xf32>
    %65 = arith.addf %59, %64 : vector<256x64xf32>
    %66 = vector.broadcast %46 : vector<1x64xf32> to vector<256x64xf32>
    %67 = arith.addf %65, %66 : vector<256x64xf32>
    %68 = vector.shape_cast %67 : vector<256x64xf32> to vector<16x16x64xf32>
    %69 = vector.extract_strided_slice %68 {offsets = [0, 0, 32], sizes = [16, 16, 1], strides = [1, 1, 1]} : vector<16x16x64xf32> to vector<16x16x1xf32>
    %70 = math.tanh %69 : vector<16x16x1xf32>
    %71 = math.exp %70 : vector<16x16x1xf32>
    %72 = vector.extract_strided_slice %68 {offsets = [0, 0, 35], sizes = [16, 16, 1], strides = [1, 1, 1]} : vector<16x16x64xf32> to vector<16x16x1xf32>
    %73 = arith.mulf %71, %72 : vector<16x16x1xf32>
    %74 = vector.broadcast %73 : vector<16x16x1xf32> to vector<16x16x64xf32>
    %75 = arith.mulf %74, %68 : vector<16x16x64xf32>
    %cst_48 = arith.constant dense<0.000000e+00> : vector<16x64xf32>
    %76 = vector.multi_reduction <add>, %75, %cst_48 [1] : vector<16x16x64xf32> to vector<16x64xf32>
    %77 = vector.extract_strided_slice %76 {offsets = [0, 34], sizes = [16, 1], strides = [1, 1]} : vector<16x64xf32> to vector<16x1xf32>
    %cst_49 = arith.constant 9.99999997E-7 : f32
    %78 = vector.broadcast %cst_49 : f32 to vector<16x1xf32>
    %79 = arith.addf %77, %78 : vector<16x1xf32>
    %cst_50 = arith.constant 1.000000e+00 : f32
    %80 = vector.broadcast %cst_50 : f32 to vector<16x1xf32>
    %81 = arith.divf %80, %79 : vector<16x1xf32>
    %82 = vector.extract_strided_slice %76 {offsets = [0, 0], sizes = [16, 32], strides = [1, 1]} : vector<16x64xf32> to vector<16x32xf32>
    %83 = vector.broadcast %81 : vector<16x1xf32> to vector<16x32xf32>
    %84 = arith.mulf %82, %83 : vector<16x32xf32>
    %85 = vector.extract_strided_slice %76 {offsets = [0, 33], sizes = [16, 1], strides = [1, 1]} : vector<16x64xf32> to vector<16x1xf32>
    %86 = arith.mulf %85, %81 : vector<16x1xf32>
    %87 = vector.broadcast %0 : f32 to vector<16x1xf32>
    %88 = arith.addf %86, %87 : vector<16x1xf32>
    %89 = math.tanh %88 : vector<16x1xf32>
    %90 = math.exp %89 : vector<16x1xf32>
    %c0_51 = arith.constant 0 : index
    %c0_52 = arith.constant 0 : index
    %91 = vector.load %arg3[%c0_51, %c0_52] : memref<16x32xbf16, #tpu.memory_space<vmem>>, vector<16x32xbf16>
    %c0_53 = arith.constant 0 : index
    %c0_54 = arith.constant 0 : index
    %92 = vector.load %arg6[%c0_53, %c0_54] : memref<32x66xbf16, #tpu.memory_space<vmem>>, vector<32x66xbf16>
    %cst_55 = arith.constant dense<0.000000e+00> : vector<16x66xf32>
    %93 = tpu.matmul %91, %92, %cst_55 {dimension_numbers = #tpu.dot_dimension_numbers<[1], [0], [0], [1], [0, 0, 1, 1], [], []>} : vector<16x32xbf16>, vector<32x66xbf16>, vector<16x66xf32> -> vector<16x66xf32>
    %c2_56 = arith.constant 2 : index
    %c0_57 = arith.constant 0 : index
    %94 = vector.load %arg7[%c2_56, %c0_57] : memref<8x128xf32, #tpu.memory_space<vmem>>, vector<1x66xf32>
    %95 = vector.broadcast %94 : vector<1x66xf32> to vector<16x66xf32>
    %96 = arith.addf %93, %95 : vector<16x66xf32>
    %97 = vector.extract_strided_slice %96 {offsets = [0, 0], sizes = [16, 32], strides = [1, 1]} : vector<16x66xf32> to vector<16x32xf32>
    %98 = vector.extract_strided_slice %96 {offsets = [0, 32], sizes = [16, 32], strides = [1, 1]} : vector<16x66xf32> to vector<16x32xf32>
    %99 = vector.extract_strided_slice %96 {offsets = [0, 64], sizes = [16, 1], strides = [1, 1]} : vector<16x66xf32> to vector<16x1xf32>
    %100 = vector.broadcast %0 : f32 to vector<16x1xf32>
    %101 = arith.addf %99, %100 : vector<16x1xf32>
    %102 = math.tanh %101 : vector<16x1xf32>
    %103 = math.exp %102 : vector<16x1xf32>
    %104 = vector.extract_strided_slice %96 {offsets = [0, 65], sizes = [16, 1], strides = [1, 1]} : vector<16x66xf32> to vector<16x1xf32>
    %105 = vector.broadcast %0 : f32 to vector<16x1xf32>
    %106 = arith.addf %104, %105 : vector<16x1xf32>
    %107 = math.tanh %106 : vector<16x1xf32>
    %108 = math.exp %107 : vector<16x1xf32>
    %109 = arith.addf %45, %90 : vector<16x1xf32>
    %110 = arith.addf %109, %103 : vector<16x1xf32>
    %111 = arith.addf %110, %108 : vector<16x1xf32>
    %cst_58 = arith.constant 9.99999997E-7 : f32
    %112 = vector.broadcast %cst_58 : f32 to vector<16x1xf32>
    %113 = arith.addf %111, %112 : vector<16x1xf32>
    %cst_59 = arith.constant 1.000000e+00 : f32
    %114 = vector.broadcast %cst_59 : f32 to vector<16x1xf32>
    %115 = arith.divf %114, %113 : vector<16x1xf32>
    %116 = vector.broadcast %45 : vector<16x1xf32> to vector<16x32xf32>
    %117 = arith.mulf %116, %39 : vector<16x32xf32>
    %118 = vector.broadcast %90 : vector<16x1xf32> to vector<16x32xf32>
    %119 = arith.mulf %118, %84 : vector<16x32xf32>
    %120 = arith.addf %117, %119 : vector<16x32xf32>
    %121 = vector.broadcast %103 : vector<16x1xf32> to vector<16x32xf32>
    %122 = arith.mulf %121, %97 : vector<16x32xf32>
    %123 = arith.addf %120, %122 : vector<16x32xf32>
    %124 = vector.broadcast %108 : vector<16x1xf32> to vector<16x32xf32>
    %125 = arith.mulf %124, %98 : vector<16x32xf32>
    %126 = arith.addf %123, %125 : vector<16x32xf32>
    %127 = vector.broadcast %115 : vector<16x1xf32> to vector<16x32xf32>
    %128 = arith.mulf %126, %127 : vector<16x32xf32>
    %c0_60 = arith.constant 0 : index
    %c0_61 = arith.constant 0 : index
    %129 = vector.load %arg9[%c0_60, %c0_61] : memref<16x128xf32, #tpu.memory_space<vmem>>, vector<16x32xf32>
    tpu.vector_store %arg9[%c0_60, %c0_61], %128 {strides = array<i32>} : memref<16x128xf32, #tpu.memory_space<vmem>>, vector<16x32xf32>,
    %cst_62 = arith.constant 0.000000e+00 : f32
    %130 = vector.broadcast %cst_62 : f32 to vector<16x96xf32>
    %c0_63 = arith.constant 0 : index
    %c32 = arith.constant 32 : index
    %131 = vector.load %arg9[%c0_63, %c32] : memref<16x128xf32, #tpu.memory_space<vmem>>, vector<16x96xf32>
    tpu.vector_store %arg9[%c0_63, %c32], %130 {strides = array<i32>} : memref<16x128xf32, #tpu.memory_space<vmem>>, vector<16x96xf32>,
    return
  }
  func.func @transform_0(%arg0: i32) -> (i32, i32, i32) {
    %c0_i32 = arith.constant 0 : i32
    %c0_i32_0 = arith.constant 0 : i32
    %c0_i32_1 = arith.constant 0 : i32
    return %arg0, %c0_i32, %c0_i32_0 : i32, i32, i32
  }
  func.func @transform_1(%arg0: i32) -> (i32, i32, i32) {
    %c0_i32 = arith.constant 0 : i32
    %c0_i32_0 = arith.constant 0 : i32
    %c0_i32_1 = arith.constant 0 : i32
    return %arg0, %c0_i32, %c0_i32_0 : i32, i32, i32
  }
  func.func @transform_2(%arg0: i32) -> (i32, i32) {
    %c0_i32 = arith.constant 0 : i32
    %c0_i32_0 = arith.constant 0 : i32
    return %arg0, %c0_i32 : i32, i32
  }
  func.func @transform_3(%arg0: i32) -> (i32, i32, i32) {
    %c0_i32 = arith.constant 0 : i32
    %c0_i32_0 = arith.constant 0 : i32
    %c0_i32_1 = arith.constant 0 : i32
    %c0_i32_2 = arith.constant 0 : i32
    return %c0_i32, %c0_i32_0, %c0_i32_1 : i32, i32, i32
  }
  func.func @transform_4(%arg0: i32) -> (i32, i32, i32) {
    %c0_i32 = arith.constant 0 : i32
    %c0_i32_0 = arith.constant 0 : i32
    %c0_i32_1 = arith.constant 0 : i32
    %c0_i32_2 = arith.constant 0 : i32
    return %c0_i32, %c0_i32_0, %c0_i32_1 : i32, i32, i32
  }
  func.func @transform_5(%arg0: i32) -> (i32, i32) {
    %c0_i32 = arith.constant 0 : i32
    %c0_i32_0 = arith.constant 0 : i32
    %c0_i32_1 = arith.constant 0 : i32
    return %c0_i32, %c0_i32_0 : i32, i32
  }
  func.func @transform_6(%arg0: i32) -> (i32, i32) {
    %c0_i32 = arith.constant 0 : i32
    %c0_i32_0 = arith.constant 0 : i32
    %c0_i32_1 = arith.constant 0 : i32
    return %c0_i32, %c0_i32_0 : i32, i32
  }
  func.func @transform_7(%arg0: i32) -> i32 {
    %c0_i32 = arith.constant 0 : i32
    %c0_i32_0 = arith.constant 0 : i32
    return %c0_i32 : i32
  }
  func.func @transform_8(%arg0: i32) -> (i32, i32) {
    %c0_i32 = arith.constant 0 : i32
    %c0_i32_0 = arith.constant 0 : i32
    return %arg0, %c0_i32 : i32, i32
  }
}

</mosaic_0001>

<llo_original>
// kernel: tpu_custom_call.1
$region0: #{tpu_custom_call.1}
  #allocation0 [shape = 'u32[]', space=smem, size = 0x4, offset = 0x4, fixed_abs, tag = 'smem constant byte address 0x4 - core index']
  #allocation1 [shape = 'u32[144,128]{1,0:T(1,128)}', space=vmem, size = 0x12000, scoped, tag = 'internal scratch']
  %s0 = inlined_call_operand.vmem [shape: bf16[64,10,33], index: 0, kind: input, shape index: {}]
  %s1 = inlined_call_operand.vmem [shape: bf16[64,18,33], index: 1, kind: input, shape index: {}]
  %s2 = inlined_call_operand.vmem [shape: bf16[64,32], index: 2, kind: input, shape index: {}]
  %s3 = inlined_call_operand.vmem [shape: bf16[3,33,64], index: 3, kind: input, shape index: {}]
  %s4 = inlined_call_operand.vmem [shape: bf16[3,33,64], index: 4, kind: input, shape index: {}]
  %s5 = inlined_call_operand.vmem [shape: bf16[32,66], index: 5, kind: input, shape index: {}]
  %s6 = inlined_call_operand.vmem [shape: f32[8,128], index: 6, kind: input, shape index: {}]
  %s7 = inlined_call_operand.vmem [shape: f32[4], index: 7, kind: input, shape index: {}]
  %s8 = inlined_call_operand.hbm [shape: f32[64,128], index: 8, kind: output, shape index: {}]
  %s9 = sld [smem:[#allocation0]]
  $region69: #{tpu_custom_call.1} parent=0
    _
  %s11 = ssub.s32 1, %s9
  %s12 = scalar_select 0, %s11, %s9
  $region1: #{tpu_custom_call.1} parent=0
    #allocation2 [shape = 'u8[512]{0}', space=smem, size = 0x200, scoped, tag = 'input window, operand 7, single buffered']
    #allocation3 [shape = 's32[2]{0}', space=sflag, size = 0x8, scoped, tag = 'scoped memory for tpu_custom_call.1']
    #allocation4 [shape = 's32[2]{0}', space=sflag, size = 0x8, scoped, tag = 'scoped memory for tpu_custom_call.1']
    #allocation5 [shape = 'u8[16384]{0}', space=vmem, size = 0x4000, scoped, tag = 'output window, operand 0']
    %13 = vsyncpa [#allocation4], 0
    %14 = vsyncpa [#allocation3], 0
    %s15 = scalar_lea.sflag [#allocation3], 1
    %16 = vsyncpa %s15, 0
    loop: start=0, step=1, limit=6
    $region2: #{tpu_custom_call.1} parent=1 // loop_pre_header
      _
    $region3: #{tpu_custom_call.1} parent=1 // loop_header
      %s18 = sphi 0, %s22
      %p19 = scmp.ge.s32.totalorder %s18, 6
      %s28 = sphi 0, %s30
      %s31 = sphi 0, %s28
      %s32 = sphi 0, %s31
      %s48 = sphi 0, %s32
      %s54 = sphi 0, %s56
      %s57 = sphi 0, %s54
      %s58 = sphi 0, %s57
      %s74 = sphi 0, %s58
      %s80 = sphi 0, %s82
      %s83 = sphi 0, %s80
      %s84 = sphi 0, %s83
      %s100 = sphi 0, %s84
      %s104 = sphi 0, %s104
      %s106 = sphi 0, %s104
      %s107 = sphi 0, %s106
      %s121 = sphi 0, %s107
      %s125 = sphi 0, %s125
      %s127 = sphi 0, %s125
      %s128 = sphi 0, %s127
      %s142 = sphi 0, %s128
      %s146 = sphi 0, %s146
      %s148 = sphi 0, %s146
      %s149 = sphi 0, %s148
      %s163 = sphi 0, %s149
      %s167 = sphi 0, %s167
      %s169 = sphi 0, %s167
      %s170 = sphi 0, %s169
      %s184 = sphi 0, %s170
      %s188 = sphi 0, %s188
      %s190 = sphi 0, %s188
      %s191 = sphi 0, %s190
      %s205 = sphi 0, %s191
      %s211 = sphi 0, %s213
      %s214 = sphi 0, %s211
      %s215 = sphi 0, %s214
      %s231 = sphi 0, %s215
    $region4: #{tpu_custom_call.1} parent=1 // loop_header_branch
      %21 = sbr.rel (%p19) target = $region8
    $region5: #{tpu_custom_call.1} parent=1 // loop_body
      %s23 = ssub.s32 %s18, 1
      %s24 = ssub.s32 %s18, 2
      %s25 = sadd.s32 %s18, 1
      %s26 = ssub.s32 %s18, %s25
      %p27 = scmp.eq.s32.totalorder %s26, 0
      %s29 = sadd.s32 %s28, 1
      %s30 = scalar_select %p27, %s28, %s29
      %p33 = pneg %p27
      %p34 = scmp.eq.s32.totalorder %s18, 3
      %p35 = por %p33, %p34
      %p36 = scmp.ne.s32.totalorder %s28, %s31
      %p37 = scmp.eq.s32.totalorder %s18, 0
      %p38 = por %p36, %p37
      %p39 = scmp.ne.s32.totalorder %s28, %s31
      %p40 = scmp.eq.s32.totalorder %s23, 3
      %p41 = por %p39, %p40
      %p42 = scmp.ne.s32.totalorder %s31, %s32
      %p43 = scmp.eq.s32.totalorder %s23, 0
      %p44 = por %p42, %p43
      %p45 = scmp.ne.s32.totalorder %s31, %s32
      %p46 = scmp.eq.s32.totalorder %s24, 3
      %p47 = por %p45, %p46
      %p49 = scmp.ne.s32.totalorder %s32, %s48
      %p50 = scmp.eq.s32.totalorder %s24, 0
      %p51 = por %p49, %p50
      %s52 = ssub.s32 %s18, %s25
      %p53 = scmp.eq.s32.totalorder %s52, 0
      %s55 = sadd.s32 %s54, 1
      %s56 = scalar_select %p53, %s54, %s55
      %p59 = pneg %p53
      %p60 = scmp.eq.s32.totalorder %s18, 3
      %p61 = por %p59, %p60
      %p62 = scmp.ne.s32.totalorder %s54, %s57
      %p63 = scmp.eq.s32.totalorder %s18, 0
      %p64 = por %p62, %p63
      %p65 = scmp.ne.s32.totalorder %s54, %s57
      %p66 = scmp.eq.s32.totalorder %s23, 3
      %p67 = por %p65, %p66
      %p68 = scmp.ne.s32.totalorder %s57, %s58
      %p69 = scmp.eq.s32.totalorder %s23, 0
      %p70 = por %p68, %p69
      %p71 = scmp.ne.s32.totalorder %s57, %s58
      %p72 = scmp.eq.s32.totalorder %s24, 3
      %p73 = por %p71, %p72
      %p75 = scmp.ne.s32.totalorder %s58, %s74
      %p76 = scmp.eq.s32.totalorder %s24, 0
      %p77 = por %p75, %p76
      %s78 = ssub.s32 %s18, %s25
      %p79 = scmp.eq.s32.totalorder %s78, 0
      %s81 = sadd.s32 %s80, 1
      %s82 = scalar_select %p79, %s80, %s81
      %p85 = pneg %p79
      %p86 = scmp.eq.s32.totalorder %s18, 3
      %p87 = por %p85, %p86
      %p88 = scmp.ne.s32.totalorder %s80, %s83
      %p89 = scmp.eq.s32.totalorder %s18, 0
      %p90 = por %p88, %p89
      %p91 = scmp.ne.s32.totalorder %s80, %s83
      %p92 = scmp.eq.s32.totalorder %s23, 3
      %p93 = por %p91, %p92
      %p94 = scmp.ne.s32.totalorder %s83, %s84
      %p95 = scmp.eq.s32.totalorder %s23, 0
      %p96 = por %p94, %p95
      %p97 = scmp.ne.s32.totalorder %s83, %s84
      %p98 = scmp.eq.s32.totalorder %s24, 3
      %p99 = por %p97, %p98
      %p101 = scmp.ne.s32.totalorder %s84, %s100
      %p102 = scmp.eq.s32.totalorder %s24, 0
      %p103 = por %p101, %p102
      %s105 = sadd.s32 %s104, 1
      %p108 = scmp.eq.s32.totalorder %s18, 3
      %p109 = scmp.ne.s32.totalorder %s104, %s106
      %p110 = scmp.eq.s32.totalorder %s18, 0
      %p111 = por %p109, %p110
      %p112 = scmp.ne.s32.totalorder %s104, %s106
      %p113 = scmp.eq.s32.totalorder %s23, 3
      %p114 = por %p112, %p113
      %p115 = scmp.ne.s32.totalorder %s106, %s107
      %p116 = scmp.eq.s32.totalorder %s23, 0
      %p117 = por %p115, %p116
      %p118 = scmp.ne.s32.totalorder %s106, %s107
      %p119 = scmp.eq.s32.totalorder %s24, 3
      %p120 = por %p118, %p119
      %p122 = scmp.ne.s32.totalorder %s107, %s121
      %p123 = scmp.eq.s32.totalorder %s24, 0
      %p124 = por %p122, %p123
      %s126 = sadd.s32 %s125, 1
      %p129 = scmp.eq.s32.totalorder %s18, 3
      %p130 = scmp.ne.s32.totalorder %s125, %s127
      %p131 = scmp.eq.s32.totalorder %s18, 0
      %p132 = por %p130, %p131
      %p133 = scmp.ne.s32.totalorder %s125, %s127
      %p134 = scmp.eq.s32.totalorder %s23, 3
      %p135 = por %p133, %p134
      %p136 = scmp.ne.s32.totalorder %s127, %s128
      %p137 = scmp.eq.s32.totalorder %s23, 0
      %p138 = por %p136, %p137
      %p139 = scmp.ne.s32.totalorder %s127, %s128
      %p140 = scmp.eq.s32.totalorder %s24, 3
      %p141 = por %p139, %p140
      %p143 = scmp.ne.s32.totalorder %s128, %s142
      %p144 = scmp.eq.s32.totalorder %s24, 0
      %p145 = por %p143, %p144
      %s147 = sadd.s32 %s146, 1
      %p150 = scmp.eq.s32.totalorder %s18, 3
      %p151 = scmp.ne.s32.totalorder %s146, %s148
      %p152 = scmp.eq.s32.totalorder %s18, 0
      %p153 = por %p151, %p152
      %p154 = scmp.ne.s32.totalorder %s146, %s148
      %p155 = scmp.eq.s32.totalorder %s23, 3
      %p156 = por %p154, %p155
      %p157 = scmp.ne.s32.totalorder %s148, %s149
      %p158 = scmp.eq.s32.totalorder %s23, 0
      %p159 = por %p157, %p158
      %p160 = scmp.ne.s32.totalorder %s148, %s149
      %p161 = scmp.eq.s32.totalorder %s24, 3
      %p162 = por %p160, %p161
      %p164 = scmp.ne.s32.totalorder %s149, %s163
      %p165 = scmp.eq.s32.totalorder %s24, 0
      %p166 = por %p164, %p165
      %s168 = sadd.s32 %s167, 1
      %p171 = scmp.eq.s32.totalorder %s18, 3
      %p172 = scmp.ne.s32.totalorder %s167, %s169
      %p173 = scmp.eq.s32.totalorder %s18, 0
      %p174 = por %p172, %p173
      %p175 = scmp.ne.s32.totalorder %s167, %s169
      %p176 = scmp.eq.s32.totalorder %s23, 3
      %p177 = por %p175, %p176
      %p178 = scmp.ne.s32.totalorder %s169, %s170
      %p179 = scmp.eq.s32.totalorder %s23, 0
      %p180 = por %p178, %p179
      %p181 = scmp.ne.s32.totalorder %s169, %s170
      %p182 = scmp.eq.s32.totalorder %s24, 3
      %p183 = por %p181, %p182
      %p185 = scmp.ne.s32.totalorder %s170, %s184
      %p186 = scmp.eq.s32.totalorder %s24, 0
      %p187 = por %p185, %p186
      %s189 = sadd.s32 %s188, 1
      %p192 = scmp.eq.s32.totalorder %s18, 3
      %p193 = scmp.ne.s32.totalorder %s188, %s190
      %p194 = scmp.eq.s32.totalorder %s18, 0
      %p195 = por %p193, %p194
      %p196 = scmp.ne.s32.totalorder %s188, %s190
      %p197 = scmp.eq.s32.totalorder %s23, 3
      %p198 = por %p196, %p197
      %p199 = scmp.ne.s32.totalorder %s190, %s191
      %p200 = scmp.eq.s32.totalorder %s23, 0
      %p201 = por %p199, %p200
      %p202 = scmp.ne.s32.totalorder %s190, %s191
      %p203 = scmp.eq.s32.totalorder %s24, 3
      %p204 = por %p202, %p203
      %p206 = scmp.ne.s32.totalorder %s191, %s205
      %p207 = scmp.eq.s32.totalorder %s24, 0
      %p208 = por %p206, %p207
      %s209 = ssub.s32 %s18, %s25
      %p210 = scmp.eq.s32.totalorder %s209, 0
      %s212 = sadd.s32 %s211, 1
      %s213 = scalar_select %p210, %s211, %s212
      %p216 = pneg %p210
      %p217 = scmp.eq.s32.totalorder %s18, 3
      %p218 = por %p216, %p217
      %p219 = scmp.ne.s32.totalorder %s211, %s214
      %p220 = scmp.eq.s32.totalorder %s18, 0
      %p221 = por %p219, %p220
      %p222 = scmp.ne.s32.totalorder %s211, %s214
      %p223 = scmp.eq.s32.totalorder %s23, 3
      %p224 = por %p222, %p223
      %p225 = scmp.ne.s32.totalorder %s214, %s215
      %p226 = scmp.eq.s32.totalorder %s23, 0
      %p227 = por %p225, %p226
      %p228 = scmp.ne.s32.totalorder %s214, %s215
      %p229 = scmp.eq.s32.totalorder %s24, 3
      %p230 = por %p228, %p229
      %p232 = scmp.ne.s32.totalorder %s215, %s231
      %p233 = scmp.eq.s32.totalorder %s24, 0
      %p234 = por %p232, %p233
      %p235 = scmp.le.s32.totalorder 1, %s18
      %p236 = scmp.lt.s32.totalorder %s18, 5
      %p237 = pnand %p235, %p236
      %p238 = pneg %p237
      // Predicated region
      $region9: #{tpu_custom_call.1} parent=5 // pred_check
        _
      $region10: #{tpu_custom_call.1} parent=5 // pred_check_branch
        %240 = sbr.rel (%p237) target = $region12
      $region11: #{tpu_custom_call.1} parent=5 // pred_region
        %s241 = ssub.s32 %s18, 1
        // Predicated region
        $region13: #{tpu_custom_call.1} parent=11 // pred_check
          %p242 = pneg %p117
        $region14: #{tpu_custom_call.1} parent=11 // pred_check_branch
          %244 = sbr.rel (%p242) target = $region16
        $region15: #{tpu_custom_call.1} parent=11 // pred_region
          _
        $region16: #{tpu_custom_call.1} parent=11 // pred_fallthru
          _
        // Predicated region
        $region17: #{tpu_custom_call.1} parent=11 // pred_check
          %p245 = pneg %p138
        $region18: #{tpu_custom_call.1} parent=11 // pred_check_branch
          %247 = sbr.rel (%p245) target = $region20
        $region19: #{tpu_custom_call.1} parent=11 // pred_region
          _
        $region20: #{tpu_custom_call.1} parent=11 // pred_fallthru
          _
        // Predicated region
        $region21: #{tpu_custom_call.1} parent=11 // pred_check
          %p248 = pneg %p159
        $region22: #{tpu_custom_call.1} parent=11 // pred_check_branch
          %250 = sbr.rel (%p248) target = $region24
        $region23: #{tpu_custom_call.1} parent=11 // pred_region
          _
        $region24: #{tpu_custom_call.1} parent=11 // pred_fallthru
          _
        // Predicated region
        $region25: #{tpu_custom_call.1} parent=11 // pred_check
          %p251 = pneg %p180
        $region26: #{tpu_custom_call.1} parent=11 // pred_check_branch
          %253 = sbr.rel (%p251) target = $region28
        $region27: #{tpu_custom_call.1} parent=11 // pred_region
          _
        $region28: #{tpu_custom_call.1} parent=11 // pred_fallthru
          _
        // Predicated region
        $region29: #{tpu_custom_call.1} parent=11 // pred_check
          %p254 = pneg %p201
        $region30: #{tpu_custom_call.1} parent=11 // pred_check_branch
          %256 = sbr.rel (%p254) target = $region32
        $region31: #{tpu_custom_call.1} parent=11 // pred_region
          %s258 = ssub.s32 16, 16
          %259 = vsyncadd [#allocation4], %s258
          %s261 = sshll.u32 %s7, 4
          %s262 = int_to_ptr.vmem [resolvable:$true] %s261
          %264 = dma.vmem_to_smem %s262, 16, [#allocation2], [#allocation4]
        $region32: #{tpu_custom_call.1} parent=11 // pred_fallthru
          _
      $region12: #{tpu_custom_call.1} parent=5 // pred_fallthru
        _
      %p265 = scmp.lt.s32.totalorder %s18, 4
      // Predicated region
      $region33: #{tpu_custom_call.1} parent=5 // pred_check
        %p266 = pneg %p265
      $region34: #{tpu_custom_call.1} parent=5 // pred_check_branch
        %268 = sbr.rel (%p266) target = $region36
      $region35: #{tpu_custom_call.1} parent=5 // pred_region
        // Predicated region
        $region37: #{tpu_custom_call.1} parent=35 // pred_check
          %p269 = pneg %p38
        $region38: #{tpu_custom_call.1} parent=35 // pred_check_branch
          %271 = sbr.rel (%p269) target = $region40
        $region39: #{tpu_custom_call.1} parent=35 // pred_region
          %s272 = smul.u32 16, %s18
          %p273 = scmp.lt.s32.totalorder %s272, 63
          %s274 = scalar_select %p273, %s272, 63
          %s275 = smul.addr %s274, 2
          %s276 = smul.addr %s275, 4
          %s277 = scalar_lea.vmem %s0, %s276
          %s278 = smul.u32 16, %s18
        $region40: #{tpu_custom_call.1} parent=35 // pred_fallthru
          _
        // Predicated region
        $region41: #{tpu_custom_call.1} parent=35 // pred_check
          %p279 = pneg %p64
        $region42: #{tpu_custom_call.1} parent=35 // pred_check_branch
          %281 = sbr.rel (%p279) target = $region44
        $region43: #{tpu_custom_call.1} parent=35 // pred_region
          %s282 = smul.u32 16, %s18
          %p283 = scmp.lt.s32.totalorder %s282, 63
          %s284 = scalar_select %p283, %s282, 63
          %s285 = smul.addr %s284, 3
          %s286 = smul.addr %s285, 4
          %s287 = scalar_lea.vmem %s1, %s286
          %s288 = smul.u32 16, %s18
        $region44: #{tpu_custom_call.1} parent=35 // pred_fallthru
          _
        // Predicated region
        $region45: #{tpu_custom_call.1} parent=35 // pred_check
          %p289 = pneg %p90
        $region46: #{tpu_custom_call.1} parent=35 // pred_check_branch
          %291 = sbr.rel (%p289) target = $region48
        $region47: #{tpu_custom_call.1} parent=35 // pred_region
          %s292 = smul.u32 2, %s18
          %p293 = scmp.lt.s32.totalorder %s292, 7
          %s294 = scalar_select %p293, %s292, 7
          %s295 = smul.addr %s294, 4
          %s296 = scalar_lea.vmem %s2, %s295
          %s297 = smul.u32 2, %s18
        $region48: #{tpu_custom_call.1} parent=35 // pred_fallthru
          _
      $region36: #{tpu_custom_call.1} parent=5 // pred_fallthru
        _
      %p298 = scmp.le.s32.totalorder 1, %s18
      %p299 = scmp.lt.s32.totalorder %s18, 5
      %p300 = pnand %p298, %p299
      %p301 = pneg %p300
      // Predicated region
      $region49: #{tpu_custom_call.1} parent=5 // pred_check
        _
      $region50: #{tpu_custom_call.1} parent=5 // pred_check_branch
        %303 = sbr.rel (%p300) target = $region52
      $region51: #{tpu_custom_call.1} parent=5 // pred_region
        %s304 = ssub.s32 %s18, 1
        // Predicated region
        $region53: #{tpu_custom_call.1} parent=51 // pred_check
          %p305 = pneg %p201
        $region54: #{tpu_custom_call.1} parent=51 // pred_check_branch
          %307 = sbr.rel (%p305) target = $region56
        $region55: #{tpu_custom_call.1} parent=51 // pred_region
          %308 = dma.done [#allocation4], 16
        $region56: #{tpu_custom_call.1} parent=51 // pred_fallthru
          _
        %309 = sfence
        %s310 = smul.u32 16, %s23
        %p311 = scmp.lt.s32.totalorder %s310, 63
        %s312 = scalar_select %p311, %s310, 63
        %s313 = smul.addr %s312, 2
        %s314 = smul.addr %s313, 4
        %s315 = scalar_lea.vmem %s0, %s314
        %p316 = pneg %p44
        %p317 = pneg %p41
        %s318 = smul.u32 16, %s23
        %p319 = scmp.lt.s32.totalorder %s318, 63
        %s320 = scalar_select %p319, %s318, 63
        %s321 = smul.addr %s320, 3
        %s322 = smul.addr %s321, 4
        %s323 = scalar_lea.vmem %s1, %s322
        %p324 = pneg %p70
        %p325 = pneg %p67
        %s326 = smul.u32 2, %s23
        %p327 = scmp.lt.s32.totalorder %s326, 7
        %s328 = scalar_select %p327, %s326, 7
        %s329 = smul.addr %s328, 4
        %s330 = scalar_lea.vmem %s2, %s329
        %p331 = pneg %p96
        %p332 = pneg %p93
        %p333 = pneg %p117
        %p334 = pneg %p114
        %p335 = pneg %p138
        %p336 = pneg %p135
        %p337 = pneg %p159
        %p338 = pneg %p156
        %p339 = pneg %p180
        %p340 = pneg %p177
        %p341 = pneg %p201
        %p342 = pneg %p198
        %p343 = pneg %p227
        %p344 = pneg %p224
        %s345 = sand.u32 %s214, 1
        %s346 = scalar_lea.sflag [#allocation3], %s345
        %s347 = sand.u32 %s214, 1
        %s348 = smul.addr %s347, 16
        %s349 = scalar_lea.vmem [#allocation5], %s348
        %s350 = smul.u32 16, %s23
        %p351 = scmp.lt.s32.totalorder %s350, 63
        %s352 = scalar_select %p351, %s350, 63
        %s353 = smul.addr %s352, 2
        %s354 = smul.addr %s353, 4
        %s355 = scalar_lea.vmem %s0, %s354
        %s356 = smul.u32 16, %s23
        %s357 = smul.u32 16, %s23
        %p358 = scmp.lt.s32.totalorder %s357, 63
        %s359 = scalar_select %p358, %s357, 63
        %s360 = smul.addr %s359, 3
        %s361 = smul.addr %s360, 4
        %s362 = scalar_lea.vmem %s1, %s361
        %s363 = smul.u32 16, %s23
        %s364 = smul.u32 2, %s23
        %p365 = scmp.lt.s32.totalorder %s364, 7
        %s366 = scalar_select %p365, %s364, 7
        %s367 = smul.addr %s366, 4
        %s368 = scalar_lea.vmem %s2, %s367
        %s369 = smul.u32 2, %s23
        %s370 = smul.u32 2, %s23
        %s372 = sld [smem:[#allocation2]]
        %v373 = vld [vmem:[%s6] sm:$0x1]
        %v374 = vld [vmem:[%s355] sm:$0xf]
        %v375 = vld [vmem:[%s355 + $0x8] sm:$0xf]
        %v376 = vld [vmem:[%s355 + $0x10] sm:$0xf]
        %v377 = vld [vmem:[%s355 + $0x18] sm:$0xf]
        %v378 = vld [vmem:[%s355 + $0x20] sm:$0xf]
        %v379 = vld [vmem:[%s355 + $0x28] sm:$0xf]
        %v380 = vld [vmem:[%s355 + $0x30] sm:$0xf]
        %v381 = vld [vmem:[%s355 + $0x38] sm:$0xf]
        %v382 = vld [vmem:[%s355 + $0x40] sm:$0xf]
        %v383 = vld [vmem:[%s355 + $0x48] sm:$0xf]
        %v384 = vld [vmem:[%s355 + $0x50] sm:$0xf]
        %v385 = vld [vmem:[%s355 + $0x58] sm:$0xf]
        %v386 = vld [vmem:[%s355 + $0x60] sm:$0xf]
        %v387 = vld [vmem:[%s355 + $0x68] sm:$0xf]
        %v388 = vld [vmem:[%s355 + $0x70] sm:$0xf]
        %v389 = vld [vmem:[%s355 + $0x78] sm:$0xf]
        %v390 = vld [vmem:[%s3] sm:$0xf]
        %v391 = vld [vmem:[%s3 + $0x4] sm:$0xf]
        %v392 = vld [vmem:[%s3 + $0x8] sm:$0xf]
        %v393 = vld [vmem:[%s3 + $0xc] sm:$0xf]
        %v394 = vld [vmem:[%s3 + $0x10] sm:$0x1]
        %v395 = vld [vmem:[%s355 + $0x4] sm:$0x1]
        %v396 = vld [vmem:[%s355 + $0xc] sm:$0x1]
        %v397 = vld [vmem:[%s355 + $0x14] sm:$0x1]
        %v398 = vld [vmem:[%s355 + $0x1c] sm:$0x1]
        %v399 = vld [vmem:[%s355 + $0x24] sm:$0x1]
        %v400 = vld [vmem:[%s355 + $0x2c] sm:$0x1]
        %v401 = vld [vmem:[%s355 + $0x34] sm:$0x1]
        %v402 = vld [vmem:[%s355 + $0x3c] sm:$0x1]
        %v403 = vld [vmem:[%s355 + $0x44] sm:$0x1]
        %v404 = vld [vmem:[%s355 + $0x4c] sm:$0x1]
        %v405 = vld [vmem:[%s355 + $0x54] sm:$0x1]
        %v406 = vld [vmem:[%s355 + $0x5c] sm:$0x1]
        %v407 = vld [vmem:[%s355 + $0x64] sm:$0x1]
        %v408 = vld [vmem:[%s355 + $0x6c] sm:$0x1]
        %v409 = vld [vmem:[%s355 + $0x74] sm:$0x1]
        %v410 = vld [vmem:[%s355 + $0x7c] sm:$0x1]
        %vm411 = vsmask.f32 3328
        %vm412 = vsmask.f32 7440
        %vm413 = vmor %vm411, %vm412
        %v415 = vshrl.u32 %v374, 16
        %v417 = vrot.slane %v415, 4
        %v418 = vshll.u32 %v374, 16
        %v420 = vrot.slane %v418, 5
        %v421 = vor.u32 %v417, %v420
        %v422 = vrot.slane %v421, 4
        %v424 = vshll.u32 %v395, 16
        %v426 = vrot.slane %v424, 5
        %v427 = vsel %vm413, %v422, %v426
        %v429 = vshrl.u32 %v375, 16
        %v431 = vrot.slane %v429, 4
        %v432 = vshll.u32 %v375, 16
        %v434 = vrot.slane %v432, 5
        %v435 = vor.u32 %v431, %v434
        %v436 = vrot.slane %v435, 4
        %v438 = vshll.u32 %v396, 16
        %v440 = vrot.slane %v438, 5
        %v441 = vsel %vm413, %v436, %v440
        %v443 = vshrl.u32 %v376, 16
        %v445 = vrot.slane %v443, 4
        %v446 = vshll.u32 %v376, 16
        %v448 = vrot.slane %v446, 5
        %v449 = vor.u32 %v445, %v448
        %v450 = vrot.slane %v449, 4
        %v452 = vshll.u32 %v397, 16
        %v454 = vrot.slane %v452, 5
        %v455 = vsel %vm413, %v450, %v454
        %v457 = vshrl.u32 %v377, 16
        %v459 = vrot.slane %v457, 4
        %v460 = vshll.u32 %v377, 16
        %v462 = vrot.slane %v460, 5
        %v463 = vor.u32 %v459, %v462
        %v464 = vrot.slane %v463, 4
        %v466 = vshll.u32 %v398, 16
        %v468 = vrot.slane %v466, 5
        %v469 = vsel %vm413, %v464, %v468
        %v471 = vshrl.u32 %v378, 16
        %v473 = vrot.slane %v471, 4
        %v474 = vshll.u32 %v378, 16
        %v476 = vrot.slane %v474, 5
        %v477 = vor.u32 %v473, %v476
        %v478 = vrot.slane %v477, 4
        %v480 = vshll.u32 %v399, 16
        %v482 = vrot.slane %v480, 5
        %v483 = vsel %vm413, %v478, %v482
        %v485 = vshrl.u32 %v379, 16
        %v487 = vrot.slane %v485, 4
        %v488 = vshll.u32 %v379, 16
        %v490 = vrot.slane %v488, 5
        %v491 = vor.u32 %v487, %v490
        %v492 = vrot.slane %v491, 4
        %v494 = vshll.u32 %v400, 16
        %v496 = vrot.slane %v494, 5
        %v497 = vsel %vm413, %v492, %v496
        %v499 = vshrl.u32 %v380, 16
        %v501 = vrot.slane %v499, 4
        %v502 = vshll.u32 %v380, 16
        %v504 = vrot.slane %v502, 5
        %v505 = vor.u32 %v501, %v504
        %v506 = vrot.slane %v505, 4
        %v508 = vshll.u32 %v401, 16
        %v510 = vrot.slane %v508, 5
        %v511 = vsel %vm413, %v506, %v510
        %v513 = vshrl.u32 %v381, 16
        %v515 = vrot.slane %v513, 4
        %v516 = vshll.u32 %v381, 16
        %v518 = vrot.slane %v516, 5
        %v519 = vor.u32 %v515, %v518
        %v520 = vrot.slane %v519, 4
        %v522 = vshll.u32 %v402, 16
        %v524 = vrot.slane %v522, 5
        %v525 = vsel %vm413, %v520, %v524
        %v527 = vshrl.u32 %v382, 16
        %v529 = vrot.slane %v527, 4
        %v530 = vshll.u32 %v382, 16
        %v532 = vrot.slane %v530, 5
        %v533 = vor.u32 %v529, %v532
        %v534 = vrot.slane %v533, 4
        %v536 = vshll.u32 %v403, 16
        %v538 = vrot.slane %v536, 5
        %v539 = vsel %vm413, %v534, %v538
        %v541 = vshrl.u32 %v383, 16
        %v543 = vrot.slane %v541, 4
        %v544 = vshll.u32 %v383, 16
        %v546 = vrot.slane %v544, 5
        %v547 = vor.u32 %v543, %v546
        %v548 = vrot.slane %v547, 4
        %v550 = vshll.u32 %v404, 16
        %v552 = vrot.slane %v550, 5
        %v553 = vsel %vm413, %v548, %v552
        %v555 = vshrl.u32 %v384, 16
        %v557 = vrot.slane %v555, 4
        %v558 = vshll.u32 %v384, 16
        %v560 = vrot.slane %v558, 5
        %v561 = vor.u32 %v557, %v560
        %v562 = vrot.slane %v561, 4
        %v564 = vshll.u32 %v405, 16
        %v566 = vrot.slane %v564, 5
        %v567 = vsel %vm413, %v562, %v566
        %v569 = vshrl.u32 %v385, 16
        %v571 = vrot.slane %v569, 4
        %v572 = vshll.u32 %v385, 16
        %v574 = vrot.slane %v572, 5
        %v575 = vor.u32 %v571, %v574
        %v576 = vrot.slane %v575, 4
        %v578 = vshll.u32 %v406, 16
        %v580 = vrot.slane %v578, 5
        %v581 = vsel %vm413, %v576, %v580
        %v583 = vshrl.u32 %v386, 16
        %v585 = vrot.slane %v583, 4
        %v586 = vshll.u32 %v386, 16
        %v588 = vrot.slane %v586, 5
        %v589 = vor.u32 %v585, %v588
        %v590 = vrot.slane %v589, 4
        %v592 = vshll.u32 %v407, 16
        %v594 = vrot.slane %v592, 5
        %v595 = vsel %vm413, %v590, %v594
        %v597 = vshrl.u32 %v387, 16
        %v599 = vrot.slane %v597, 4
        %v600 = vshll.u32 %v387, 16
        %v602 = vrot.slane %v600, 5
        %v603 = vor.u32 %v599, %v602
        %v604 = vrot.slane %v603, 4
        %v606 = vshll.u32 %v408, 16
        %v608 = vrot.slane %v606, 5
        %v609 = vsel %vm413, %v604, %v608
        %v611 = vshrl.u32 %v388, 16
        %v613 = vrot.slane %v611, 4
        %v614 = vshll.u32 %v388, 16
        %v616 = vrot.slane %v614, 5
        %v617 = vor.u32 %v613, %v616
        %v618 = vrot.slane %v617, 4
        %v620 = vshll.u32 %v409, 16
        %v622 = vrot.slane %v620, 5
        %v623 = vsel %vm413, %v618, %v622
        %v625 = vshrl.u32 %v389, 16
        %v627 = vrot.slane %v625, 4
        %v628 = vshll.u32 %v389, 16
        %v630 = vrot.slane %v628, 5
        %v631 = vor.u32 %v627, %v630
        %v632 = vrot.slane %v631, 4
        %v634 = vshll.u32 %v410, 16
        %v636 = vrot.slane %v634, 5
        %v637 = vsel %vm413, %v632, %v636
        %s638 = scalar_lea.vmem %s3, 20
        %v639 = vld [vmem:[%s638] sm:$0xf]
        %v640 = vld [vmem:[%s638 + $0x4] sm:$0xf]
        %v641 = vld [vmem:[%s638 + $0x8] sm:$0xf]
        %v642 = vld [vmem:[%s638 + $0xc] sm:$0xf]
        %v643 = vld [vmem:[%s638 + $0x10] sm:$0x1]
        %v644 = vunpack.c.l.b16 %v427
        %v645 = vunpack.c.l.b16 %v441
        %v646 = vunpack.c.l.b16 %v455
        %v647 = vunpack.c.l.b16 %v469
        %v648 = vunpack.c.l.b16 %v483
        %v649 = vunpack.c.l.b16 %v497
        %v650 = vunpack.c.l.b16 %v511
        %v651 = vunpack.c.l.b16 %v525
        %v652 = vunpack.c.l.b16 %v539
        %v653 = vunpack.c.l.b16 %v553
        %v654 = vunpack.c.l.b16 %v567
        %v655 = vunpack.c.l.b16 %v581
        %v656 = vunpack.c.l.b16 %v595
        %v657 = vunpack.c.l.b16 %v609
        %v658 = vunpack.c.l.b16 %v623
        %v659 = vunpack.c.l.b16 %v637
        %v660 = vpack.c.b16 %v645, %v644
        %v661 = vpack.c.b16 %v647, %v646
        %v662 = vpack.c.b16 %v649, %v648
        %v663 = vpack.c.b16 %v651, %v650
        %v664 = vpack.c.b16 %v653, %v652
        %v665 = vpack.c.b16 %v655, %v654
        %v666 = vpack.c.b16 %v657, %v656
        %v667 = vpack.c.b16 %v659, %v658
        %v673 = vunpack.c.l.b16 %v639
        %v674 = vunpack.c.l.b16 %v640
        %v675 = vunpack.c.l.b16 %v641
        %v676 = vunpack.c.l.b16 %v642
        %v677 = vunpack.c.l.b16 %v643
        %v678 = vpack.c.b16 %v674, %v673
        %v679 = vpack.c.b16 %v676, %v675
        %v680 = vpack.c.b16 %v677, %v677
        %vm683 = vcmask 269312
        %v685 = vsel %vm683, %v660, 0
        %v688 = vsel %vm683, %v661, 0
        %v691 = vsel %vm683, %v662, 0
        %v694 = vsel %vm683, %v663, 0
        %v697 = vsel %vm683, %v664, 0
        %v700 = vsel %vm683, %v665, 0
        %v703 = vsel %vm683, %v666, 0
        %v706 = vsel %vm683, %v667, 0
        %vm708 = vcmask 1040384
        %v709 = vsel 0, 4294967295, 65535
        %v710 = vsel %vm708, %v709, 0
        %v712 = vand.u32 %v680, %v710
        %714 = vmatprep.subr.bf16.mxu0 0
        %715 = vmatpush1.bf16.msra.mxu0 %v678
        %716 = vmatprep.subr.bf16.mxu0 0
        %717 = vmatpush1.bf16.msra.mxu0 %v679
        %718 = vmatprep.subr.bf16.mxu0 0
        %719 = vmatpush1.bf16.msra.mxu0 %v712
        %720 = vmatprep.subr.bf16.mxu0 0
        %721 = vmatpush1.bf16.msra.mxu0 0
        %722 = vmatprep.subr.bf16.mxu0 0
        %723 = vmatpush1.bf16.msra.mxu0 0
        %724 = vmatprep.subr.bf16.mxu0 0
        %725 = vmatpush1.bf16.msra.mxu0 0
        %726 = vmatprep.subr.bf16.mxu0 0
        %727 = vmatpush1.bf16.msra.mxu0 0
        %728 = vmatprep.subr.bf16.mxu0 0
        %729 = vmatpush1.bf16.msra.mxu0 0
        %730 = vmatprep.subr.bf16.mxu0 0
        %731 = vmatpush1.bf16.msra.mxu0 0
        %732 = vmatprep.subr.bf16.mxu0 0
        %733 = vmatpush1.bf16.msra.mxu0 0
        %734 = vmatprep.subr.bf16.mxu0 0
        %735 = vmatpush1.bf16.msra.mxu0 0
        %736 = vmatprep.subr.bf16.mxu0 0
        %737 = vmatpush1.bf16.msra.mxu0 0
        %738 = vmatprep.subr.bf16.mxu0 0
        %739 = vmatpush1.bf16.msra.mxu0 0
        %740 = vmatprep.subr.bf16.mxu0 0
        %741 = vmatpush1.bf16.msra.mxu0 0
        %742 = vmatprep.subr.bf16.mxu0 0
        %743 = vmatpush1.bf16.msra.mxu0 0
        %744 = vmatprep.subr.bf16.mxu0 0
        %745 = vmatpush1.bf16.msra.mxu0 0
        %746 = vmatprep.mubr.bf16.mxu0 0
        %747 = vmatmul.mubr.bf16.gmra.mrb[0].mxu0 %v685
        %v748 = vpop.f32.mrb[0].mxu0
        %v749 = vadd.f32 0.0, %v748
        %v750 = vpop.f32.mrb[0].mxu0
        %v751 = vpop.f32.mrb[0].mxu0
        %v752 = vadd.f32 0.0, %v751
        %v753 = vpop.f32.mrb[0].mxu0
        %754 = vmatprep.mubr.bf16.mxu0 0
        %755 = vmatmul.mubr.bf16.gmra.mrb[0].mxu0 %v688
        %v756 = vpop.f32.mrb[0].mxu0
        %v757 = vadd.f32 0.0, %v756
        %v758 = vpop.f32.mrb[0].mxu0
        %v759 = vpop.f32.mrb[0].mxu0
        %v760 = vadd.f32 0.0, %v759
        %v761 = vpop.f32.mrb[0].mxu0
        %762 = vmatprep.mubr.bf16.mxu0 0
        %763 = vmatmul.mubr.bf16.gmra.mrb[0].mxu0 %v691
        %v764 = vpop.f32.mrb[0].mxu0
        %v765 = vadd.f32 0.0, %v764
        %v766 = vpop.f32.mrb[0].mxu0
        %v767 = vpop.f32.mrb[0].mxu0
        %v768 = vadd.f32 0.0, %v767
        %v769 = vpop.f32.mrb[0].mxu0
        %770 = vmatprep.mubr.bf16.mxu0 0
        %771 = vmatmul.mubr.bf16.gmra.mrb[0].mxu0 %v694
        %v772 = vpop.f32.mrb[0].mxu0
        %v773 = vadd.f32 0.0, %v772
        %v774 = vpop.f32.mrb[0].mxu0
        %v775 = vpop.f32.mrb[0].mxu0
        %v776 = vadd.f32 0.0, %v775
        %v777 = vpop.f32.mrb[0].mxu0
        %778 = vmatprep.mubr.bf16.mxu0 0
        %779 = vmatmul.mubr.bf16.gmra.mrb[0].mxu0 %v697
        %v780 = vpop.f32.mrb[0].mxu0
        %v781 = vadd.f32 0.0, %v780
        %v782 = vpop.f32.mrb[0].mxu0
        %v783 = vpop.f32.mrb[0].mxu0
        %v784 = vadd.f32 0.0, %v783
        %v785 = vpop.f32.mrb[0].mxu0
        %786 = vmatprep.mubr.bf16.mxu0 0
        %787 = vmatmul.mubr.bf16.gmra.mrb[0].mxu0 %v700
        %v788 = vpop.f32.mrb[0].mxu0
        %v789 = vadd.f32 0.0, %v788
        %v790 = vpop.f32.mrb[0].mxu0
        %v791 = vpop.f32.mrb[0].mxu0
        %v792 = vadd.f32 0.0, %v791
        %v793 = vpop.f32.mrb[0].mxu0
        %794 = vmatprep.mubr.bf16.mxu0 0
        %795 = vmatmul.mubr.bf16.gmra.mrb[0].mxu0 %v703
        %v796 = vpop.f32.mrb[0].mxu0
        %v797 = vadd.f32 0.0, %v796
        %v798 = vpop.f32.mrb[0].mxu0
        %v799 = vpop.f32.mrb[0].mxu0
        %v800 = vadd.f32 0.0, %v799
        %v801 = vpop.f32.mrb[0].mxu0
        %802 = vmatprep.mubr.bf16.mxu0 0
        %803 = vmatmul.mubr.bf16.gmra.mrb[0].mxu0 %v706
        %v804 = vpop.f32.mrb[0].mxu0
        %v805 = vadd.f32 0.0, %v804
        %v806 = vpop.f32.mrb[0].mxu0
        %v807 = vpop.f32.mrb[0].mxu0
        %v808 = vadd.f32 0.0, %v807
        %v809 = vpop.f32.mrb[0].mxu0
        %810 = vdwg.mxu0
        %v827 = vunpack.c.l.b16 %v374
        %v828 = vunpack.c.l.b16 %v375
        %v829 = vunpack.c.l.b16 %v376
        %v830 = vunpack.c.l.b16 %v377
        %v831 = vunpack.c.l.b16 %v378
        %v832 = vunpack.c.l.b16 %v379
        %v833 = vunpack.c.l.b16 %v380
        %v834 = vunpack.c.l.b16 %v381
        %v835 = vunpack.c.l.b16 %v382
        %v836 = vunpack.c.l.b16 %v383
        %v837 = vunpack.c.l.b16 %v384
        %v838 = vunpack.c.l.b16 %v385
        %v839 = vunpack.c.l.b16 %v386
        %v840 = vunpack.c.l.b16 %v387
        %v841 = vunpack.c.l.b16 %v388
        %v842 = vunpack.c.l.b16 %v389
        %v843 = vpack.c.b16 %v828, %v827
        %v844 = vpack.c.b16 %v830, %v829
        %v845 = vpack.c.b16 %v832, %v831
        %v846 = vpack.c.b16 %v834, %v833
        %v847 = vpack.c.b16 %v836, %v835
        %v848 = vpack.c.b16 %v838, %v837
        %v849 = vpack.c.b16 %v840, %v839
        %v850 = vpack.c.b16 %v842, %v841
        %v856 = vunpack.c.l.b16 %v390
        %v857 = vunpack.c.l.b16 %v391
        %v858 = vunpack.c.l.b16 %v392
        %v859 = vunpack.c.l.b16 %v393
        %v860 = vunpack.c.l.b16 %v394
        %v861 = vpack.c.b16 %v857, %v856
        %v862 = vpack.c.b16 %v859, %v858
        %v863 = vpack.c.b16 %v860, %v860
        %v867 = vsel %vm683, %v843, 0
        %v870 = vsel %vm683, %v844, 0
        %v873 = vsel %vm683, %v845, 0
        %v876 = vsel %vm683, %v846, 0
        %v879 = vsel %vm683, %v847, 0
        %v882 = vsel %vm683, %v848, 0
        %v885 = vsel %vm683, %v849, 0
        %v888 = vsel %vm683, %v850, 0
        %v891 = vand.u32 %v863, %v710
        %893 = vmatprep.subr.bf16.mxu0 0
        %894 = vmatpush1.bf16.msra.mxu0 %v861
        %895 = vmatprep.subr.bf16.mxu0 0
        %896 = vmatpush1.bf16.msra.mxu0 %v862
        %897 = vmatprep.subr.bf16.mxu0 0
        %898 = vmatpush1.bf16.msra.mxu0 %v891
        %899 = vmatprep.subr.bf16.mxu0 0
        %900 = vmatpush1.bf16.msra.mxu0 0
        %901 = vmatprep.subr.bf16.mxu0 0
        %902 = vmatpush1.bf16.msra.mxu0 0
        %903 = vmatprep.subr.bf16.mxu0 0
        %904 = vmatpush1.bf16.msra.mxu0 0
        %905 = vmatprep.subr.bf16.mxu0 0
        %906 = vmatpush1.bf16.msra.mxu0 0
        %907 = vmatprep.subr.bf16.mxu0 0
        %908 = vmatpush1.bf16.msra.mxu0 0
        %909 = vmatprep.subr.bf16.mxu0 0
        %910 = vmatpush1.bf16.msra.mxu0 0
        %911 = vmatprep.subr.bf16.mxu0 0
        %912 = vmatpush1.bf16.msra.mxu0 0
        %913 = vmatprep.subr.bf16.mxu0 0
        %914 = vmatpush1.bf16.msra.mxu0 0
        %915 = vmatprep.subr.bf16.mxu0 0
        %916 = vmatpush1.bf16.msra.mxu0 0
        %917 = vmatprep.subr.bf16.mxu0 0
        %918 = vmatpush1.bf16.msra.mxu0 0
        %919 = vmatprep.subr.bf16.mxu0 0
        %920 = vmatpush1.bf16.msra.mxu0 0
        %921 = vmatprep.subr.bf16.mxu0 0
        %922 = vmatpush1.bf16.msra.mxu0 0
        %923 = vmatprep.subr.bf16.mxu0 0
        %924 = vmatpush1.bf16.msra.mxu0 0
        %925 = vmatprep.mubr.bf16.mxu0 0
        %926 = vmatmul.mubr.bf16.gmra.mrb[0].mxu0 %v867
        %v927 = vpop.f32.mrb[0].mxu0
        %v928 = vadd.f32 %v749, %v927
        %v929 = vpop.f32.mrb[0].mxu0
        %v930 = vpop.f32.mrb[0].mxu0
        %v931 = vadd.f32 %v752, %v930
        %v932 = vpop.f32.mrb[0].mxu0
        %933 = vmatprep.mubr.bf16.mxu0 0
        %934 = vmatmul.mubr.bf16.gmra.mrb[0].mxu0 %v870
        %v935 = vpop.f32.mrb[0].mxu0
        %v936 = vadd.f32 %v757, %v935
        %v937 = vpop.f32.mrb[0].mxu0
        %v938 = vpop.f32.mrb[0].mxu0
        %v939 = vadd.f32 %v760, %v938
        %v940 = vpop.f32.mrb[0].mxu0
        %941 = vmatprep.mubr.bf16.mxu0 0
        %942 = vmatmul.mubr.bf16.gmra.mrb[0].mxu0 %v873
        %v943 = vpop.f32.mrb[0].mxu0
        %v944 = vadd.f32 %v765, %v943
        %v945 = vpop.f32.mrb[0].mxu0
        %v946 = vpop.f32.mrb[0].mxu0
        %v947 = vadd.f32 %v768, %v946
        %v948 = vpop.f32.mrb[0].mxu0
        %949 = vmatprep.mubr.bf16.mxu0 0
        %950 = vmatmul.mubr.bf16.gmra.mrb[0].mxu0 %v876
        %v951 = vpop.f32.mrb[0].mxu0
        %v952 = vadd.f32 %v773, %v951
        %v953 = vpop.f32.mrb[0].mxu0
        %v954 = vpop.f32.mrb[0].mxu0
        %v955 = vadd.f32 %v776, %v954
        %v956 = vpop.f32.mrb[0].mxu0
        %957 = vmatprep.mubr.bf16.mxu0 0
        %958 = vmatmul.mubr.bf16.gmra.mrb[0].mxu0 %v879
        %v959 = vpop.f32.mrb[0].mxu0
        %v960 = vadd.f32 %v781, %v959
        %v961 = vpop.f32.mrb[0].mxu0
        %v962 = vpop.f32.mrb[0].mxu0
        %v963 = vadd.f32 %v784, %v962
        %v964 = vpop.f32.mrb[0].mxu0
        %965 = vmatprep.mubr.bf16.mxu0 0
        %966 = vmatmul.mubr.bf16.gmra.mrb[0].mxu0 %v882
        %v967 = vpop.f32.mrb[0].mxu0
        %v968 = vadd.f32 %v789, %v967
        %v969 = vpop.f32.mrb[0].mxu0
        %v970 = vpop.f32.mrb[0].mxu0
        %v971 = vadd.f32 %v792, %v970
        %v972 = vpop.f32.mrb[0].mxu0
        %973 = vmatprep.mubr.bf16.mxu0 0
        %974 = vmatmul.mubr.bf16.gmra.mrb[0].mxu0 %v885
        %v975 = vpop.f32.mrb[0].mxu0
        %v976 = vadd.f32 %v797, %v975
        %v977 = vpop.f32.mrb[0].mxu0
        %v978 = vpop.f32.mrb[0].mxu0
        %v979 = vadd.f32 %v800, %v978
        %v980 = vpop.f32.mrb[0].mxu0
        %981 = vmatprep.mubr.bf16.mxu0 0
        %982 = vmatmul.mubr.bf16.gmra.mrb[0].mxu0 %v888
        %v983 = vpop.f32.mrb[0].mxu0
        %v984 = vadd.f32 %v805, %v983
        %v985 = vpop.f32.mrb[0].mxu0
        %v986 = vpop.f32.mrb[0].mxu0
        %v987 = vadd.f32 %v808, %v986
        %v988 = vpop.f32.mrb[0].mxu0
        %989 = vdwg.mxu0
        %v990 = vld [vmem:[%s355] sm:$0xe]
        %v991 = vld [vmem:[%s355 + $0x8] sm:$0xe]
        %v992 = vld [vmem:[%s355 + $0x10] sm:$0xe]
        %v993 = vld [vmem:[%s355 + $0x18] sm:$0xe]
        %v994 = vld [vmem:[%s355 + $0x20] sm:$0xe]
        %v995 = vld [vmem:[%s355 + $0x28] sm:$0xe]
        %v996 = vld [vmem:[%s355 + $0x30] sm:$0xe]
        %v997 = vld [vmem:[%s355 + $0x38] sm:$0xe]
        %v998 = vld [vmem:[%s355 + $0x40] sm:$0xe]
        %v999 = vld [vmem:[%s355 + $0x48] sm:$0xe]
        %v1000 = vld [vmem:[%s355 + $0x50] sm:$0xe]
        %v1001 = vld [vmem:[%s355 + $0x58] sm:$0xe]
        %v1002 = vld [vmem:[%s355 + $0x60] sm:$0xe]
        %v1003 = vld [vmem:[%s355 + $0x68] sm:$0xe]
        %v1004 = vld [vmem:[%s355 + $0x70] sm:$0xe]
        %v1005 = vld [vmem:[%s355 + $0x78] sm:$0xe]
        %vm1038 = vcmask 1042432
        %vm1039 = vcmask 1046532
        %vm1040 = vmor %vm1038, %vm1039
        %v1041 = vrot.slane %v990, 5
        %v1042 = vrot.slane %v1041, 4
        %v1043 = vrot.slane %v395, 5
        %v1044 = vsel %vm1040, %v1042, %v1043
        %v1045 = vrot.slane %v991, 5
        %v1046 = vrot.slane %v1045, 4
        %v1047 = vrot.slane %v396, 5
        %v1048 = vsel %vm1040, %v1046, %v1047
        %v1049 = vrot.slane %v992, 5
        %v1050 = vrot.slane %v1049, 4
        %v1051 = vrot.slane %v397, 5
        %v1052 = vsel %vm1040, %v1050, %v1051
        %v1053 = vrot.slane %v993, 5
        %v1054 = vrot.slane %v1053, 4
        %v1055 = vrot.slane %v398, 5
        %v1056 = vsel %vm1040, %v1054, %v1055
        %v1057 = vrot.slane %v994, 5
        %v1058 = vrot.slane %v1057, 4
        %v1059 = vrot.slane %v399, 5
        %v1060 = vsel %vm1040, %v1058, %v1059
        %v1061 = vrot.slane %v995, 5
        %v1062 = vrot.slane %v1061, 4
        %v1063 = vrot.slane %v400, 5
        %v1064 = vsel %vm1040, %v1062, %v1063
        %v1065 = vrot.slane %v996, 5
        %v1066 = vrot.slane %v1065, 4
        %v1067 = vrot.slane %v401, 5
        %v1068 = vsel %vm1040, %v1066, %v1067
        %v1069 = vrot.slane %v997, 5
        %v1070 = vrot.slane %v1069, 4
        %v1071 = vrot.slane %v402, 5
        %v1072 = vsel %vm1040, %v1070, %v1071
        %v1073 = vrot.slane %v998, 5
        %v1074 = vrot.slane %v1073, 4
        %v1075 = vrot.slane %v403, 5
        %v1076 = vsel %vm1040, %v1074, %v1075
        %v1077 = vrot.slane %v999, 5
        %v1078 = vrot.slane %v1077, 4
        %v1079 = vrot.slane %v404, 5
        %v1080 = vsel %vm1040, %v1078, %v1079
        %v1081 = vrot.slane %v1000, 5
        %v1082 = vrot.slane %v1081, 4
        %v1083 = vrot.slane %v405, 5
        %v1084 = vsel %vm1040, %v1082, %v1083
        %v1085 = vrot.slane %v1001, 5
        %v1086 = vrot.slane %v1085, 4
        %v1087 = vrot.slane %v406, 5
        %v1088 = vsel %vm1040, %v1086, %v1087
        %v1089 = vrot.slane %v1002, 5
        %v1090 = vrot.slane %v1089, 4
        %v1091 = vrot.slane %v407, 5
        %v1092 = vsel %vm1040, %v1090, %v1091
        %v1093 = vrot.slane %v1003, 5
        %v1094 = vrot.slane %v1093, 4
        %v1095 = vrot.slane %v408, 5
        %v1096 = vsel %vm1040, %v1094, %v1095
        %v1097 = vrot.slane %v1004, 5
        %v1098 = vrot.slane %v1097, 4
        %v1099 = vrot.slane %v409, 5
        %v1100 = vsel %vm1040, %v1098, %v1099
        %v1101 = vrot.slane %v1005, 5
        %v1102 = vrot.slane %v1101, 4
        %v1103 = vrot.slane %v410, 5
        %v1104 = vsel %vm1040, %v1102, %v1103
        %s1105 = scalar_lea.vmem %s3, 40
        %v1106 = vld [vmem:[%s1105] sm:$0xf]
        %v1107 = vld [vmem:[%s1105 + $0x4] sm:$0xf]
        %v1108 = vld [vmem:[%s1105 + $0x8] sm:$0xf]
        %v1109 = vld [vmem:[%s1105 + $0xc] sm:$0xf]
        %v1110 = vld [vmem:[%s1105 + $0x10] sm:$0x1]
        %v1111 = vunpack.c.l.b16 %v1044
        %v1112 = vunpack.c.l.b16 %v1048
        %v1113 = vunpack.c.l.b16 %v1052
        %v1114 = vunpack.c.l.b16 %v1056
        %v1115 = vunpack.c.l.b16 %v1060
        %v1116 = vunpack.c.l.b16 %v1064
        %v1117 = vunpack.c.l.b16 %v1068
        %v1118 = vunpack.c.l.b16 %v1072
        %v1119 = vunpack.c.l.b16 %v1076
        %v1120 = vunpack.c.l.b16 %v1080
        %v1121 = vunpack.c.l.b16 %v1084
        %v1122 = vunpack.c.l.b16 %v1088
        %v1123 = vunpack.c.l.b16 %v1092
        %v1124 = vunpack.c.l.b16 %v1096
        %v1125 = vunpack.c.l.b16 %v1100
        %v1126 = vunpack.c.l.b16 %v1104
        %v1127 = vpack.c.b16 %v1112, %v1111
        %v1128 = vpack.c.b16 %v1114, %v1113
        %v1129 = vpack.c.b16 %v1116, %v1115
        %v1130 = vpack.c.b16 %v1118, %v1117
        %v1131 = vpack.c.b16 %v1120, %v1119
        %v1132 = vpack.c.b16 %v1122, %v1121
        %v1133 = vpack.c.b16 %v1124, %v1123
        %v1134 = vpack.c.b16 %v1126, %v1125
        %v1140 = vunpack.c.l.b16 %v1106
        %v1141 = vunpack.c.l.b16 %v1107
        %v1142 = vunpack.c.l.b16 %v1108
        %v1143 = vunpack.c.l.b16 %v1109
        %v1144 = vunpack.c.l.b16 %v1110
        %v1145 = vpack.c.b16 %v1141, %v1140
        %v1146 = vpack.c.b16 %v1143, %v1142
        %v1147 = vpack.c.b16 %v1144, %v1144
        %v1151 = vsel %vm683, %v1127, 0
        %v1154 = vsel %vm683, %v1128, 0
        %v1157 = vsel %vm683, %v1129, 0
        %v1160 = vsel %vm683, %v1130, 0
        %v1163 = vsel %vm683, %v1131, 0
        %v1166 = vsel %vm683, %v1132, 0
        %v1169 = vsel %vm683, %v1133, 0
        %v1172 = vsel %vm683, %v1134, 0
        %v1175 = vand.u32 %v1147, %v710
        %1177 = vmatprep.subr.bf16.mxu0 0
        %1178 = vmatpush1.bf16.msra.mxu0 %v1145
        %1179 = vmatprep.subr.bf16.mxu0 0
        %1180 = vmatpush1.bf16.msra.mxu0 %v1146
        %1181 = vmatprep.subr.bf16.mxu0 0
        %1182 = vmatpush1.bf16.msra.mxu0 %v1175
        %1183 = vmatprep.subr.bf16.mxu0 0
        %1184 = vmatpush1.bf16.msra.mxu0 0
        %1185 = vmatprep.subr.bf16.mxu0 0
        %1186 = vmatpush1.bf16.msra.mxu0 0
        %1187 = vmatprep.subr.bf16.mxu0 0
        %1188 = vmatpush1.bf16.msra.mxu0 0
        %1189 = vmatprep.subr.bf16.mxu0 0
        %1190 = vmatpush1.bf16.msra.mxu0 0
        %1191 = vmatprep.subr.bf16.mxu0 0
        %1192 = vmatpush1.bf16.msra.mxu0 0
        %1193 = vmatprep.subr.bf16.mxu0 0
        %1194 = vmatpush1.bf16.msra.mxu0 0
        %1195 = vmatprep.subr.bf16.mxu0 0
        %1196 = vmatpush1.bf16.msra.mxu0 0
        %1197 = vmatprep.subr.bf16.mxu0 0
        %1198 = vmatpush1.bf16.msra.mxu0 0
        %1199 = vmatprep.subr.bf16.mxu0 0
        %1200 = vmatpush1.bf16.msra.mxu0 0
        %1201 = vmatprep.subr.bf16.mxu0 0
        %1202 = vmatpush1.bf16.msra.mxu0 0
        %1203 = vmatprep.subr.bf16.mxu0 0
        %1204 = vmatpush1.bf16.msra.mxu0 0
        %1205 = vmatprep.subr.bf16.mxu0 0
        %1206 = vmatpush1.bf16.msra.mxu0 0
        %1207 = vmatprep.subr.bf16.mxu0 0
        %1208 = vmatpush1.bf16.msra.mxu0 0
        %1209 = vmatprep.mubr.bf16.mxu0 0
        %1210 = vmatmul.mubr.bf16.gmra.mrb[0].mxu0 %v1151
        %v1211 = vpop.f32.mrb[0].mxu0
        %v1212 = vadd.f32 0.0, %v1211
        %v1213 = vpop.f32.mrb[0].mxu0
        %v1214 = vpop.f32.mrb[0].mxu0
        %v1215 = vadd.f32 0.0, %v1214
        %v1216 = vpop.f32.mrb[0].mxu0
        %1217 = vmatprep.mubr.bf16.mxu0 0
        %1218 = vmatmul.mubr.bf16.gmra.mrb[0].mxu0 %v1154
        %v1219 = vpop.f32.mrb[0].mxu0
        %v1220 = vadd.f32 0.0, %v1219
        %v1221 = vpop.f32.mrb[0].mxu0
        %v1222 = vpop.f32.mrb[0].mxu0
        %v1223 = vadd.f32 0.0, %v1222
        %v1224 = vpop.f32.mrb[0].mxu0
        %1225 = vmatprep.mubr.bf16.mxu0 0
        %1226 = vmatmul.mubr.bf16.gmra.mrb[0].mxu0 %v1157
        %v1227 = vpop.f32.mrb[0].mxu0
        %v1228 = vadd.f32 0.0, %v1227
        %v1229 = vpop.f32.mrb[0].mxu0
        %v1230 = vpop.f32.mrb[0].mxu0
        %v1231 = vadd.f32 0.0, %v1230
        %v1232 = vpop.f32.mrb[0].mxu0
        %1233 = vmatprep.mubr.bf16.mxu0 0
        %1234 = vmatmul.mubr.bf16.gmra.mrb[0].mxu0 %v1160
        %v1235 = vpop.f32.mrb[0].mxu0
        %v1236 = vadd.f32 0.0, %v1235
        %v1237 = vpop.f32.mrb[0].mxu0
        %v1238 = vpop.f32.mrb[0].mxu0
        %v1239 = vadd.f32 0.0, %v1238
        %v1240 = vpop.f32.mrb[0].mxu0
        %1241 = vmatprep.mubr.bf16.mxu0 0
        %1242 = vmatmul.mubr.bf16.gmra.mrb[0].mxu0 %v1163
        %v1243 = vpop.f32.mrb[0].mxu0
        %v1244 = vadd.f32 0.0, %v1243
        %v1245 = vpop.f32.mrb[0].mxu0
        %v1246 = vpop.f32.mrb[0].mxu0
        %v1247 = vadd.f32 0.0, %v1246
        %v1248 = vpop.f32.mrb[0].mxu0
        %1249 = vmatprep.mubr.bf16.mxu0 0
        %1250 = vmatmul.mubr.bf16.gmra.mrb[0].mxu0 %v1166
        %v1251 = vpop.f32.mrb[0].mxu0
        %v1252 = vadd.f32 0.0, %v1251
        %v1253 = vpop.f32.mrb[0].mxu0
        %v1254 = vpop.f32.mrb[0].mxu0
        %v1255 = vadd.f32 0.0, %v1254
        %v1256 = vpop.f32.mrb[0].mxu0
        %1257 = vmatprep.mubr.bf16.mxu0 0
        %1258 = vmatmul.mubr.bf16.gmra.mrb[0].mxu0 %v1169
        %v1259 = vpop.f32.mrb[0].mxu0
        %v1260 = vadd.f32 0.0, %v1259
        %v1261 = vpop.f32.mrb[0].mxu0
        %v1262 = vpop.f32.mrb[0].mxu0
        %v1263 = vadd.f32 0.0, %v1262
        %v1264 = vpop.f32.mrb[0].mxu0
        %1265 = vmatprep.mubr.bf16.mxu0 0
        %1266 = vmatmul.mubr.bf16.gmra.mrb[0].mxu0 %v1172
        %v1267 = vpop.f32.mrb[0].mxu0
        %v1268 = vadd.f32 0.0, %v1267
        %v1269 = vpop.f32.mrb[0].mxu0
        %v1270 = vpop.f32.mrb[0].mxu0
        %v1271 = vadd.f32 0.0, %v1270
        %v1272 = vpop.f32.mrb[0].mxu0
        %1273 = vdwg.mxu0
        %v1274 = vadd.f32 %v928, %v1212
        %v1275 = vadd.f32 %v931, %v1215
        %v1276 = vadd.f32 %v936, %v1220
        %v1277 = vadd.f32 %v939, %v1223
        %v1278 = vadd.f32 %v944, %v1228
        %v1279 = vadd.f32 %v947, %v1231
        %v1280 = vadd.f32 %v952, %v1236
        %v1281 = vadd.f32 %v955, %v1239
        %v1282 = vadd.f32 %v960, %v1244
        %v1283 = vadd.f32 %v963, %v1247
        %v1284 = vadd.f32 %v968, %v1252
        %v1285 = vadd.f32 %v971, %v1255
        %v1286 = vadd.f32 %v976, %v1260
        %v1287 = vadd.f32 %v979, %v1263
        %v1288 = vadd.f32 %v984, %v1268
        %v1289 = vadd.f32 %v987, %v1271
        %v1290 = vlaneseq
        %v1291 = vshrl.u32 %v1290, 7
        %v1292 = vsub.s32 0, %v1291
        %v1293 = vrot.slane %v373, %v1292
        %v1294 = vadd.f32 %v1274, %v1293
        %v1295 = vadd.f32 %v1275, %v1293
        %v1296 = vadd.f32 %v1276, %v1293
        %v1297 = vadd.f32 %v1277, %v1293
        %v1298 = vadd.f32 %v1278, %v1293
        %v1299 = vadd.f32 %v1279, %v1293
        %v1300 = vadd.f32 %v1280, %v1293
        %v1301 = vadd.f32 %v1281, %v1293
        %v1302 = vadd.f32 %v1282, %v1293
        %v1303 = vadd.f32 %v1283, %v1293
        %v1304 = vadd.f32 %v1284, %v1293
        %v1305 = vadd.f32 %v1285, %v1293
        %v1306 = vadd.f32 %v1286, %v1293
        %v1307 = vadd.f32 %v1287, %v1293
        %v1308 = vadd.f32 %v1288, %v1293
        %v1309 = vadd.f32 %v1289, %v1293
        %v1310 = vtanh.pop %v1294
        %v1311 = vtanh.pop %v1295
        %v1312 = vtanh.pop %v1296
        %v1313 = vtanh.pop %v1297
        %v1314 = vtanh.pop %v1298
        %v1315 = vtanh.pop %v1299
        %v1316 = vtanh.pop %v1300
        %v1317 = vtanh.pop %v1301
        %v1318 = vtanh.pop %v1302
        %v1319 = vtanh.pop %v1303
        %v1320 = vtanh.pop %v1304
        %v1321 = vtanh.pop %v1305
        %v1322 = vtanh.pop %v1306
        %v1323 = vtanh.pop %v1307
        %v1324 = vtanh.pop %v1308
        %v1325 = vtanh.pop %v1309
        %v1326 = vmul.f32 %v1310, 1.442695
        %v1327 = vpow.pop %v1326
        %v1328 = vmul.f32 %v1311, 1.442695
        %v1329 = vpow.pop %v1328
        %v1330 = vmul.f32 %v1312, 1.442695
        %v1331 = vpow.pop %v1330
        %v1332 = vmul.f32 %v1313, 1.442695
        %v1333 = vpow.pop %v1332
        %v1334 = vmul.f32 %v1314, 1.442695
        %v1335 = vpow.pop %v1334
        %v1336 = vmul.f32 %v1315, 1.442695
        %v1337 = vpow.pop %v1336
        %v1338 = vmul.f32 %v1316, 1.442695
        %v1339 = vpow.pop %v1338
        %v1340 = vmul.f32 %v1317, 1.442695
        %v1341 = vpow.pop %v1340
        %v1342 = vmul.f32 %v1318, 1.442695
        %v1343 = vpow.pop %v1342
        %v1344 = vmul.f32 %v1319, 1.442695
        %v1345 = vpow.pop %v1344
        %v1346 = vmul.f32 %v1320, 1.442695
        %v1347 = vpow.pop %v1346
        %v1348 = vmul.f32 %v1321, 1.442695
        %v1349 = vpow.pop %v1348
        %v1350 = vmul.f32 %v1322, 1.442695
        %v1351 = vpow.pop %v1350
        %v1352 = vmul.f32 %v1323, 1.442695
        %v1353 = vpow.pop %v1352
        %v1354 = vmul.f32 %v1324, 1.442695
        %v1355 = vpow.pop %v1354
        %v1356 = vmul.f32 %v1325, 1.442695
        %v1357 = vpow.pop %v1356
        %1374 = vrot.lane.b32.xlu0 %v1294, 125
        %v1375 = vpop.permute.xlu0 %1374
        %1376 = vrot.lane.b32.xlu0 %v1295, 125
        %v1377 = vpop.permute.xlu0 %1376
        %1378 = vrot.lane.b32.xlu0 %v1296, 125
        %v1379 = vpop.permute.xlu0 %1378
        %1380 = vrot.lane.b32.xlu0 %v1297, 125
        %v1381 = vpop.permute.xlu0 %1380
        %1382 = vrot.lane.b32.xlu0 %v1298, 125
        %v1383 = vpop.permute.xlu0 %1382
        %1384 = vrot.lane.b32.xlu0 %v1299, 125
        %v1385 = vpop.permute.xlu0 %1384
        %1386 = vrot.lane.b32.xlu0 %v1300, 125
        %v1387 = vpop.permute.xlu0 %1386
        %1388 = vrot.lane.b32.xlu0 %v1301, 125
        %v1389 = vpop.permute.xlu0 %1388
        %1390 = vrot.lane.b32.xlu0 %v1302, 125
        %v1391 = vpop.permute.xlu0 %1390
        %1392 = vrot.lane.b32.xlu0 %v1303, 125
        %v1393 = vpop.permute.xlu0 %1392
        %1394 = vrot.lane.b32.xlu0 %v1304, 125
        %v1395 = vpop.permute.xlu0 %1394
        %1396 = vrot.lane.b32.xlu0 %v1305, 125
        %v1397 = vpop.permute.xlu0 %1396
        %1398 = vrot.lane.b32.xlu0 %v1306, 125
        %v1399 = vpop.permute.xlu0 %1398
        %1400 = vrot.lane.b32.xlu0 %v1307, 125
        %v1401 = vpop.permute.xlu0 %1400
        %1402 = vrot.lane.b32.xlu0 %v1308, 125
        %v1403 = vpop.permute.xlu0 %1402
        %1404 = vrot.lane.b32.xlu0 %v1309, 125
        %v1405 = vpop.permute.xlu0 %1404
        %v1422 = vmul.f32 %v1327, %v1375
        %v1423 = vmul.f32 %v1329, %v1377
        %v1424 = vmul.f32 %v1331, %v1379
        %v1425 = vmul.f32 %v1333, %v1381
        %v1426 = vmul.f32 %v1335, %v1383
        %v1427 = vmul.f32 %v1337, %v1385
        %v1428 = vmul.f32 %v1339, %v1387
        %v1429 = vmul.f32 %v1341, %v1389
        %v1430 = vmul.f32 %v1343, %v1391
        %v1431 = vmul.f32 %v1345, %v1393
        %v1432 = vmul.f32 %v1347, %v1395
        %v1433 = vmul.f32 %v1349, %v1397
        %v1434 = vmul.f32 %v1351, %v1399
        %v1435 = vmul.f32 %v1353, %v1401
        %v1436 = vmul.f32 %v1355, %v1403
        %v1437 = vmul.f32 %v1357, %v1405
        %1439 = vset.pattern.permute.xlu0 32
        %1440 = vperm.xlu0 %1439, %v1422
        %v1441 = vpop.permute.xlu0 %1440
        %1444 = vset.pattern.permute.xlu0 32
        %1445 = vperm.xlu0 %1444, %v1423
        %v1446 = vpop.permute.xlu0 %1445
        %1449 = vset.pattern.permute.xlu0 32
        %1450 = vperm.xlu0 %1449, %v1424
        %v1451 = vpop.permute.xlu0 %1450
        %1454 = vset.pattern.permute.xlu0 32
        %1455 = vperm.xlu0 %1454, %v1425
        %v1456 = vpop.permute.xlu0 %1455
        %1459 = vset.pattern.permute.xlu0 32
        %1460 = vperm.xlu0 %1459, %v1426
        %v1461 = vpop.permute.xlu0 %1460
        %1464 = vset.pattern.permute.xlu0 32
        %1465 = vperm.xlu0 %1464, %v1427
        %v1466 = vpop.permute.xlu0 %1465
        %1469 = vset.pattern.permute.xlu0 32
        %1470 = vperm.xlu0 %1469, %v1428
        %v1471 = vpop.permute.xlu0 %1470
        %1474 = vset.pattern.permute.xlu0 32
        %1475 = vperm.xlu0 %1474, %v1429
        %v1476 = vpop.permute.xlu0 %1475
        %1479 = vset.pattern.permute.xlu0 32
        %1480 = vperm.xlu0 %1479, %v1430
        %v1481 = vpop.permute.xlu0 %1480
        %1484 = vset.pattern.permute.xlu0 32
        %1485 = vperm.xlu0 %1484, %v1431
        %v1486 = vpop.permute.xlu0 %1485
        %1489 = vset.pattern.permute.xlu0 32
        %1490 = vperm.xlu0 %1489, %v1432
        %v1491 = vpop.permute.xlu0 %1490
        %1494 = vset.pattern.permute.xlu0 32
        %1495 = vperm.xlu0 %1494, %v1433
        %v1496 = vpop.permute.xlu0 %1495
        %1499 = vset.pattern.permute.xlu0 32
        %1500 = vperm.xlu0 %1499, %v1434
        %v1501 = vpop.permute.xlu0 %1500
        %1504 = vset.pattern.permute.xlu0 32
        %1505 = vperm.xlu0 %1504, %v1435
        %v1506 = vpop.permute.xlu0 %1505
        %1509 = vset.pattern.permute.xlu0 32
        %1510 = vperm.xlu0 %1509, %v1436
        %v1511 = vpop.permute.xlu0 %1510
        %1514 = vset.pattern.permute.xlu0 32
        %1515 = vperm.xlu0 %1514, %v1437
        %v1516 = vpop.permute.xlu0 %1515
        %v1518 = vmul.f32 %v1441, %v1294
        %v1519 = vmul.f32 %v1446, %v1295
        %v1520 = vmul.f32 %v1451, %v1296
        %v1521 = vmul.f32 %v1456, %v1297
        %v1522 = vmul.f32 %v1461, %v1298
        %v1523 = vmul.f32 %v1466, %v1299
        %v1524 = vmul.f32 %v1471, %v1300
        %v1525 = vmul.f32 %v1476, %v1301
        %v1526 = vmul.f32 %v1481, %v1302
        %v1527 = vmul.f32 %v1486, %v1303
        %v1528 = vmul.f32 %v1491, %v1304
        %v1529 = vmul.f32 %v1496, %v1305
        %v1530 = vmul.f32 %v1501, %v1306
        %v1531 = vmul.f32 %v1506, %v1307
        %v1532 = vmul.f32 %v1511, %v1308
        %v1533 = vmul.f32 %v1516, %v1309
        %vm1534 = vcmask 523264
        %v1535 = vsel %vm1534, %v1518, 0.0
        %v1536 = vrot.slane %v1535, 4
        %v1537 = vadd.f32 %v1535, %v1536
        %v1538 = vrot.slane %v1537, 2
        %v1539 = vadd.f32 %v1537, %v1538
        %v1540 = vrot.slane %v1539, 1
        %v1541 = vadd.f32 %v1539, %v1540
        %v1542 = vsel %vm1534, %v1519, 0.0
        %v1543 = vrot.slane %v1542, 4
        %v1544 = vadd.f32 %v1542, %v1543
        %v1545 = vrot.slane %v1544, 2
        %v1546 = vadd.f32 %v1544, %v1545
        %v1547 = vrot.slane %v1546, 1
        %v1548 = vadd.f32 %v1546, %v1547
        %v1549 = vsel %vm1534, %v1520, 0.0
        %v1550 = vrot.slane %v1549, 4
        %v1551 = vadd.f32 %v1549, %v1550
        %v1552 = vrot.slane %v1551, 2
        %v1553 = vadd.f32 %v1551, %v1552
        %v1554 = vrot.slane %v1553, 1
        %v1555 = vadd.f32 %v1553, %v1554
        %v1556 = vsel %vm1534, %v1521, 0.0
        %v1557 = vrot.slane %v1556, 4
        %v1558 = vadd.f32 %v1556, %v1557
        %v1559 = vrot.slane %v1558, 2
        %v1560 = vadd.f32 %v1558, %v1559
        %v1561 = vrot.slane %v1560, 1
        %v1562 = vadd.f32 %v1560, %v1561
        %v1563 = vsel %vm1534, %v1522, 0.0
        %v1564 = vrot.slane %v1563, 4
        %v1565 = vadd.f32 %v1563, %v1564
        %v1566 = vrot.slane %v1565, 2
        %v1567 = vadd.f32 %v1565, %v1566
        %v1568 = vrot.slane %v1567, 1
        %v1569 = vadd.f32 %v1567, %v1568
        %v1570 = vsel %vm1534, %v1523, 0.0
        %v1571 = vrot.slane %v1570, 4
        %v1572 = vadd.f32 %v1570, %v1571
        %v1573 = vrot.slane %v1572, 2
        %v1574 = vadd.f32 %v1572, %v1573
        %v1575 = vrot.slane %v1574, 1
        %v1576 = vadd.f32 %v1574, %v1575
        %v1577 = vsel %vm1534, %v1524, 0.0
        %v1578 = vrot.slane %v1577, 4
        %v1579 = vadd.f32 %v1577, %v1578
        %v1580 = vrot.slane %v1579, 2
        %v1581 = vadd.f32 %v1579, %v1580
        %v1582 = vrot.slane %v1581, 1
        %v1583 = vadd.f32 %v1581, %v1582
        %v1584 = vsel %vm1534, %v1525, 0.0
        %v1585 = vrot.slane %v1584, 4
        %v1586 = vadd.f32 %v1584, %v1585
        %v1587 = vrot.slane %v1586, 2
        %v1588 = vadd.f32 %v1586, %v1587
        %v1589 = vrot.slane %v1588, 1
        %v1590 = vadd.f32 %v1588, %v1589
        %v1591 = vsel %vm1534, %v1526, 0.0
        %v1592 = vrot.slane %v1591, 4
        %v1593 = vadd.f32 %v1591, %v1592
        %v1594 = vrot.slane %v1593, 2
        %v1595 = vadd.f32 %v1593, %v1594
        %v1596 = vrot.slane %v1595, 1
        %v1597 = vadd.f32 %v1595, %v1596
        %v1598 = vsel %vm1534, %v1527, 0.0
        %v1599 = vrot.slane %v1598, 4
        %v1600 = vadd.f32 %v1598, %v1599
        %v1601 = vrot.slane %v1600, 2
        %v1602 = vadd.f32 %v1600, %v1601
        %v1603 = vrot.slane %v1602, 1
        %v1604 = vadd.f32 %v1602, %v1603
        %v1605 = vsel %vm1534, %v1528, 0.0
        %v1606 = vrot.slane %v1605, 4
        %v1607 = vadd.f32 %v1605, %v1606
        %v1608 = vrot.slane %v1607, 2
        %v1609 = vadd.f32 %v1607, %v1608
        %v1610 = vrot.slane %v1609, 1
        %v1611 = vadd.f32 %v1609, %v1610
        %v1612 = vsel %vm1534, %v1529, 0.0
        %v1613 = vrot.slane %v1612, 4
        %v1614 = vadd.f32 %v1612, %v1613
        %v1615 = vrot.slane %v1614, 2
        %v1616 = vadd.f32 %v1614, %v1615
        %v1617 = vrot.slane %v1616, 1
        %v1618 = vadd.f32 %v1616, %v1617
        %v1619 = vsel %vm1534, %v1530, 0.0
        %v1620 = vrot.slane %v1619, 4
        %v1621 = vadd.f32 %v1619, %v1620
        %v1622 = vrot.slane %v1621, 2
        %v1623 = vadd.f32 %v1621, %v1622
        %v1624 = vrot.slane %v1623, 1
        %v1625 = vadd.f32 %v1623, %v1624
        %v1626 = vsel %vm1534, %v1531, 0.0
        %v1627 = vrot.slane %v1626, 4
        %v1628 = vadd.f32 %v1626, %v1627
        %v1629 = vrot.slane %v1628, 2
        %v1630 = vadd.f32 %v1628, %v1629
        %v1631 = vrot.slane %v1630, 1
        %v1632 = vadd.f32 %v1630, %v1631
        %v1633 = vsel %vm1534, %v1532, 0.0
        %v1634 = vrot.slane %v1633, 4
        %v1635 = vadd.f32 %v1633, %v1634
        %v1636 = vrot.slane %v1635, 2
        %v1637 = vadd.f32 %v1635, %v1636
        %v1638 = vrot.slane %v1637, 1
        %v1639 = vadd.f32 %v1637, %v1638
        %v1640 = vsel %vm1534, %v1533, 0.0
        %v1641 = vrot.slane %v1640, 4
        %v1642 = vadd.f32 %v1640, %v1641
        %v1643 = vrot.slane %v1642, 2
        %v1644 = vadd.f32 %v1642, %v1643
        %v1645 = vrot.slane %v1644, 1
        %v1646 = vadd.f32 %v1644, %v1645
        %v1647 = vadd.f32 %v1541, 1e-06
        %v1648 = vadd.f32 %v1548, 1e-06
        %v1649 = vadd.f32 %v1555, 1e-06
        %v1650 = vadd.f32 %v1562, 1e-06
        %v1651 = vadd.f32 %v1569, 1e-06
        %v1652 = vadd.f32 %v1576, 1e-06
        %v1653 = vadd.f32 %v1583, 1e-06
        %v1654 = vadd.f32 %v1590, 1e-06
        %v1655 = vadd.f32 %v1597, 1e-06
        %v1656 = vadd.f32 %v1604, 1e-06
        %v1657 = vadd.f32 %v1611, 1e-06
        %v1658 = vadd.f32 %v1618, 1e-06
        %v1659 = vadd.f32 %v1625, 1e-06
        %v1660 = vadd.f32 %v1632, 1e-06
        %v1661 = vadd.f32 %v1639, 1e-06
        %v1662 = vadd.f32 %v1646, 1e-06
        %v1663 = vrcp.pop %v1647
        %v1664 = vmul.f32 1.0, %v1663
        %v1665 = vrcp.pop %v1648
        %v1666 = vmul.f32 1.0, %v1665
        %v1667 = vrcp.pop %v1649
        %v1668 = vmul.f32 1.0, %v1667
        %v1669 = vrcp.pop %v1650
        %v1670 = vmul.f32 1.0, %v1669
        %v1671 = vrcp.pop %v1651
        %v1672 = vmul.f32 1.0, %v1671
        %v1673 = vrcp.pop %v1652
        %v1674 = vmul.f32 1.0, %v1673
        %v1675 = vrcp.pop %v1653
        %v1676 = vmul.f32 1.0, %v1675
        %v1677 = vrcp.pop %v1654
        %v1678 = vmul.f32 1.0, %v1677
        %v1679 = vrcp.pop %v1655
        %v1680 = vmul.f32 1.0, %v1679
        %v1681 = vrcp.pop %v1656
        %v1682 = vmul.f32 1.0, %v1681
        %v1683 = vrcp.pop %v1657
        %v1684 = vmul.f32 1.0, %v1683
        %v1685 = vrcp.pop %v1658
        %v1686 = vmul.f32 1.0, %v1685
        %v1687 = vrcp.pop %v1659
        %v1688 = vmul.f32 1.0, %v1687
        %v1689 = vrcp.pop %v1660
        %v1690 = vmul.f32 1.0, %v1689
        %v1691 = vrcp.pop %v1661
        %v1692 = vmul.f32 1.0, %v1691
        %v1693 = vrcp.pop %v1662
        %v1694 = vmul.f32 1.0, %v1693
        %1696 = vset.pattern.permute.xlu0 34
        %1697 = vperm.xlu0 %1696, %v1664
        %v1698 = vpop.permute.xlu0 %1697
        %1701 = vset.pattern.permute.xlu0 34
        %1702 = vperm.xlu0 %1701, %v1666
        %v1703 = vpop.permute.xlu0 %1702
        %1706 = vset.pattern.permute.xlu0 34
        %1707 = vperm.xlu0 %1706, %v1668
        %v1708 = vpop.permute.xlu0 %1707
        %1711 = vset.pattern.permute.xlu0 34
        %1712 = vperm.xlu0 %1711, %v1670
        %v1713 = vpop.permute.xlu0 %1712
        %1716 = vset.pattern.permute.xlu0 34
        %1717 = vperm.xlu0 %1716, %v1672
        %v1718 = vpop.permute.xlu0 %1717
        %1721 = vset.pattern.permute.xlu0 34
        %1722 = vperm.xlu0 %1721, %v1674
        %v1723 = vpop.permute.xlu0 %1722
        %1726 = vset.pattern.permute.xlu0 34
        %1727 = vperm.xlu0 %1726, %v1676
        %v1728 = vpop.permute.xlu0 %1727
        %1731 = vset.pattern.permute.xlu0 34
        %1732 = vperm.xlu0 %1731, %v1678
        %v1733 = vpop.permute.xlu0 %1732
        %1736 = vset.pattern.permute.xlu0 34
        %1737 = vperm.xlu0 %1736, %v1680
        %v1738 = vpop.permute.xlu0 %1737
        %1741 = vset.pattern.permute.xlu0 34
        %1742 = vperm.xlu0 %1741, %v1682
        %v1743 = vpop.permute.xlu0 %1742
        %1746 = vset.pattern.permute.xlu0 34
        %1747 = vperm.xlu0 %1746, %v1684
        %v1748 = vpop.permute.xlu0 %1747
        %1751 = vset.pattern.permute.xlu0 34
        %1752 = vperm.xlu0 %1751, %v1686
        %v1753 = vpop.permute.xlu0 %1752
        %1756 = vset.pattern.permute.xlu0 34
        %1757 = vperm.xlu0 %1756, %v1688
        %v1758 = vpop.permute.xlu0 %1757
        %1761 = vset.pattern.permute.xlu0 34
        %1762 = vperm.xlu0 %1761, %v1690
        %v1763 = vpop.permute.xlu0 %1762
        %1766 = vset.pattern.permute.xlu0 34
        %1767 = vperm.xlu0 %1766, %v1692
        %v1768 = vpop.permute.xlu0 %1767
        %1771 = vset.pattern.permute.xlu0 34
        %1772 = vperm.xlu0 %1771, %v1694
        %v1773 = vpop.permute.xlu0 %1772
        %v1775 = vmul.f32 %v1541, %v1698
        %v1776 = vmul.f32 %v1548, %v1703
        %v1777 = vmul.f32 %v1555, %v1708
        %v1778 = vmul.f32 %v1562, %v1713
        %v1779 = vmul.f32 %v1569, %v1718
        %v1780 = vmul.f32 %v1576, %v1723
        %v1781 = vmul.f32 %v1583, %v1728
        %v1782 = vmul.f32 %v1590, %v1733
        %v1783 = vmul.f32 %v1597, %v1738
        %v1784 = vmul.f32 %v1604, %v1743
        %v1785 = vmul.f32 %v1611, %v1748
        %v1786 = vmul.f32 %v1618, %v1753
        %v1787 = vmul.f32 %v1625, %v1758
        %v1788 = vmul.f32 %v1632, %v1763
        %v1789 = vmul.f32 %v1639, %v1768
        %v1790 = vmul.f32 %v1646, %v1773
        %1791 = vrot.lane.b32.xlu0 %v1664, 127
        %v1792 = vpop.permute.xlu0 %1791
        %1793 = vrot.lane.b32.xlu0 %v1666, 127
        %v1794 = vpop.permute.xlu0 %1793
        %1795 = vrot.lane.b32.xlu0 %v1668, 127
        %v1796 = vpop.permute.xlu0 %1795
        %1797 = vrot.lane.b32.xlu0 %v1670, 127
        %v1798 = vpop.permute.xlu0 %1797
        %1799 = vrot.lane.b32.xlu0 %v1672, 127
        %v1800 = vpop.permute.xlu0 %1799
        %1801 = vrot.lane.b32.xlu0 %v1674, 127
        %v1802 = vpop.permute.xlu0 %1801
        %1803 = vrot.lane.b32.xlu0 %v1676, 127
        %v1804 = vpop.permute.xlu0 %1803
        %1805 = vrot.lane.b32.xlu0 %v1678, 127
        %v1806 = vpop.permute.xlu0 %1805
        %1807 = vrot.lane.b32.xlu0 %v1680, 127
        %v1808 = vpop.permute.xlu0 %1807
        %1809 = vrot.lane.b32.xlu0 %v1682, 127
        %v1810 = vpop.permute.xlu0 %1809
        %1811 = vrot.lane.b32.xlu0 %v1684, 127
        %v1812 = vpop.permute.xlu0 %1811
        %1813 = vrot.lane.b32.xlu0 %v1686, 127
        %v1814 = vpop.permute.xlu0 %1813
        %1815 = vrot.lane.b32.xlu0 %v1688, 127
        %v1816 = vpop.permute.xlu0 %1815
        %1817 = vrot.lane.b32.xlu0 %v1690, 127
        %v1818 = vpop.permute.xlu0 %1817
        %1819 = vrot.lane.b32.xlu0 %v1692, 127
        %v1820 = vpop.permute.xlu0 %1819
        %1821 = vrot.lane.b32.xlu0 %v1694, 127
        %v1822 = vpop.permute.xlu0 %1821
        %v1839 = vmul.f32 %v1541, %v1792
        %v1840 = vmul.f32 %v1548, %v1794
        %v1841 = vmul.f32 %v1555, %v1796
        %v1842 = vmul.f32 %v1562, %v1798
        %v1843 = vmul.f32 %v1569, %v1800
        %v1844 = vmul.f32 %v1576, %v1802
        %v1845 = vmul.f32 %v1583, %v1804
        %v1846 = vmul.f32 %v1590, %v1806
        %v1847 = vmul.f32 %v1597, %v1808
        %v1848 = vmul.f32 %v1604, %v1810
        %v1849 = vmul.f32 %v1611, %v1812
        %v1850 = vmul.f32 %v1618, %v1814
        %v1851 = vmul.f32 %v1625, %v1816
        %v1852 = vmul.f32 %v1632, %v1818
        %v1853 = vmul.f32 %v1639, %v1820
        %v1854 = vmul.f32 %v1646, %v1822
        %v1855 = vstv %s372
        %v1856 = vadd.f32 %v1839, %v1855
        %v1857 = vadd.f32 %v1840, %v1855
        %v1858 = vadd.f32 %v1841, %v1855
        %v1859 = vadd.f32 %v1842, %v1855
        %v1860 = vadd.f32 %v1843, %v1855
        %v1861 = vadd.f32 %v1844, %v1855
        %v1862 = vadd.f32 %v1845, %v1855
        %v1863 = vadd.f32 %v1846, %v1855
        %v1864 = vadd.f32 %v1847, %v1855
        %v1865 = vadd.f32 %v1848, %v1855
        %v1866 = vadd.f32 %v1849, %v1855
        %v1867 = vadd.f32 %v1850, %v1855
        %v1868 = vadd.f32 %v1851, %v1855
        %v1869 = vadd.f32 %v1852, %v1855
        %v1870 = vadd.f32 %v1853, %v1855
        %v1871 = vadd.f32 %v1854, %v1855
        %v1872 = vtanh.pop %v1856
        %v1873 = vtanh.pop %v1857
        %v1874 = vtanh.pop %v1858
        %v1875 = vtanh.pop %v1859
        %v1876 = vtanh.pop %v1860
        %v1877 = vtanh.pop %v1861
        %v1878 = vtanh.pop %v1862
        %v1879 = vtanh.pop %v1863
        %v1880 = vtanh.pop %v1864
        %v1881 = vtanh.pop %v1865
        %v1882 = vtanh.pop %v1866
        %v1883 = vtanh.pop %v1867
        %v1884 = vtanh.pop %v1868
        %v1885 = vtanh.pop %v1869
        %v1886 = vtanh.pop %v1870
        %v1887 = vtanh.pop %v1871
        %v1888 = vmul.f32 %v1872, 1.442695
        %v1889 = vpow.pop %v1888
        %v1890 = vmul.f32 %v1873, 1.442695
        %v1891 = vpow.pop %v1890
        %v1892 = vmul.f32 %v1874, 1.442695
        %v1893 = vpow.pop %v1892
        %v1894 = vmul.f32 %v1875, 1.442695
        %v1895 = vpow.pop %v1894
        %v1896 = vmul.f32 %v1876, 1.442695
        %v1897 = vpow.pop %v1896
        %v1898 = vmul.f32 %v1877, 1.442695
        %v1899 = vpow.pop %v1898
        %v1900 = vmul.f32 %v1878, 1.442695
        %v1901 = vpow.pop %v1900
        %v1902 = vmul.f32 %v1879, 1.442695
        %v1903 = vpow.pop %v1902
        %v1904 = vmul.f32 %v1880, 1.442695
        %v1905 = vpow.pop %v1904
        %v1906 = vmul.f32 %v1881, 1.442695
        %v1907 = vpow.pop %v1906
        %v1908 = vmul.f32 %v1882, 1.442695
        %v1909 = vpow.pop %v1908
        %v1910 = vmul.f32 %v1883, 1.442695
        %v1911 = vpow.pop %v1910
        %v1912 = vmul.f32 %v1884, 1.442695
        %v1913 = vpow.pop %v1912
        %v1914 = vmul.f32 %v1885, 1.442695
        %v1915 = vpow.pop %v1914
        %v1916 = vmul.f32 %v1886, 1.442695
        %v1917 = vpow.pop %v1916
        %v1918 = vmul.f32 %v1887, 1.442695
        %v1919 = vpow.pop %v1918
        %v1920 = vld [vmem:[%s6 + $0x1] sm:$0x1]
        %v1921 = vld [vmem:[%s362] sm:$0xf]
        %v1922 = vld [vmem:[%s362 + $0x4] sm:$0xf]
        %v1923 = vld [vmem:[%s362 + $0xc] sm:$0xf]
        %v1924 = vld [vmem:[%s362 + $0x10] sm:$0xf]
        %v1925 = vld [vmem:[%s362 + $0x18] sm:$0xf]
        %v1926 = vld [vmem:[%s362 + $0x1c] sm:$0xf]
        %v1927 = vld [vmem:[%s362 + $0x24] sm:$0xf]
        %v1928 = vld [vmem:[%s362 + $0x28] sm:$0xf]
        %v1929 = vld [vmem:[%s362 + $0x30] sm:$0xf]
        %v1930 = vld [vmem:[%s362 + $0x34] sm:$0xf]
        %v1931 = vld [vmem:[%s362 + $0x3c] sm:$0xf]
        %v1932 = vld [vmem:[%s362 + $0x40] sm:$0xf]
        %v1933 = vld [vmem:[%s362 + $0x48] sm:$0xf]
        %v1934 = vld [vmem:[%s362 + $0x4c] sm:$0xf]
        %v1935 = vld [vmem:[%s362 + $0x54] sm:$0xf]
        %v1936 = vld [vmem:[%s362 + $0x58] sm:$0xf]
        %v1937 = vld [vmem:[%s362 + $0x60] sm:$0xf]
        %v1938 = vld [vmem:[%s362 + $0x64] sm:$0xf]
        %v1939 = vld [vmem:[%s362 + $0x6c] sm:$0xf]
        %v1940 = vld [vmem:[%s362 + $0x70] sm:$0xf]
        %v1941 = vld [vmem:[%s362 + $0x78] sm:$0xf]
        %v1942 = vld [vmem:[%s362 + $0x7c] sm:$0xf]
        %v1943 = vld [vmem:[%s362 + $0x84] sm:$0xf]
        %v1944 = vld [vmem:[%s362 + $0x88] sm:$0xf]
        %v1945 = vld [vmem:[%s362 + $0x90] sm:$0xf]
        %v1946 = vld [vmem:[%s362 + $0x94] sm:$0xf]
        %v1947 = vld [vmem:[%s362 + $0x9c] sm:$0xf]
        %v1948 = vld [vmem:[%s362 + $0xa0] sm:$0xf]
        %v1949 = vld [vmem:[%s362 + $0xa8] sm:$0xf]
        %v1950 = vld [vmem:[%s362 + $0xac] sm:$0xf]
        %v1951 = vld [vmem:[%s362 + $0xb4] sm:$0xf]
        %v1952 = vld [vmem:[%s362 + $0xb8] sm:$0xf]
        %v1953 = vld [vmem:[%s4] sm:$0xf]
        %v1954 = vld [vmem:[%s4 + $0x4] sm:$0xf]
        %v1955 = vld [vmem:[%s4 + $0x8] sm:$0xf]
        %v1956 = vld [vmem:[%s4 + $0xc] sm:$0xf]
        %v1957 = vld [vmem:[%s4 + $0x10] sm:$0x1]
        %v1958 = vld [vmem:[%s362 + $0x8] sm:$0x1]
        %v1959 = vld [vmem:[%s362 + $0x14] sm:$0x1]
        %v1960 = vld [vmem:[%s362 + $0x20] sm:$0x1]
        %v1961 = vld [vmem:[%s362 + $0x2c] sm:$0x1]
        %v1962 = vld [vmem:[%s362 + $0x38] sm:$0x1]
        %v1963 = vld [vmem:[%s362 + $0x44] sm:$0x1]
        %v1964 = vld [vmem:[%s362 + $0x50] sm:$0x1]
        %v1965 = vld [vmem:[%s362 + $0x5c] sm:$0x1]
        %v1966 = vld [vmem:[%s362 + $0x68] sm:$0x1]
        %v1967 = vld [vmem:[%s362 + $0x74] sm:$0x1]
        %v1968 = vld [vmem:[%s362 + $0x80] sm:$0x1]
        %v1969 = vld [vmem:[%s362 + $0x8c] sm:$0x1]
        %v1970 = vld [vmem:[%s362 + $0x98] sm:$0x1]
        %v1971 = vld [vmem:[%s362 + $0xa4] sm:$0x1]
        %v1972 = vld [vmem:[%s362 + $0xb0] sm:$0x1]
        %v1973 = vld [vmem:[%s362 + $0xbc] sm:$0x1]
        %v1975 = vshrl.u32 %v1921, 16
        %v1977 = vrot.slane %v1975, 4
        %v1978 = vshll.u32 %v1921, 16
        %v1980 = vrot.slane %v1978, 5
        %v1981 = vor.u32 %v1977, %v1980
        %v1982 = vrot.slane %v1981, 4
        %v1984 = vshll.u32 %v1922, 16
        %v1986 = vrot.slane %v1984, 5
        %v1987 = vsel %vm413, %v1982, %v1986
        %v1988 = vshrl.u32 %v1922, 16
        %v1990 = vrot.slane %v1988, 4
        %v1991 = vor.u32 %v1990, %v1986
        %v1992 = vrot.slane %v1991, 4
        %v1994 = vshll.u32 %v1958, 16
        %v1996 = vrot.slane %v1994, 5
        %v1997 = vsel %vm413, %v1992, %v1996
        %v1999 = vshrl.u32 %v1923, 16
        %v2001 = vrot.slane %v1999, 4
        %v2002 = vshll.u32 %v1923, 16
        %v2004 = vrot.slane %v2002, 5
        %v2005 = vor.u32 %v2001, %v2004
        %v2006 = vrot.slane %v2005, 4
        %v2008 = vshll.u32 %v1924, 16
        %v2010 = vrot.slane %v2008, 5
        %v2011 = vsel %vm413, %v2006, %v2010
        %v2012 = vshrl.u32 %v1924, 16
        %v2014 = vrot.slane %v2012, 4
        %v2015 = vor.u32 %v2014, %v2010
        %v2016 = vrot.slane %v2015, 4
        %v2018 = vshll.u32 %v1959, 16
        %v2020 = vrot.slane %v2018, 5
        %v2021 = vsel %vm413, %v2016, %v2020
        %v2023 = vshrl.u32 %v1925, 16
        %v2025 = vrot.slane %v2023, 4
        %v2026 = vshll.u32 %v1925, 16
        %v2028 = vrot.slane %v2026, 5
        %v2029 = vor.u32 %v2025, %v2028
        %v2030 = vrot.slane %v2029, 4
        %v2032 = vshll.u32 %v1926, 16
        %v2034 = vrot.slane %v2032, 5
        %v2035 = vsel %vm413, %v2030, %v2034
        %v2036 = vshrl.u32 %v1926, 16
        %v2038 = vrot.slane %v2036, 4
        %v2039 = vor.u32 %v2038, %v2034
        %v2040 = vrot.slane %v2039, 4
        %v2042 = vshll.u32 %v1960, 16
        %v2044 = vrot.slane %v2042, 5
        %v2045 = vsel %vm413, %v2040, %v2044
        %v2047 = vshrl.u32 %v1927, 16
        %v2049 = vrot.slane %v2047, 4
        %v2050 = vshll.u32 %v1927, 16
        %v2052 = vrot.slane %v2050, 5
        %v2053 = vor.u32 %v2049, %v2052
        %v2054 = vrot.slane %v2053, 4
        %v2056 = vshll.u32 %v1928, 16
        %v2058 = vrot.slane %v2056, 5
        %v2059 = vsel %vm413, %v2054, %v2058
        %v2060 = vshrl.u32 %v1928, 16
        %v2062 = vrot.slane %v2060, 4
        %v2063 = vor.u32 %v2062, %v2058
        %v2064 = vrot.slane %v2063, 4
        %v2066 = vshll.u32 %v1961, 16
        %v2068 = vrot.slane %v2066, 5
        %v2069 = vsel %vm413, %v2064, %v2068
        %v2071 = vshrl.u32 %v1929, 16
        %v2073 = vrot.slane %v2071, 4
        %v2074 = vshll.u32 %v1929, 16
        %v2076 = vrot.slane %v2074, 5
        %v2077 = vor.u32 %v2073, %v2076
        %v2078 = vrot.slane %v2077, 4
        %v2080 = vshll.u32 %v1930, 16
        %v2082 = vrot.slane %v2080, 5
        %v2083 = vsel %vm413, %v2078, %v2082
        %v2084 = vshrl.u32 %v1930, 16
        %v2086 = vrot.slane %v2084, 4
        %v2087 = vor.u32 %v2086, %v2082
        %v2088 = vrot.slane %v2087, 4
        %v2090 = vshll.u32 %v1962, 16
        %v2092 = vrot.slane %v2090, 5
        %v2093 = vsel %vm413, %v2088, %v2092
        %v2095 = vshrl.u32 %v1931, 16
        %v2097 = vrot.slane %v2095, 4
        %v2098 = vshll.u32 %v1931, 16
        %v2100 = vrot.slane %v2098, 5
        %v2101 = vor.u32 %v2097, %v2100
        %v2102 = vrot.slane %v2101, 4
        %v2104 = vshll.u32 %v1932, 16
        %v2106 = vrot.slane %v2104, 5
        %v2107 = vsel %vm413, %v2102, %v2106
        %v2108 = vshrl.u32 %v1932, 16
        %v2110 = vrot.slane %v2108, 4
        %v2111 = vor.u32 %v2110, %v2106
        %v2112 = vrot.slane %v2111, 4
        %v2114 = vshll.u32 %v1963, 16
        %v2116 = vrot.slane %v2114, 5
        %v2117 = vsel %vm413, %v2112, %v2116
        %v2119 = vshrl.u32 %v1933, 16
        %v2121 = vrot.slane %v2119, 4
        %v2122 = vshll.u32 %v1933, 16
        %v2124 = vrot.slane %v2122, 5
        %v2125 = vor.u32 %v2121, %v2124
        %v2126 = vrot.slane %v2125, 4
        %v2128 = vshll.u32 %v1934, 16
        %v2130 = vrot.slane %v2128, 5
        %v2131 = vsel %vm413, %v2126, %v2130
        %v2132 = vshrl.u32 %v1934, 16
        %v2134 = vrot.slane %v2132, 4
        %v2135 = vor.u32 %v2134, %v2130
        %v2136 = vrot.slane %v2135, 4
        %v2138 = vshll.u32 %v1964, 16
        %v2140 = vrot.slane %v2138, 5
        %v2141 = vsel %vm413, %v2136, %v2140
        %v2143 = vshrl.u32 %v1935, 16
        %v2145 = vrot.slane %v2143, 4
        %v2146 = vshll.u32 %v1935, 16
        %v2148 = vrot.slane %v2146, 5
        %v2149 = vor.u32 %v2145, %v2148
        %v2150 = vrot.slane %v2149, 4
        %v2152 = vshll.u32 %v1936, 16
        %v2154 = vrot.slane %v2152, 5
        %v2155 = vsel %vm413, %v2150, %v2154
        %v2156 = vshrl.u32 %v1936, 16
        %v2158 = vrot.slane %v2156, 4
        %v2159 = vor.u32 %v2158, %v2154
        %v2160 = vrot.slane %v2159, 4
        %v2162 = vshll.u32 %v1965, 16
        %v2164 = vrot.slane %v2162, 5
        %v2165 = vsel %vm413, %v2160, %v2164
        %v2167 = vshrl.u32 %v1937, 16
        %v2169 = vrot.slane %v2167, 4
        %v2170 = vshll.u32 %v1937, 16
        %v2172 = vrot.slane %v2170, 5
        %v2173 = vor.u32 %v2169, %v2172
        %v2174 = vrot.slane %v2173, 4
        %v2176 = vshll.u32 %v1938, 16
        %v2178 = vrot.slane %v2176, 5
        %v2179 = vsel %vm413, %v2174, %v2178
        %v2180 = vshrl.u32 %v1938, 16
        %v2182 = vrot.slane %v2180, 4
        %v2183 = vor.u32 %v2182, %v2178
        %v2184 = vrot.slane %v2183, 4
        %v2186 = vshll.u32 %v1966, 16
        %v2188 = vrot.slane %v2186, 5
        %v2189 = vsel %vm413, %v2184, %v2188
        %v2191 = vshrl.u32 %v1939, 16
        %v2193 = vrot.slane %v2191, 4
        %v2194 = vshll.u32 %v1939, 16
        %v2196 = vrot.slane %v2194, 5
        %v2197 = vor.u32 %v2193, %v2196
        %v2198 = vrot.slane %v2197, 4
        %v2200 = vshll.u32 %v1940, 16
        %v2202 = vrot.slane %v2200, 5
        %v2203 = vsel %vm413, %v2198, %v2202
        %v2204 = vshrl.u32 %v1940, 16
        %v2206 = vrot.slane %v2204, 4
        %v2207 = vor.u32 %v2206, %v2202
        %v2208 = vrot.slane %v2207, 4
        %v2210 = vshll.u32 %v1967, 16
        %v2212 = vrot.slane %v2210, 5
        %v2213 = vsel %vm413, %v2208, %v2212
        %v2215 = vshrl.u32 %v1941, 16
        %v2217 = vrot.slane %v2215, 4
        %v2218 = vshll.u32 %v1941, 16
        %v2220 = vrot.slane %v2218, 5
        %v2221 = vor.u32 %v2217, %v2220
        %v2222 = vrot.slane %v2221, 4
        %v2224 = vshll.u32 %v1942, 16
        %v2226 = vrot.slane %v2224, 5
        %v2227 = vsel %vm413, %v2222, %v2226
        %v2228 = vshrl.u32 %v1942, 16
        %v2230 = vrot.slane %v2228, 4
        %v2231 = vor.u32 %v2230, %v2226
        %v2232 = vrot.slane %v2231, 4
        %v2234 = vshll.u32 %v1968, 16
        %v2236 = vrot.slane %v2234, 5
        %v2237 = vsel %vm413, %v2232, %v2236
        %v2239 = vshrl.u32 %v1943, 16
        %v2241 = vrot.slane %v2239, 4
        %v2242 = vshll.u32 %v1943, 16
        %v2244 = vrot.slane %v2242, 5
        %v2245 = vor.u32 %v2241, %v2244
        %v2246 = vrot.slane %v2245, 4
        %v2248 = vshll.u32 %v1944, 16
        %v2250 = vrot.slane %v2248, 5
        %v2251 = vsel %vm413, %v2246, %v2250
        %v2252 = vshrl.u32 %v1944, 16
        %v2254 = vrot.slane %v2252, 4
        %v2255 = vor.u32 %v2254, %v2250
        %v2256 = vrot.slane %v2255, 4
        %v2258 = vshll.u32 %v1969, 16
        %v2260 = vrot.slane %v2258, 5
        %v2261 = vsel %vm413, %v2256, %v2260
        %v2263 = vshrl.u32 %v1945, 16
        %v2265 = vrot.slane %v2263, 4
        %v2266 = vshll.u32 %v1945, 16
        %v2268 = vrot.slane %v2266, 5
        %v2269 = vor.u32 %v2265, %v2268
        %v2270 = vrot.slane %v2269, 4
        %v2272 = vshll.u32 %v1946, 16
        %v2274 = vrot.slane %v2272, 5
        %v2275 = vsel %vm413, %v2270, %v2274
        %v2276 = vshrl.u32 %v1946, 16
        %v2278 = vrot.slane %v2276, 4
        %v2279 = vor.u32 %v2278, %v2274
        %v2280 = vrot.slane %v2279, 4
        %v2282 = vshll.u32 %v1970, 16
        %v2284 = vrot.slane %v2282, 5
        %v2285 = vsel %vm413, %v2280, %v2284
        %v2287 = vshrl.u32 %v1947, 16
        %v2289 = vrot.slane %v2287, 4
        %v2290 = vshll.u32 %v1947, 16
        %v2292 = vrot.slane %v2290, 5
        %v2293 = vor.u32 %v2289, %v2292
        %v2294 = vrot.slane %v2293, 4
        %v2296 = vshll.u32 %v1948, 16
        %v2298 = vrot.slane %v2296, 5
        %v2299 = vsel %vm413, %v2294, %v2298
        %v2300 = vshrl.u32 %v1948, 16
        %v2302 = vrot.slane %v2300, 4
        %v2303 = vor.u32 %v2302, %v2298
        %v2304 = vrot.slane %v2303, 4
        %v2306 = vshll.u32 %v1971, 16
        %v2308 = vrot.slane %v2306, 5
        %v2309 = vsel %vm413, %v2304, %v2308
        %v2311 = vshrl.u32 %v1949, 16
        %v2313 = vrot.slane %v2311, 4
        %v2314 = vshll.u32 %v1949, 16
        %v2316 = vrot.slane %v2314, 5
        %v2317 = vor.u32 %v2313, %v2316
        %v2318 = vrot.slane %v2317, 4
        %v2320 = vshll.u32 %v1950, 16
        %v2322 = vrot.slane %v2320, 5
        %v2323 = vsel %vm413, %v2318, %v2322
        %v2324 = vshrl.u32 %v1950, 16
        %v2326 = vrot.slane %v2324, 4
        %v2327 = vor.u32 %v2326, %v2322
        %v2328 = vrot.slane %v2327, 4
        %v2330 = vshll.u32 %v1972, 16
        %v2332 = vrot.slane %v2330, 5
        %v2333 = vsel %vm413, %v2328, %v2332
        %v2335 = vshrl.u32 %v1951, 16
        %v2337 = vrot.slane %v2335, 4
        %v2338 = vshll.u32 %v1951, 16
        %v2340 = vrot.slane %v2338, 5
        %v2341 = vor.u32 %v2337, %v2340
        %v2342 = vrot.slane %v2341, 4
        %v2344 = vshll.u32 %v1952, 16
        %v2346 = vrot.slane %v2344, 5
        %v2347 = vsel %vm413, %v2342, %v2346
        %v2348 = vshrl.u32 %v1952, 16
        %v2350 = vrot.slane %v2348, 4
        %v2351 = vor.u32 %v2350, %v2346
        %v2352 = vrot.slane %v2351, 4
        %v2354 = vshll.u32 %v1973, 16
        %v2356 = vrot.slane %v2354, 5
        %v2357 = vsel %vm413, %v2352, %v2356
        %s2358 = scalar_lea.vmem %s4, 20
        %v2359 = vld [vmem:[%s2358] sm:$0xf]
        %v2360 = vld [vmem:[%s2358 + $0x4] sm:$0xf]
        %v2361 = vld [vmem:[%s2358 + $0x8] sm:$0xf]
        %v2362 = vld [vmem:[%s2358 + $0xc] sm:$0xf]
        %v2363 = vld [vmem:[%s2358 + $0x10] sm:$0x1]
        %v2364 = vunpack.c.l.b16 %v1987
        %v2365 = vunpack.c.l.b16 %v1997
        %v2366 = vunpack.c.l.b16 %v2011
        %v2367 = vunpack.c.l.b16 %v2021
        %v2368 = vunpack.c.l.b16 %v2035
        %v2369 = vunpack.c.l.b16 %v2045
        %v2370 = vunpack.c.l.b16 %v2059
        %v2371 = vunpack.c.l.b16 %v2069
        %v2372 = vunpack.c.l.b16 %v2083
        %v2373 = vunpack.c.l.b16 %v2093
        %v2374 = vunpack.c.l.b16 %v2107
        %v2375 = vunpack.c.l.b16 %v2117
        %v2376 = vunpack.c.l.b16 %v2131
        %v2377 = vunpack.c.l.b16 %v2141
        %v2378 = vunpack.c.l.b16 %v2155
        %v2379 = vunpack.c.l.b16 %v2165
        %v2380 = vunpack.c.l.b16 %v2179
        %v2381 = vunpack.c.l.b16 %v2189
        %v2382 = vunpack.c.l.b16 %v2203
        %v2383 = vunpack.c.l.b16 %v2213
        %v2384 = vunpack.c.l.b16 %v2227
        %v2385 = vunpack.c.l.b16 %v2237
        %v2386 = vunpack.c.l.b16 %v2251
        %v2387 = vunpack.c.l.b16 %v2261
        %v2388 = vunpack.c.l.b16 %v2275
        %v2389 = vunpack.c.l.b16 %v2285
        %v2390 = vunpack.c.l.b16 %v2299
        %v2391 = vunpack.c.l.b16 %v2309
        %v2392 = vunpack.c.l.b16 %v2323
        %v2393 = vunpack.c.l.b16 %v2333
        %v2394 = vunpack.c.l.b16 %v2347
        %v2395 = vunpack.c.l.b16 %v2357
        %v2396 = vpack.c.b16 %v2365, %v2364
        %v2397 = vpack.c.b16 %v2367, %v2366
        %v2398 = vpack.c.b16 %v2369, %v2368
        %v2399 = vpack.c.b16 %v2371, %v2370
        %v2400 = vpack.c.b16 %v2373, %v2372
        %v2401 = vpack.c.b16 %v2375, %v2374
        %v2402 = vpack.c.b16 %v2377, %v2376
        %v2403 = vpack.c.b16 %v2379, %v2378
        %v2404 = vpack.c.b16 %v2381, %v2380
        %v2405 = vpack.c.b16 %v2383, %v2382
        %v2406 = vpack.c.b16 %v2385, %v2384
        %v2407 = vpack.c.b16 %v2387, %v2386
        %v2408 = vpack.c.b16 %v2389, %v2388
        %v2409 = vpack.c.b16 %v2391, %v2390
        %v2410 = vpack.c.b16 %v2393, %v2392
        %v2411 = vpack.c.b16 %v2395, %v2394
        %v2417 = vunpack.c.l.b16 %v2359
        %v2418 = vunpack.c.l.b16 %v2360
        %v2419 = vunpack.c.l.b16 %v2361
        %v2420 = vunpack.c.l.b16 %v2362
        %v2421 = vunpack.c.l.b16 %v2363
        %v2422 = vpack.c.b16 %v2418, %v2417
        %v2423 = vpack.c.b16 %v2420, %v2419
        %v2424 = vpack.c.b16 %v2421, %v2421
        %v2428 = vsel %vm683, %v2396, 0
        %v2431 = vsel %vm683, %v2397, 0
        %v2434 = vsel %vm683, %v2398, 0
        %v2437 = vsel %vm683, %v2399, 0
        %v2440 = vsel %vm683, %v2400, 0
        %v2443 = vsel %vm683, %v2401, 0
        %v2446 = vsel %vm683, %v2402, 0
        %v2449 = vsel %vm683, %v2403, 0
        %v2452 = vsel %vm683, %v2404, 0
        %v2455 = vsel %vm683, %v2405, 0
        %v2458 = vsel %vm683, %v2406, 0
        %v2461 = vsel %vm683, %v2407, 0
        %v2464 = vsel %vm683, %v2408, 0
        %v2467 = vsel %vm683, %v2409, 0
        %v2470 = vsel %vm683, %v2410, 0
        %v2473 = vsel %vm683, %v2411, 0
        %v2476 = vand.u32 %v2424, %v710
        %2478 = vmatprep.subr.bf16.mxu0 0
        %2479 = vmatpush1.bf16.msra.mxu0 %v2422
        %2480 = vmatprep.subr.bf16.mxu0 0
        %2481 = vmatpush1.bf16.msra.mxu0 %v2423
        %2482 = vmatprep.subr.bf16.mxu0 0
        %2483 = vmatpush1.bf16.msra.mxu0 %v2476
        %2484 = vmatprep.subr.bf16.mxu0 0
        %2485 = vmatpush1.bf16.msra.mxu0 0
        %2486 = vmatprep.subr.bf16.mxu0 0
        %2487 = vmatpush1.bf16.msra.mxu0 0
        %2488 = vmatprep.subr.bf16.mxu0 0
        %2489 = vmatpush1.bf16.msra.mxu0 0
        %2490 = vmatprep.subr.bf16.mxu0 0
        %2491 = vmatpush1.bf16.msra.mxu0 0
        %2492 = vmatprep.subr.bf16.mxu0 0
        %2493 = vmatpush1.bf16.msra.mxu0 0
        %2494 = vmatprep.subr.bf16.mxu0 0
        %2495 = vmatpush1.bf16.msra.mxu0 0
        %2496 = vmatprep.subr.bf16.mxu0 0
        %2497 = vmatpush1.bf16.msra.mxu0 0
        %2498 = vmatprep.subr.bf16.mxu0 0
        %2499 = vmatpush1.bf16.msra.mxu0 0
        %2500 = vmatprep.subr.bf16.mxu0 0
        %2501 = vmatpush1.bf16.msra.mxu0 0
        %2502 = vmatprep.subr.bf16.mxu0 0
        %2503 = vmatpush1.bf16.msra.mxu0 0
        %2504 = vmatprep.subr.bf16.mxu0 0
        %2505 = vmatpush1.bf16.msra.mxu0 0
        %2506 = vmatprep.subr.bf16.mxu0 0
        %2507 = vmatpush1.bf16.msra.mxu0 0
        %2508 = vmatprep.subr.bf16.mxu0 0
        %2509 = vmatpush1.bf16.msra.mxu0 0
        %2510 = vmatprep.mubr.bf16.mxu0 0
        %2511 = vmatmul.mubr.bf16.gmra.mrb[0].mxu0 %v2428
        %v2512 = vpop.f32.mrb[0].mxu0
        %v2513 = vadd.f32 0.0, %v2512
        %v2514 = vpop.f32.mrb[0].mxu0
        %v2515 = vpop.f32.mrb[0].mxu0
        %v2516 = vadd.f32 0.0, %v2515
        %v2517 = vpop.f32.mrb[0].mxu0
        %2518 = vmatprep.mubr.bf16.mxu0 0
        %2519 = vmatmul.mubr.bf16.gmra.mrb[0].mxu0 %v2431
        %v2520 = vpop.f32.mrb[0].mxu0
        %v2521 = vadd.f32 0.0, %v2520
        %v2522 = vpop.f32.mrb[0].mxu0
        %v2523 = vpop.f32.mrb[0].mxu0
        %v2524 = vadd.f32 0.0, %v2523
        %v2525 = vpop.f32.mrb[0].mxu0
        %2526 = vmatprep.mubr.bf16.mxu0 0
        %2527 = vmatmul.mubr.bf16.gmra.mrb[0].mxu0 %v2434
        %v2528 = vpop.f32.mrb[0].mxu0
        %v2529 = vadd.f32 0.0, %v2528
        %v2530 = vpop.f32.mrb[0].mxu0
        %v2531 = vpop.f32.mrb[0].mxu0
        %v2532 = vadd.f32 0.0, %v2531
        %v2533 = vpop.f32.mrb[0].mxu0
        %2534 = vmatprep.mubr.bf16.mxu0 0
        %2535 = vmatmul.mubr.bf16.gmra.mrb[0].mxu0 %v2437
        %v2536 = vpop.f32.mrb[0].mxu0
        %v2537 = vadd.f32 0.0, %v2536
        %v2538 = vpop.f32.mrb[0].mxu0
        %v2539 = vpop.f32.mrb[0].mxu0
        %v2540 = vadd.f32 0.0, %v2539
        %v2541 = vpop.f32.mrb[0].mxu0
        %2542 = vmatprep.mubr.bf16.mxu0 0
        %2543 = vmatmul.mubr.bf16.gmra.mrb[0].mxu0 %v2440
        %v2544 = vpop.f32.mrb[0].mxu0
        %v2545 = vadd.f32 0.0, %v2544
        %v2546 = vpop.f32.mrb[0].mxu0
        %v2547 = vpop.f32.mrb[0].mxu0
        %v2548 = vadd.f32 0.0, %v2547
        %v2549 = vpop.f32.mrb[0].mxu0
        %2550 = vmatprep.mubr.bf16.mxu0 0
        %2551 = vmatmul.mubr.bf16.gmra.mrb[0].mxu0 %v2443
        %v2552 = vpop.f32.mrb[0].mxu0
        %v2553 = vadd.f32 0.0, %v2552
        %v2554 = vpop.f32.mrb[0].mxu0
        %v2555 = vpop.f32.mrb[0].mxu0
        %v2556 = vadd.f32 0.0, %v2555
        %v2557 = vpop.f32.mrb[0].mxu0
        %2558 = vmatprep.mubr.bf16.mxu0 0
        %2559 = vmatmul.mubr.bf16.gmra.mrb[0].mxu0 %v2446
        %v2560 = vpop.f32.mrb[0].mxu0
        %v2561 = vadd.f32 0.0, %v2560
        %v2562 = vpop.f32.mrb[0].mxu0
        %v2563 = vpop.f32.mrb[0].mxu0
        %v2564 = vadd.f32 0.0, %v2563
        %v2565 = vpop.f32.mrb[0].mxu0
        %2566 = vmatprep.mubr.bf16.mxu0 0
        %2567 = vmatmul.mubr.bf16.gmra.mrb[0].mxu0 %v2449
        %v2568 = vpop.f32.mrb[0].mxu0
        %v2569 = vadd.f32 0.0, %v2568
        %v2570 = vpop.f32.mrb[0].mxu0
        %v2571 = vpop.f32.mrb[0].mxu0
        %v2572 = vadd.f32 0.0, %v2571
        %v2573 = vpop.f32.mrb[0].mxu0
        %2574 = vmatprep.mubr.bf16.mxu0 0
        %2575 = vmatmul.mubr.bf16.gmra.mrb[0].mxu0 %v2452
        %v2576 = vpop.f32.mrb[0].mxu0
        %v2577 = vadd.f32 0.0, %v2576
        %v2578 = vpop.f32.mrb[0].mxu0
        %v2579 = vpop.f32.mrb[0].mxu0
        %v2580 = vadd.f32 0.0, %v2579
        %v2581 = vpop.f32.mrb[0].mxu0
        %2582 = vmatprep.mubr.bf16.mxu0 0
        %2583 = vmatmul.mubr.bf16.gmra.mrb[0].mxu0 %v2455
        %v2584 = vpop.f32.mrb[0].mxu0
        %v2585 = vadd.f32 0.0, %v2584
        %v2586 = vpop.f32.mrb[0].mxu0
        %v2587 = vpop.f32.mrb[0].mxu0
        %v2588 = vadd.f32 0.0, %v2587
        %v2589 = vpop.f32.mrb[0].mxu0
        %2590 = vmatprep.mubr.bf16.mxu0 0
        %2591 = vmatmul.mubr.bf16.gmra.mrb[0].mxu0 %v2458
        %v2592 = vpop.f32.mrb[0].mxu0
        %v2593 = vadd.f32 0.0, %v2592
        %v2594 = vpop.f32.mrb[0].mxu0
        %v2595 = vpop.f32.mrb[0].mxu0
        %v2596 = vadd.f32 0.0, %v2595
        %v2597 = vpop.f32.mrb[0].mxu0
        %2598 = vmatprep.mubr.bf16.mxu0 0
        %2599 = vmatmul.mubr.bf16.gmra.mrb[0].mxu0 %v2461
        %v2600 = vpop.f32.mrb[0].mxu0
        %v2601 = vadd.f32 0.0, %v2600
        %v2602 = vpop.f32.mrb[0].mxu0
        %v2603 = vpop.f32.mrb[0].mxu0
        %v2604 = vadd.f32 0.0, %v2603
        %v2605 = vpop.f32.mrb[0].mxu0
        %2606 = vmatprep.mubr.bf16.mxu0 0
        %2607 = vmatmul.mubr.bf16.gmra.mrb[0].mxu0 %v2464
        %v2608 = vpop.f32.mrb[0].mxu0
        %v2609 = vadd.f32 0.0, %v2608
        %v2610 = vpop.f32.mrb[0].mxu0
        %v2611 = vpop.f32.mrb[0].mxu0
        %v2612 = vadd.f32 0.0, %v2611
        %v2613 = vpop.f32.mrb[0].mxu0
        %2614 = vmatprep.mubr.bf16.mxu0 0
        %2615 = vmatmul.mubr.bf16.gmra.mrb[0].mxu0 %v2467
        %v2616 = vpop.f32.mrb[0].mxu0
        %v2617 = vadd.f32 0.0, %v2616
        %v2618 = vpop.f32.mrb[0].mxu0
        %v2619 = vpop.f32.mrb[0].mxu0
        %v2620 = vadd.f32 0.0, %v2619
        %v2621 = vpop.f32.mrb[0].mxu0
        %2622 = vmatprep.mubr.bf16.mxu0 0
        %2623 = vmatmul.mubr.bf16.gmra.mrb[0].mxu0 %v2470
        %v2624 = vpop.f32.mrb[0].mxu0
        %v2625 = vadd.f32 0.0, %v2624
        %v2626 = vpop.f32.mrb[0].mxu0
        %v2627 = vpop.f32.mrb[0].mxu0
        %v2628 = vadd.f32 0.0, %v2627
        %v2629 = vpop.f32.mrb[0].mxu0
        %2630 = vmatprep.mubr.bf16.mxu0 0
        %2631 = vmatmul.mubr.bf16.gmra.mrb[0].mxu0 %v2473
        %v2632 = vpop.f32.mrb[0].mxu0
        %v2633 = vadd.f32 0.0, %v2632
        %v2634 = vpop.f32.mrb[0].mxu0
        %v2635 = vpop.f32.mrb[0].mxu0
        %v2636 = vadd.f32 0.0, %v2635
        %v2637 = vpop.f32.mrb[0].mxu0
        %2638 = vdwg.mxu0
        %v2671 = vunpack.c.l.b16 %v1921
        %v2672 = vunpack.c.l.b16 %v1922
        %v2673 = vunpack.c.l.b16 %v1923
        %v2674 = vunpack.c.l.b16 %v1924
        %v2675 = vunpack.c.l.b16 %v1925
        %v2676 = vunpack.c.l.b16 %v1926
        %v2677 = vunpack.c.l.b16 %v1927
        %v2678 = vunpack.c.l.b16 %v1928
        %v2679 = vunpack.c.l.b16 %v1929
        %v2680 = vunpack.c.l.b16 %v1930
        %v2681 = vunpack.c.l.b16 %v1931
        %v2682 = vunpack.c.l.b16 %v1932
        %v2683 = vunpack.c.l.b16 %v1933
        %v2684 = vunpack.c.l.b16 %v1934
        %v2685 = vunpack.c.l.b16 %v1935
        %v2686 = vunpack.c.l.b16 %v1936
        %v2687 = vunpack.c.l.b16 %v1937
        %v2688 = vunpack.c.l.b16 %v1938
        %v2689 = vunpack.c.l.b16 %v1939
        %v2690 = vunpack.c.l.b16 %v1940
        %v2691 = vunpack.c.l.b16 %v1941
        %v2692 = vunpack.c.l.b16 %v1942
        %v2693 = vunpack.c.l.b16 %v1943
        %v2694 = vunpack.c.l.b16 %v1944
        %v2695 = vunpack.c.l.b16 %v1945
        %v2696 = vunpack.c.l.b16 %v1946
        %v2697 = vunpack.c.l.b16 %v1947
        %v2698 = vunpack.c.l.b16 %v1948
        %v2699 = vunpack.c.l.b16 %v1949
        %v2700 = vunpack.c.l.b16 %v1950
        %v2701 = vunpack.c.l.b16 %v1951
        %v2702 = vunpack.c.l.b16 %v1952
        %v2703 = vpack.c.b16 %v2672, %v2671
        %v2704 = vpack.c.b16 %v2674, %v2673
        %v2705 = vpack.c.b16 %v2676, %v2675
        %v2706 = vpack.c.b16 %v2678, %v2677
        %v2707 = vpack.c.b16 %v2680, %v2679
        %v2708 = vpack.c.b16 %v2682, %v2681
        %v2709 = vpack.c.b16 %v2684, %v2683
        %v2710 = vpack.c.b16 %v2686, %v2685
        %v2711 = vpack.c.b16 %v2688, %v2687
        %v2712 = vpack.c.b16 %v2690, %v2689
        %v2713 = vpack.c.b16 %v2692, %v2691
        %v2714 = vpack.c.b16 %v2694, %v2693
        %v2715 = vpack.c.b16 %v2696, %v2695
        %v2716 = vpack.c.b16 %v2698, %v2697
        %v2717 = vpack.c.b16 %v2700, %v2699
        %v2718 = vpack.c.b16 %v2702, %v2701
        %v2724 = vunpack.c.l.b16 %v1953
        %v2725 = vunpack.c.l.b16 %v1954
        %v2726 = vunpack.c.l.b16 %v1955
        %v2727 = vunpack.c.l.b16 %v1956
        %v2728 = vunpack.c.l.b16 %v1957
        %v2729 = vpack.c.b16 %v2725, %v2724
        %v2730 = vpack.c.b16 %v2727, %v2726
        %v2731 = vpack.c.b16 %v2728, %v2728
        %v2735 = vsel %vm683, %v2703, 0
        %v2738 = vsel %vm683, %v2704, 0
        %v2741 = vsel %vm683, %v2705, 0
        %v2744 = vsel %vm683, %v2706, 0
        %v2747 = vsel %vm683, %v2707, 0
        %v2750 = vsel %vm683, %v2708, 0
        %v2753 = vsel %vm683, %v2709, 0
        %v2756 = vsel %vm683, %v2710, 0
        %v2759 = vsel %vm683, %v2711, 0
        %v2762 = vsel %vm683, %v2712, 0
        %v2765 = vsel %vm683, %v2713, 0
        %v2768 = vsel %vm683, %v2714, 0
        %v2771 = vsel %vm683, %v2715, 0
        %v2774 = vsel %vm683, %v2716, 0
        %v2777 = vsel %vm683, %v2717, 0
        %v2780 = vsel %vm683, %v2718, 0
        %v2783 = vand.u32 %v2731, %v710
        %2785 = vmatprep.subr.bf16.mxu0 0
        %2786 = vmatpush1.bf16.msra.mxu0 %v2729
        %2787 = vmatprep.subr.bf16.mxu0 0
        %2788 = vmatpush1.bf16.msra.mxu0 %v2730
        %2789 = vmatprep.subr.bf16.mxu0 0
        %2790 = vmatpush1.bf16.msra.mxu0 %v2783
        %2791 = vmatprep.subr.bf16.mxu0 0
        %2792 = vmatpush1.bf16.msra.mxu0 0
        %2793 = vmatprep.subr.bf16.mxu0 0
        %2794 = vmatpush1.bf16.msra.mxu0 0
        %2795 = vmatprep.subr.bf16.mxu0 0
        %2796 = vmatpush1.bf16.msra.mxu0 0
        %2797 = vmatprep.subr.bf16.mxu0 0
        %2798 = vmatpush1.bf16.msra.mxu0 0
        %2799 = vmatprep.subr.bf16.mxu0 0
        %2800 = vmatpush1.bf16.msra.mxu0 0
        %2801 = vmatprep.subr.bf16.mxu0 0
        %2802 = vmatpush1.bf16.msra.mxu0 0
        %2803 = vmatprep.subr.bf16.mxu0 0
        %2804 = vmatpush1.bf16.msra.mxu0 0
        %2805 = vmatprep.subr.bf16.mxu0 0
        %2806 = vmatpush1.bf16.msra.mxu0 0
        %2807 = vmatprep.subr.bf16.mxu0 0
        %2808 = vmatpush1.bf16.msra.mxu0 0
        %2809 = vmatprep.subr.bf16.mxu0 0
        %2810 = vmatpush1.bf16.msra.mxu0 0
        %2811 = vmatprep.subr.bf16.mxu0 0
        %2812 = vmatpush1.bf16.msra.mxu0 0
        %2813 = vmatprep.subr.bf16.mxu0 0
        %2814 = vmatpush1.bf16.msra.mxu0 0
        %2815 = vmatprep.subr.bf16.mxu0 0
        %2816 = vmatpush1.bf16.msra.mxu0 0
        %2817 = vmatprep.mubr.bf16.mxu0 0
        %2818 = vmatmul.mubr.bf16.gmra.mrb[0].mxu0 %v2735
        %v2819 = vpop.f32.mrb[0].mxu0
        %v2820 = vadd.f32 %v2513, %v2819
        %v2821 = vpop.f32.mrb[0].mxu0
        %v2822 = vpop.f32.mrb[0].mxu0
        %v2823 = vadd.f32 %v2516, %v2822
        %v2824 = vpop.f32.mrb[0].mxu0
        %2825 = vmatprep.mubr.bf16.mxu0 0
        %2826 = vmatmul.mubr.bf16.gmra.mrb[0].mxu0 %v2738
        %v2827 = vpop.f32.mrb[0].mxu0
        %v2828 = vadd.f32 %v2521, %v2827
        %v2829 = vpop.f32.mrb[0].mxu0
        %v2830 = vpop.f32.mrb[0].mxu0
        %v2831 = vadd.f32 %v2524, %v2830
        %v2832 = vpop.f32.mrb[0].mxu0
        %2833 = vmatprep.mubr.bf16.mxu0 0
        %2834 = vmatmul.mubr.bf16.gmra.mrb[0].mxu0 %v2741
        %v2835 = vpop.f32.mrb[0].mxu0
        %v2836 = vadd.f32 %v2529, %v2835
        %v2837 = vpop.f32.mrb[0].mxu0
        %v2838 = vpop.f32.mrb[0].mxu0
        %v2839 = vadd.f32 %v2532, %v2838
        %v2840 = vpop.f32.mrb[0].mxu0
        %2841 = vmatprep.mubr.bf16.mxu0 0
        %2842 = vmatmul.mubr.bf16.gmra.mrb[0].mxu0 %v2744
        %v2843 = vpop.f32.mrb[0].mxu0
        %v2844 = vadd.f32 %v2537, %v2843
        %v2845 = vpop.f32.mrb[0].mxu0
        %v2846 = vpop.f32.mrb[0].mxu0
        %v2847 = vadd.f32 %v2540, %v2846
        %v2848 = vpop.f32.mrb[0].mxu0
        %2849 = vmatprep.mubr.bf16.mxu0 0
        %2850 = vmatmul.mubr.bf16.gmra.mrb[0].mxu0 %v2747
        %v2851 = vpop.f32.mrb[0].mxu0
        %v2852 = vadd.f32 %v2545, %v2851
        %v2853 = vpop.f32.mrb[0].mxu0
        %v2854 = vpop.f32.mrb[0].mxu0
        %v2855 = vadd.f32 %v2548, %v2854
        %v2856 = vpop.f32.mrb[0].mxu0
        %2857 = vmatprep.mubr.bf16.mxu0 0
        %2858 = vmatmul.mubr.bf16.gmra.mrb[0].mxu0 %v2750
        %v2859 = vpop.f32.mrb[0].mxu0
        %v2860 = vadd.f32 %v2553, %v2859
        %v2861 = vpop.f32.mrb[0].mxu0
        %v2862 = vpop.f32.mrb[0].mxu0
        %v2863 = vadd.f32 %v2556, %v2862
        %v2864 = vpop.f32.mrb[0].mxu0
        %2865 = vmatprep.mubr.bf16.mxu0 0
        %2866 = vmatmul.mubr.bf16.gmra.mrb[0].mxu0 %v2753
        %v2867 = vpop.f32.mrb[0].mxu0
        %v2868 = vadd.f32 %v2561, %v2867
        %v2869 = vpop.f32.mrb[0].mxu0
        %v2870 = vpop.f32.mrb[0].mxu0
        %v2871 = vadd.f32 %v2564, %v2870
        %v2872 = vpop.f32.mrb[0].mxu0
        %2873 = vmatprep.mubr.bf16.mxu0 0
        %2874 = vmatmul.mubr.bf16.gmra.mrb[0].mxu0 %v2756
        %v2875 = vpop.f32.mrb[0].mxu0
        %v2876 = vadd.f32 %v2569, %v2875
        %v2877 = vpop.f32.mrb[0].mxu0
        %v2878 = vpop.f32.mrb[0].mxu0
        %v2879 = vadd.f32 %v2572, %v2878
        %v2880 = vpop.f32.mrb[0].mxu0
        %2881 = vmatprep.mubr.bf16.mxu0 0
        %2882 = vmatmul.mubr.bf16.gmra.mrb[0].mxu0 %v2759
        %v2883 = vpop.f32.mrb[0].mxu0
        %v2884 = vadd.f32 %v2577, %v2883
        %v2885 = vpop.f32.mrb[0].mxu0
        %v2886 = vpop.f32.mrb[0].mxu0
        %v2887 = vadd.f32 %v2580, %v2886
        %v2888 = vpop.f32.mrb[0].mxu0
        %2889 = vmatprep.mubr.bf16.mxu0 0
        %2890 = vmatmul.mubr.bf16.gmra.mrb[0].mxu0 %v2762
        %v2891 = vpop.f32.mrb[0].mxu0
        %v2892 = vadd.f32 %v2585, %v2891
        %v2893 = vpop.f32.mrb[0].mxu0
        %v2894 = vpop.f32.mrb[0].mxu0
        %v2895 = vadd.f32 %v2588, %v2894
        %v2896 = vpop.f32.mrb[0].mxu0
        %2897 = vmatprep.mubr.bf16.mxu0 0
        %2898 = vmatmul.mubr.bf16.gmra.mrb[0].mxu0 %v2765
        %v2899 = vpop.f32.mrb[0].mxu0
        %v2900 = vadd.f32 %v2593, %v2899
        %v2901 = vpop.f32.mrb[0].mxu0
        %v2902 = vpop.f32.mrb[0].mxu0
        %v2903 = vadd.f32 %v2596, %v2902
        %v2904 = vpop.f32.mrb[0].mxu0
        %2905 = vmatprep.mubr.bf16.mxu0 0
        %2906 = vmatmul.mubr.bf16.gmra.mrb[0].mxu0 %v2768
        %v2907 = vpop.f32.mrb[0].mxu0
        %v2908 = vadd.f32 %v2601, %v2907
        %v2909 = vpop.f32.mrb[0].mxu0
        %v2910 = vpop.f32.mrb[0].mxu0
        %v2911 = vadd.f32 %v2604, %v2910
        %v2912 = vpop.f32.mrb[0].mxu0
        %2913 = vmatprep.mubr.bf16.mxu0 0
        %2914 = vmatmul.mubr.bf16.gmra.mrb[0].mxu0 %v2771
        %v2915 = vpop.f32.mrb[0].mxu0
        %v2916 = vadd.f32 %v2609, %v2915
        %v2917 = vpop.f32.mrb[0].mxu0
        %v2918 = vpop.f32.mrb[0].mxu0
        %v2919 = vadd.f32 %v2612, %v2918
        %v2920 = vpop.f32.mrb[0].mxu0
        %2921 = vmatprep.mubr.bf16.mxu0 0
        %2922 = vmatmul.mubr.bf16.gmra.mrb[0].mxu0 %v2774
        %v2923 = vpop.f32.mrb[0].mxu0
        %v2924 = vadd.f32 %v2617, %v2923
        %v2925 = vpop.f32.mrb[0].mxu0
        %v2926 = vpop.f32.mrb[0].mxu0
        %v2927 = vadd.f32 %v2620, %v2926
        %v2928 = vpop.f32.mrb[0].mxu0
        %2929 = vmatprep.mubr.bf16.mxu0 0
        %2930 = vmatmul.mubr.bf16.gmra.mrb[0].mxu0 %v2777
        %v2931 = vpop.f32.mrb[0].mxu0
        %v2932 = vadd.f32 %v2625, %v2931
        %v2933 = vpop.f32.mrb[0].mxu0
        %v2934 = vpop.f32.mrb[0].mxu0
        %v2935 = vadd.f32 %v2628, %v2934
        %v2936 = vpop.f32.mrb[0].mxu0
        %2937 = vmatprep.mubr.bf16.mxu0 0
        %2938 = vmatmul.mubr.bf16.gmra.mrb[0].mxu0 %v2780
        %v2939 = vpop.f32.mrb[0].mxu0
        %v2940 = vadd.f32 %v2633, %v2939
        %v2941 = vpop.f32.mrb[0].mxu0
        %v2942 = vpop.f32.mrb[0].mxu0
        %v2943 = vadd.f32 %v2636, %v2942
        %v2944 = vpop.f32.mrb[0].mxu0
        %2945 = vdwg.mxu0
        %v2946 = vld [vmem:[%s362] sm:$0xe]
        %v2947 = vld [vmem:[%s362 + $0xc] sm:$0xe]
        %v2948 = vld [vmem:[%s362 + $0x18] sm:$0xe]
        %v2949 = vld [vmem:[%s362 + $0x24] sm:$0xe]
        %v2950 = vld [vmem:[%s362 + $0x30] sm:$0xe]
        %v2951 = vld [vmem:[%s362 + $0x3c] sm:$0xe]
        %v2952 = vld [vmem:[%s362 + $0x48] sm:$0xe]
        %v2953 = vld [vmem:[%s362 + $0x54] sm:$0xe]
        %v2954 = vld [vmem:[%s362 + $0x60] sm:$0xe]
        %v2955 = vld [vmem:[%s362 + $0x6c] sm:$0xe]
        %v2956 = vld [vmem:[%s362 + $0x78] sm:$0xe]
        %v2957 = vld [vmem:[%s362 + $0x84] sm:$0xe]
        %v2958 = vld [vmem:[%s362 + $0x90] sm:$0xe]
        %v2959 = vld [vmem:[%s362 + $0x9c] sm:$0xe]
        %v2960 = vld [vmem:[%s362 + $0xa8] sm:$0xe]
        %v2961 = vld [vmem:[%s362 + $0xb4] sm:$0xe]
        %v2994 = vrot.slane %v2946, 5
        %v2995 = vrot.slane %v2994, 4
        %v2996 = vrot.slane %v1922, 5
        %v2997 = vsel %vm1040, %v2995, %v2996
        %v2998 = vrot.slane %v2996, 4
        %v2999 = vrot.slane %v1958, 5
        %v3000 = vsel %vm1040, %v2998, %v2999
        %v3001 = vrot.slane %v2947, 5
        %v3002 = vrot.slane %v3001, 4
        %v3003 = vrot.slane %v1924, 5
        %v3004 = vsel %vm1040, %v3002, %v3003
        %v3005 = vrot.slane %v3003, 4
        %v3006 = vrot.slane %v1959, 5
        %v3007 = vsel %vm1040, %v3005, %v3006
        %v3008 = vrot.slane %v2948, 5
        %v3009 = vrot.slane %v3008, 4
        %v3010 = vrot.slane %v1926, 5
        %v3011 = vsel %vm1040, %v3009, %v3010
        %v3012 = vrot.slane %v3010, 4
        %v3013 = vrot.slane %v1960, 5
        %v3014 = vsel %vm1040, %v3012, %v3013
        %v3015 = vrot.slane %v2949, 5
        %v3016 = vrot.slane %v3015, 4
        %v3017 = vrot.slane %v1928, 5
        %v3018 = vsel %vm1040, %v3016, %v3017
        %v3019 = vrot.slane %v3017, 4
        %v3020 = vrot.slane %v1961, 5
        %v3021 = vsel %vm1040, %v3019, %v3020
        %v3022 = vrot.slane %v2950, 5
        %v3023 = vrot.slane %v3022, 4
        %v3024 = vrot.slane %v1930, 5
        %v3025 = vsel %vm1040, %v3023, %v3024
        %v3026 = vrot.slane %v3024, 4
        %v3027 = vrot.slane %v1962, 5
        %v3028 = vsel %vm1040, %v3026, %v3027
        %v3029 = vrot.slane %v2951, 5
        %v3030 = vrot.slane %v3029, 4
        %v3031 = vrot.slane %v1932, 5
        %v3032 = vsel %vm1040, %v3030, %v3031
        %v3033 = vrot.slane %v3031, 4
        %v3034 = vrot.slane %v1963, 5
        %v3035 = vsel %vm1040, %v3033, %v3034
        %v3036 = vrot.slane %v2952, 5
        %v3037 = vrot.slane %v3036, 4
        %v3038 = vrot.slane %v1934, 5
        %v3039 = vsel %vm1040, %v3037, %v3038
        %v3040 = vrot.slane %v3038, 4
        %v3041 = vrot.slane %v1964, 5
        %v3042 = vsel %vm1040, %v3040, %v3041
        %v3043 = vrot.slane %v2953, 5
        %v3044 = vrot.slane %v3043, 4
        %v3045 = vrot.slane %v1936, 5
        %v3046 = vsel %vm1040, %v3044, %v3045
        %v3047 = vrot.slane %v3045, 4
        %v3048 = vrot.slane %v1965, 5
        %v3049 = vsel %vm1040, %v3047, %v3048
        %v3050 = vrot.slane %v2954, 5
        %v3051 = vrot.slane %v3050, 4
        %v3052 = vrot.slane %v1938, 5
        %v3053 = vsel %vm1040, %v3051, %v3052
        %v3054 = vrot.slane %v3052, 4
        %v3055 = vrot.slane %v1966, 5
        %v3056 = vsel %vm1040, %v3054, %v3055
        %v3057 = vrot.slane %v2955, 5
        %v3058 = vrot.slane %v3057, 4
        %v3059 = vrot.slane %v1940, 5
        %v3060 = vsel %vm1040, %v3058, %v3059
        %v3061 = vrot.slane %v3059, 4
        %v3062 = vrot.slane %v1967, 5
        %v3063 = vsel %vm1040, %v3061, %v3062
        %v3064 = vrot.slane %v2956, 5
        %v3065 = vrot.slane %v3064, 4
        %v3066 = vrot.slane %v1942, 5
        %v3067 = vsel %vm1040, %v3065, %v3066
        %v3068 = vrot.slane %v3066, 4
        %v3069 = vrot.slane %v1968, 5
        %v3070 = vsel %vm1040, %v3068, %v3069
        %v3071 = vrot.slane %v2957, 5
        %v3072 = vrot.slane %v3071, 4
        %v3073 = vrot.slane %v1944, 5
        %v3074 = vsel %vm1040, %v3072, %v3073
        %v3075 = vrot.slane %v3073, 4
        %v3076 = vrot.slane %v1969, 5
        %v3077 = vsel %vm1040, %v3075, %v3076
        %v3078 = vrot.slane %v2958, 5
        %v3079 = vrot.slane %v3078, 4
        %v3080 = vrot.slane %v1946, 5
        %v3081 = vsel %vm1040, %v3079, %v3080
        %v3082 = vrot.slane %v3080, 4
        %v3083 = vrot.slane %v1970, 5
        %v3084 = vsel %vm1040, %v3082, %v3083
        %v3085 = vrot.slane %v2959, 5
        %v3086 = vrot.slane %v3085, 4
        %v3087 = vrot.slane %v1948, 5
        %v3088 = vsel %vm1040, %v3086, %v3087
        %v3089 = vrot.slane %v3087, 4
        %v3090 = vrot.slane %v1971, 5
        %v3091 = vsel %vm1040, %v3089, %v3090
        %v3092 = vrot.slane %v2960, 5
        %v3093 = vrot.slane %v3092, 4
        %v3094 = vrot.slane %v1950, 5
        %v3095 = vsel %vm1040, %v3093, %v3094
        %v3096 = vrot.slane %v3094, 4
        %v3097 = vrot.slane %v1972, 5
        %v3098 = vsel %vm1040, %v3096, %v3097
        %v3099 = vrot.slane %v2961, 5
        %v3100 = vrot.slane %v3099, 4
        %v3101 = vrot.slane %v1952, 5
        %v3102 = vsel %vm1040, %v3100, %v3101
        %v3103 = vrot.slane %v3101, 4
        %v3104 = vrot.slane %v1973, 5
        %v3105 = vsel %vm1040, %v3103, %v3104
        %s3106 = scalar_lea.vmem %s4, 40
        %v3107 = vld [vmem:[%s3106] sm:$0xf]
        %v3108 = vld [vmem:[%s3106 + $0x4] sm:$0xf]
        %v3109 = vld [vmem:[%s3106 + $0x8] sm:$0xf]
        %v3110 = vld [vmem:[%s3106 + $0xc] sm:$0xf]
        %v3111 = vld [vmem:[%s3106 + $0x10] sm:$0x1]
        %v3112 = vunpack.c.l.b16 %v2997
        %v3113 = vunpack.c.l.b16 %v3000
        %v3114 = vunpack.c.l.b16 %v3004
        %v3115 = vunpack.c.l.b16 %v3007
        %v3116 = vunpack.c.l.b16 %v3011
        %v3117 = vunpack.c.l.b16 %v3014
        %v3118 = vunpack.c.l.b16 %v3018
        %v3119 = vunpack.c.l.b16 %v3021
        %v3120 = vunpack.c.l.b16 %v3025
        %v3121 = vunpack.c.l.b16 %v3028
        %v3122 = vunpack.c.l.b16 %v3032
        %v3123 = vunpack.c.l.b16 %v3035
        %v3124 = vunpack.c.l.b16 %v3039
        %v3125 = vunpack.c.l.b16 %v3042
        %v3126 = vunpack.c.l.b16 %v3046
        %v3127 = vunpack.c.l.b16 %v3049
        %v3128 = vunpack.c.l.b16 %v3053
        %v3129 = vunpack.c.l.b16 %v3056
        %v3130 = vunpack.c.l.b16 %v3060
        %v3131 = vunpack.c.l.b16 %v3063
        %v3132 = vunpack.c.l.b16 %v3067
        %v3133 = vunpack.c.l.b16 %v3070
        %v3134 = vunpack.c.l.b16 %v3074
        %v3135 = vunpack.c.l.b16 %v3077
        %v3136 = vunpack.c.l.b16 %v3081
        %v3137 = vunpack.c.l.b16 %v3084
        %v3138 = vunpack.c.l.b16 %v3088
        %v3139 = vunpack.c.l.b16 %v3091
        %v3140 = vunpack.c.l.b16 %v3095
        %v3141 = vunpack.c.l.b16 %v3098
        %v3142 = vunpack.c.l.b16 %v3102
        %v3143 = vunpack.c.l.b16 %v3105
        %v3144 = vpack.c.b16 %v3113, %v3112
        %v3145 = vpack.c.b16 %v3115, %v3114
        %v3146 = vpack.c.b16 %v3117, %v3116
        %v3147 = vpack.c.b16 %v3119, %v3118
        %v3148 = vpack.c.b16 %v3121, %v3120
        %v3149 = vpack.c.b16 %v3123, %v3122
        %v3150 = vpack.c.b16 %v3125, %v3124
        %v3151 = vpack.c.b16 %v3127, %v3126
        %v3152 = vpack.c.b16 %v3129, %v3128
        %v3153 = vpack.c.b16 %v3131, %v3130
        %v3154 = vpack.c.b16 %v3133, %v3132
        %v3155 = vpack.c.b16 %v3135, %v3134
        %v3156 = vpack.c.b16 %v3137, %v3136
        %v3157 = vpack.c.b16 %v3139, %v3138
        %v3158 = vpack.c.b16 %v3141, %v3140
        %v3159 = vpack.c.b16 %v3143, %v3142
        %v3165 = vunpack.c.l.b16 %v3107
        %v3166 = vunpack.c.l.b16 %v3108
        %v3167 = vunpack.c.l.b16 %v3109
        %v3168 = vunpack.c.l.b16 %v3110
        %v3169 = vunpack.c.l.b16 %v3111
        %v3170 = vpack.c.b16 %v3166, %v3165
        %v3171 = vpack.c.b16 %v3168, %v3167
        %v3172 = vpack.c.b16 %v3169, %v3169
        %v3176 = vsel %vm683, %v3144, 0
        %v3179 = vsel %vm683, %v3145, 0
        %v3182 = vsel %vm683, %v3146, 0
        %v3185 = vsel %vm683, %v3147, 0
        %v3188 = vsel %vm683, %v3148, 0
        %v3191 = vsel %vm683, %v3149, 0
        %v3194 = vsel %vm683, %v3150, 0
        %v3197 = vsel %vm683, %v3151, 0
        %v3200 = vsel %vm683, %v3152, 0
        %v3203 = vsel %vm683, %v3153, 0
        %v3206 = vsel %vm683, %v3154, 0
        %v3209 = vsel %vm683, %v3155, 0
        %v3212 = vsel %vm683, %v3156, 0
        %v3215 = vsel %vm683, %v3157, 0
        %v3218 = vsel %vm683, %v3158, 0
        %v3221 = vsel %vm683, %v3159, 0
        %v3224 = vand.u32 %v3172, %v710
        %3226 = vmatprep.subr.bf16.mxu0 0
        %3227 = vmatpush1.bf16.msra.mxu0 %v3170
        %3228 = vmatprep.subr.bf16.mxu0 0
        %3229 = vmatpush1.bf16.msra.mxu0 %v3171
        %3230 = vmatprep.subr.bf16.mxu0 0
        %3231 = vmatpush1.bf16.msra.mxu0 %v3224
        %3232 = vmatprep.subr.bf16.mxu0 0
        %3233 = vmatpush1.bf16.msra.mxu0 0
        %3234 = vmatprep.subr.bf16.mxu0 0
        %3235 = vmatpush1.bf16.msra.mxu0 0
        %3236 = vmatprep.subr.bf16.mxu0 0
        %3237 = vmatpush1.bf16.msra.mxu0 0
        %3238 = vmatprep.subr.bf16.mxu0 0
        %3239 = vmatpush1.bf16.msra.mxu0 0
        %3240 = vmatprep.subr.bf16.mxu0 0
        %3241 = vmatpush1.bf16.msra.mxu0 0
        %3242 = vmatprep.subr.bf16.mxu0 0
        %3243 = vmatpush1.bf16.msra.mxu0 0
        %3244 = vmatprep.subr.bf16.mxu0 0
        %3245 = vmatpush1.bf16.msra.mxu0 0
        %3246 = vmatprep.subr.bf16.mxu0 0
        %3247 = vmatpush1.bf16.msra.mxu0 0
        %3248 = vmatprep.subr.bf16.mxu0 0
        %3249 = vmatpush1.bf16.msra.mxu0 0
        %3250 = vmatprep.subr.bf16.mxu0 0
        %3251 = vmatpush1.bf16.msra.mxu0 0
        %3252 = vmatprep.subr.bf16.mxu0 0
        %3253 = vmatpush1.bf16.msra.mxu0 0
        %3254 = vmatprep.subr.bf16.mxu0 0
        %3255 = vmatpush1.bf16.msra.mxu0 0
        %3256 = vmatprep.subr.bf16.mxu0 0
        %3257 = vmatpush1.bf16.msra.mxu0 0
        %3258 = vmatprep.mubr.bf16.mxu0 0
        %3259 = vmatmul.mubr.bf16.gmra.mrb[0].mxu0 %v3176
        %v3260 = vpop.f32.mrb[0].mxu0
        %v3261 = vadd.f32 0.0, %v3260
        %v3262 = vpop.f32.mrb[0].mxu0
        %v3263 = vpop.f32.mrb[0].mxu0
        %v3264 = vadd.f32 0.0, %v3263
        %v3265 = vpop.f32.mrb[0].mxu0
        %3266 = vmatprep.mubr.bf16.mxu0 0
        %3267 = vmatmul.mubr.bf16.gmra.mrb[0].mxu0 %v3179
        %v3268 = vpop.f32.mrb[0].mxu0
        %v3269 = vadd.f32 0.0, %v3268
        %v3270 = vpop.f32.mrb[0].mxu0
        %v3271 = vpop.f32.mrb[0].mxu0
        %v3272 = vadd.f32 0.0, %v3271
        %v3273 = vpop.f32.mrb[0].mxu0
        %3274 = vmatprep.mubr.bf16.mxu0 0
        %3275 = vmatmul.mubr.bf16.gmra.mrb[0].mxu0 %v3182
        %v3276 = vpop.f32.mrb[0].mxu0
        %v3277 = vadd.f32 0.0, %v3276
        %v3278 = vpop.f32.mrb[0].mxu0
        %v3279 = vpop.f32.mrb[0].mxu0
        %v3280 = vadd.f32 0.0, %v3279
        %v3281 = vpop.f32.mrb[0].mxu0
        %3282 = vmatprep.mubr.bf16.mxu0 0
        %3283 = vmatmul.mubr.bf16.gmra.mrb[0].mxu0 %v3185
        %v3284 = vpop.f32.mrb[0].mxu0
        %v3285 = vadd.f32 0.0, %v3284
        %v3286 = vpop.f32.mrb[0].mxu0
        %v3287 = vpop.f32.mrb[0].mxu0
        %v3288 = vadd.f32 0.0, %v3287
        %v3289 = vpop.f32.mrb[0].mxu0
        %3290 = vmatprep.mubr.bf16.mxu0 0
        %3291 = vmatmul.mubr.bf16.gmra.mrb[0].mxu0 %v3188
        %v3292 = vpop.f32.mrb[0].mxu0
        %v3293 = vadd.f32 0.0, %v3292
        %v3294 = vpop.f32.mrb[0].mxu0
        %v3295 = vpop.f32.mrb[0].mxu0
        %v3296 = vadd.f32 0.0, %v3295
        %v3297 = vpop.f32.mrb[0].mxu0
        %3298 = vmatprep.mubr.bf16.mxu0 0
        %3299 = vmatmul.mubr.bf16.gmra.mrb[0].mxu0 %v3191
        %v3300 = vpop.f32.mrb[0].mxu0
        %v3301 = vadd.f32 0.0, %v3300
        %v3302 = vpop.f32.mrb[0].mxu0
        %v3303 = vpop.f32.mrb[0].mxu0
        %v3304 = vadd.f32 0.0, %v3303
        %v3305 = vpop.f32.mrb[0].mxu0
        %3306 = vmatprep.mubr.bf16.mxu0 0
        %3307 = vmatmul.mubr.bf16.gmra.mrb[0].mxu0 %v3194
        %v3308 = vpop.f32.mrb[0].mxu0
        %v3309 = vadd.f32 0.0, %v3308
        %v3310 = vpop.f32.mrb[0].mxu0
        %v3311 = vpop.f32.mrb[0].mxu0
        %v3312 = vadd.f32 0.0, %v3311
        %v3313 = vpop.f32.mrb[0].mxu0
        %3314 = vmatprep.mubr.bf16.mxu0 0
        %3315 = vmatmul.mubr.bf16.gmra.mrb[0].mxu0 %v3197
        %v3316 = vpop.f32.mrb[0].mxu0
        %v3317 = vadd.f32 0.0, %v3316
        %v3318 = vpop.f32.mrb[0].mxu0
        %v3319 = vpop.f32.mrb[0].mxu0
        %v3320 = vadd.f32 0.0, %v3319
        %v3321 = vpop.f32.mrb[0].mxu0
        %3322 = vmatprep.mubr.bf16.mxu0 0
        %3323 = vmatmul.mubr.bf16.gmra.mrb[0].mxu0 %v3200
        %v3324 = vpop.f32.mrb[0].mxu0
        %v3325 = vadd.f32 0.0, %v3324
        %v3326 = vpop.f32.mrb[0].mxu0
        %v3327 = vpop.f32.mrb[0].mxu0
        %v3328 = vadd.f32 0.0, %v3327
        %v3329 = vpop.f32.mrb[0].mxu0
        %3330 = vmatprep.mubr.bf16.mxu0 0
        %3331 = vmatmul.mubr.bf16.gmra.mrb[0].mxu0 %v3203
        %v3332 = vpop.f32.mrb[0].mxu0
        %v3333 = vadd.f32 0.0, %v3332
        %v3334 = vpop.f32.mrb[0].mxu0
        %v3335 = vpop.f32.mrb[0].mxu0
        %v3336 = vadd.f32 0.0, %v3335
        %v3337 = vpop.f32.mrb[0].mxu0
        %3338 = vmatprep.mubr.bf16.mxu0 0
        %3339 = vmatmul.mubr.bf16.gmra.mrb[0].mxu0 %v3206
        %v3340 = vpop.f32.mrb[0].mxu0
        %v3341 = vadd.f32 0.0, %v3340
        %v3342 = vpop.f32.mrb[0].mxu0
        %v3343 = vpop.f32.mrb[0].mxu0
        %v3344 = vadd.f32 0.0, %v3343
        %v3345 = vpop.f32.mrb[0].mxu0
        %3346 = vmatprep.mubr.bf16.mxu0 0
        %3347 = vmatmul.mubr.bf16.gmra.mrb[0].mxu0 %v3209
        %v3348 = vpop.f32.mrb[0].mxu0
        %v3349 = vadd.f32 0.0, %v3348
        %v3350 = vpop.f32.mrb[0].mxu0
        %v3351 = vpop.f32.mrb[0].mxu0
        %v3352 = vadd.f32 0.0, %v3351
        %v3353 = vpop.f32.mrb[0].mxu0
        %3354 = vmatprep.mubr.bf16.mxu0 0
        %3355 = vmatmul.mubr.bf16.gmra.mrb[0].mxu0 %v3212
        %v3356 = vpop.f32.mrb[0].mxu0
        %v3357 = vadd.f32 0.0, %v3356
        %v3358 = vpop.f32.mrb[0].mxu0
        %v3359 = vpop.f32.mrb[0].mxu0
        %v3360 = vadd.f32 0.0, %v3359
        %v3361 = vpop.f32.mrb[0].mxu0
        %3362 = vmatprep.mubr.bf16.mxu0 0
        %3363 = vmatmul.mubr.bf16.gmra.mrb[0].mxu0 %v3215
        %v3364 = vpop.f32.mrb[0].mxu0
        %v3365 = vadd.f32 0.0, %v3364
        %v3366 = vpop.f32.mrb[0].mxu0
        %v3367 = vpop.f32.mrb[0].mxu0
        %v3368 = vadd.f32 0.0, %v3367
        %v3369 = vpop.f32.mrb[0].mxu0
        %3370 = vmatprep.mubr.bf16.mxu0 0
        %3371 = vmatmul.mubr.bf16.gmra.mrb[0].mxu0 %v3218
        %v3372 = vpop.f32.mrb[0].mxu0
        %v3373 = vadd.f32 0.0, %v3372
        %v3374 = vpop.f32.mrb[0].mxu0
        %v3375 = vpop.f32.mrb[0].mxu0
        %v3376 = vadd.f32 0.0, %v3375
        %v3377 = vpop.f32.mrb[0].mxu0
        %3378 = vmatprep.mubr.bf16.mxu0 0
        %3379 = vmatmul.mubr.bf16.gmra.mrb[0].mxu0 %v3221
        %v3380 = vpop.f32.mrb[0].mxu0
        %v3381 = vadd.f32 0.0, %v3380
        %v3382 = vpop.f32.mrb[0].mxu0
        %v3383 = vpop.f32.mrb[0].mxu0
        %v3384 = vadd.f32 0.0, %v3383
        %v3385 = vpop.f32.mrb[0].mxu0
        %3386 = vdwg.mxu0
        %v3387 = vadd.f32 %v2820, %v3261
        %v3388 = vadd.f32 %v2823, %v3264
        %v3389 = vadd.f32 %v2828, %v3269
        %v3390 = vadd.f32 %v2831, %v3272
        %v3391 = vadd.f32 %v2836, %v3277
        %v3392 = vadd.f32 %v2839, %v3280
        %v3393 = vadd.f32 %v2844, %v3285
        %v3394 = vadd.f32 %v2847, %v3288
        %v3395 = vadd.f32 %v2852, %v3293
        %v3396 = vadd.f32 %v2855, %v3296
        %v3397 = vadd.f32 %v2860, %v3301
        %v3398 = vadd.f32 %v2863, %v3304
        %v3399 = vadd.f32 %v2868, %v3309
        %v3400 = vadd.f32 %v2871, %v3312
        %v3401 = vadd.f32 %v2876, %v3317
        %v3402 = vadd.f32 %v2879, %v3320
        %v3403 = vadd.f32 %v2884, %v3325
        %v3404 = vadd.f32 %v2887, %v3328
        %v3405 = vadd.f32 %v2892, %v3333
        %v3406 = vadd.f32 %v2895, %v3336
        %v3407 = vadd.f32 %v2900, %v3341
        %v3408 = vadd.f32 %v2903, %v3344
        %v3409 = vadd.f32 %v2908, %v3349
        %v3410 = vadd.f32 %v2911, %v3352
        %v3411 = vadd.f32 %v2916, %v3357
        %v3412 = vadd.f32 %v2919, %v3360
        %v3413 = vadd.f32 %v2924, %v3365
        %v3414 = vadd.f32 %v2927, %v3368
        %v3415 = vadd.f32 %v2932, %v3373
        %v3416 = vadd.f32 %v2935, %v3376
        %v3417 = vadd.f32 %v2940, %v3381
        %v3418 = vadd.f32 %v2943, %v3384
        %v3419 = vlaneseq
        %v3420 = vshrl.u32 %v3419, 7
        %v3421 = vsub.s32 0, %v3420
        %v3422 = vrot.slane %v1920, %v3421
        %v3423 = vadd.f32 %v3387, %v3422
        %v3424 = vadd.f32 %v3388, %v3422
        %v3425 = vadd.f32 %v3389, %v3422
        %v3426 = vadd.f32 %v3390, %v3422
        %v3427 = vadd.f32 %v3391, %v3422
        %v3428 = vadd.f32 %v3392, %v3422
        %v3429 = vadd.f32 %v3393, %v3422
        %v3430 = vadd.f32 %v3394, %v3422
        %v3431 = vadd.f32 %v3395, %v3422
        %v3432 = vadd.f32 %v3396, %v3422
        %v3433 = vadd.f32 %v3397, %v3422
        %v3434 = vadd.f32 %v3398, %v3422
        %v3435 = vadd.f32 %v3399, %v3422
        %v3436 = vadd.f32 %v3400, %v3422
        %v3437 = vadd.f32 %v3401, %v3422
        %v3438 = vadd.f32 %v3402, %v3422
        %v3439 = vadd.f32 %v3403, %v3422
        %v3440 = vadd.f32 %v3404, %v3422
        %v3441 = vadd.f32 %v3405, %v3422
        %v3442 = vadd.f32 %v3406, %v3422
        %v3443 = vadd.f32 %v3407, %v3422
        %v3444 = vadd.f32 %v3408, %v3422
        %v3445 = vadd.f32 %v3409, %v3422
        %v3446 = vadd.f32 %v3410, %v3422
        %v3447 = vadd.f32 %v3411, %v3422
        %v3448 = vadd.f32 %v3412, %v3422
        %v3449 = vadd.f32 %v3413, %v3422
        %v3450 = vadd.f32 %v3414, %v3422
        %v3451 = vadd.f32 %v3415, %v3422
        %v3452 = vadd.f32 %v3416, %v3422
        %v3453 = vadd.f32 %v3417, %v3422
        %v3454 = vadd.f32 %v3418, %v3422
        %v3455 = vtanh.pop %v3423
        %v3456 = vtanh.pop %v3424
        %v3457 = vtanh.pop %v3425
        %v3458 = vtanh.pop %v3426
        %v3459 = vtanh.pop %v3427
        %v3460 = vtanh.pop %v3428
        %v3461 = vtanh.pop %v3429
        %v3462 = vtanh.pop %v3430
        %v3463 = vtanh.pop %v3431
        %v3464 = vtanh.pop %v3432
        %v3465 = vtanh.pop %v3433
        %v3466 = vtanh.pop %v3434
        %v3467 = vtanh.pop %v3435
        %v3468 = vtanh.pop %v3436
        %v3469 = vtanh.pop %v3437
        %v3470 = vtanh.pop %v3438
        %v3471 = vtanh.pop %v3439
        %v3472 = vtanh.pop %v3440
        %v3473 = vtanh.pop %v3441
        %v3474 = vtanh.pop %v3442
        %v3475 = vtanh.pop %v3443
        %v3476 = vtanh.pop %v3444
        %v3477 = vtanh.pop %v3445
        %v3478 = vtanh.pop %v3446
        %v3479 = vtanh.pop %v3447
        %v3480 = vtanh.pop %v3448
        %v3481 = vtanh.pop %v3449
        %v3482 = vtanh.pop %v3450
        %v3483 = vtanh.pop %v3451
        %v3484 = vtanh.pop %v3452
        %v3485 = vtanh.pop %v3453
        %v3486 = vtanh.pop %v3454
        %v3487 = vmul.f32 %v3455, 1.442695
        %v3488 = vpow.pop %v3487
        %v3489 = vmul.f32 %v3456, 1.442695
        %v3490 = vpow.pop %v3489
        %v3491 = vmul.f32 %v3457, 1.442695
        %v3492 = vpow.pop %v3491
        %v3493 = vmul.f32 %v3458, 1.442695
        %v3494 = vpow.pop %v3493
        %v3495 = vmul.f32 %v3459, 1.442695
        %v3496 = vpow.pop %v3495
        %v3497 = vmul.f32 %v3460, 1.442695
        %v3498 = vpow.pop %v3497
        %v3499 = vmul.f32 %v3461, 1.442695
        %v3500 = vpow.pop %v3499
        %v3501 = vmul.f32 %v3462, 1.442695
        %v3502 = vpow.pop %v3501
        %v3503 = vmul.f32 %v3463, 1.442695
        %v3504 = vpow.pop %v3503
        %v3505 = vmul.f32 %v3464, 1.442695
        %v3506 = vpow.pop %v3505
        %v3507 = vmul.f32 %v3465, 1.442695
        %v3508 = vpow.pop %v3507
        %v3509 = vmul.f32 %v3466, 1.442695
        %v3510 = vpow.pop %v3509
        %v3511 = vmul.f32 %v3467, 1.442695
        %v3512 = vpow.pop %v3511
        %v3513 = vmul.f32 %v3468, 1.442695
        %v3514 = vpow.pop %v3513
        %v3515 = vmul.f32 %v3469, 1.442695
        %v3516 = vpow.pop %v3515
        %v3517 = vmul.f32 %v3470, 1.442695
        %v3518 = vpow.pop %v3517
        %v3519 = vmul.f32 %v3471, 1.442695
        %v3520 = vpow.pop %v3519
        %v3521 = vmul.f32 %v3472, 1.442695
        %v3522 = vpow.pop %v3521
        %v3523 = vmul.f32 %v3473, 1.442695
        %v3524 = vpow.pop %v3523
        %v3525 = vmul.f32 %v3474, 1.442695
        %v3526 = vpow.pop %v3525
        %v3527 = vmul.f32 %v3475, 1.442695
        %v3528 = vpow.pop %v3527
        %v3529 = vmul.f32 %v3476, 1.442695
        %v3530 = vpow.pop %v3529
        %v3531 = vmul.f32 %v3477, 1.442695
        %v3532 = vpow.pop %v3531
        %v3533 = vmul.f32 %v3478, 1.442695
        %v3534 = vpow.pop %v3533
        %v3535 = vmul.f32 %v3479, 1.442695
        %v3536 = vpow.pop %v3535
        %v3537 = vmul.f32 %v3480, 1.442695
        %v3538 = vpow.pop %v3537
        %v3539 = vmul.f32 %v3481, 1.442695
        %v3540 = vpow.pop %v3539
        %v3541 = vmul.f32 %v3482, 1.442695
        %v3542 = vpow.pop %v3541
        %v3543 = vmul.f32 %v3483, 1.442695
        %v3544 = vpow.pop %v3543
        %v3545 = vmul.f32 %v3484, 1.442695
        %v3546 = vpow.pop %v3545
        %v3547 = vmul.f32 %v3485, 1.442695
        %v3548 = vpow.pop %v3547
        %v3549 = vmul.f32 %v3486, 1.442695
        %v3550 = vpow.pop %v3549
        %3583 = vrot.lane.b32.xlu0 %v3423, 125
        %v3584 = vpop.permute.xlu0 %3583
        %3585 = vrot.lane.b32.xlu0 %v3424, 125
        %v3586 = vpop.permute.xlu0 %3585
        %3587 = vrot.lane.b32.xlu0 %v3425, 125
        %v3588 = vpop.permute.xlu0 %3587
        %3589 = vrot.lane.b32.xlu0 %v3426, 125
        %v3590 = vpop.permute.xlu0 %3589
        %3591 = vrot.lane.b32.xlu0 %v3427, 125
        %v3592 = vpop.permute.xlu0 %3591
        %3593 = vrot.lane.b32.xlu0 %v3428, 125
        %v3594 = vpop.permute.xlu0 %3593
        %3595 = vrot.lane.b32.xlu0 %v3429, 125
        %v3596 = vpop.permute.xlu0 %3595
        %3597 = vrot.lane.b32.xlu0 %v3430, 125
        %v3598 = vpop.permute.xlu0 %3597
        %3599 = vrot.lane.b32.xlu0 %v3431, 125
        %v3600 = vpop.permute.xlu0 %3599
        %3601 = vrot.lane.b32.xlu0 %v3432, 125
        %v3602 = vpop.permute.xlu0 %3601
        %3603 = vrot.lane.b32.xlu0 %v3433, 125
        %v3604 = vpop.permute.xlu0 %3603
        %3605 = vrot.lane.b32.xlu0 %v3434, 125
        %v3606 = vpop.permute.xlu0 %3605
        %3607 = vrot.lane.b32.xlu0 %v3435, 125
        %v3608 = vpop.permute.xlu0 %3607
        %3609 = vrot.lane.b32.xlu0 %v3436, 125
        %v3610 = vpop.permute.xlu0 %3609
        %3611 = vrot.lane.b32.xlu0 %v3437, 125
        %v3612 = vpop.permute.xlu0 %3611
        %3613 = vrot.lane.b32.xlu0 %v3438, 125
        %v3614 = vpop.permute.xlu0 %3613
        %3615 = vrot.lane.b32.xlu0 %v3439, 125
        %v3616 = vpop.permute.xlu0 %3615
        %3617 = vrot.lane.b32.xlu0 %v3440, 125
        %v3618 = vpop.permute.xlu0 %3617
        %3619 = vrot.lane.b32.xlu0 %v3441, 125
        %v3620 = vpop.permute.xlu0 %3619
        %3621 = vrot.lane.b32.xlu0 %v3442, 125
        %v3622 = vpop.permute.xlu0 %3621
        %3623 = vrot.lane.b32.xlu0 %v3443, 125
        %v3624 = vpop.permute.xlu0 %3623
        %3625 = vrot.lane.b32.xlu0 %v3444, 125
        %v3626 = vpop.permute.xlu0 %3625
        %3627 = vrot.lane.b32.xlu0 %v3445, 125
        %v3628 = vpop.permute.xlu0 %3627
        %3629 = vrot.lane.b32.xlu0 %v3446, 125
        %v3630 = vpop.permute.xlu0 %3629
        %3631 = vrot.lane.b32.xlu0 %v3447, 125
        %v3632 = vpop.permute.xlu0 %3631
        %3633 = vrot.lane.b32.xlu0 %v3448, 125
        %v3634 = vpop.permute.xlu0 %3633
        %3635 = vrot.lane.b32.xlu0 %v3449, 125
        %v3636 = vpop.permute.xlu0 %3635
        %3637 = vrot.lane.b32.xlu0 %v3450, 125
        %v3638 = vpop.permute.xlu0 %3637
        %3639 = vrot.lane.b32.xlu0 %v3451, 125
        %v3640 = vpop.permute.xlu0 %3639
        %3641 = vrot.lane.b32.xlu0 %v3452, 125
        %v3642 = vpop.permute.xlu0 %3641
        %3643 = vrot.lane.b32.xlu0 %v3453, 125
        %v3644 = vpop.permute.xlu0 %3643
        %3645 = vrot.lane.b32.xlu0 %v3454, 125
        %v3646 = vpop.permute.xlu0 %3645
        %v3679 = vmul.f32 %v3488, %v3584
        %v3680 = vmul.f32 %v3490, %v3586
        %v3681 = vmul.f32 %v3492, %v3588
        %v3682 = vmul.f32 %v3494, %v3590
        %v3683 = vmul.f32 %v3496, %v3592
        %v3684 = vmul.f32 %v3498, %v3594
        %v3685 = vmul.f32 %v3500, %v3596
        %v3686 = vmul.f32 %v3502, %v3598
        %v3687 = vmul.f32 %v3504, %v3600
        %v3688 = vmul.f32 %v3506, %v3602
        %v3689 = vmul.f32 %v3508, %v3604
        %v3690 = vmul.f32 %v3510, %v3606
        %v3691 = vmul.f32 %v3512, %v3608
        %v3692 = vmul.f32 %v3514, %v3610
        %v3693 = vmul.f32 %v3516, %v3612
        %v3694 = vmul.f32 %v3518, %v3614
        %v3695 = vmul.f32 %v3520, %v3616
        %v3696 = vmul.f32 %v3522, %v3618
        %v3697 = vmul.f32 %v3524, %v3620
        %v3698 = vmul.f32 %v3526, %v3622
        %v3699 = vmul.f32 %v3528, %v3624
        %v3700 = vmul.f32 %v3530, %v3626
        %v3701 = vmul.f32 %v3532, %v3628
        %v3702 = vmul.f32 %v3534, %v3630
        %v3703 = vmul.f32 %v3536, %v3632
        %v3704 = vmul.f32 %v3538, %v3634
        %v3705 = vmul.f32 %v3540, %v3636
        %v3706 = vmul.f32 %v3542, %v3638
        %v3707 = vmul.f32 %v3544, %v3640
        %v3708 = vmul.f32 %v3546, %v3642
        %v3709 = vmul.f32 %v3548, %v3644
        %v3710 = vmul.f32 %v3550, %v3646
        %3712 = vset.pattern.permute.xlu0 32
        %3713 = vperm.xlu0 %3712, %v3679
        %v3714 = vpop.permute.xlu0 %3713
        %3717 = vset.pattern.permute.xlu0 32
        %3718 = vperm.xlu0 %3717, %v3680
        %v3719 = vpop.permute.xlu0 %3718
        %3722 = vset.pattern.permute.xlu0 32
        %3723 = vperm.xlu0 %3722, %v3681
        %v3724 = vpop.permute.xlu0 %3723
        %3727 = vset.pattern.permute.xlu0 32
        %3728 = vperm.xlu0 %3727, %v3682
        %v3729 = vpop.permute.xlu0 %3728
        %3732 = vset.pattern.permute.xlu0 32
        %3733 = vperm.xlu0 %3732, %v3683
        %v3734 = vpop.permute.xlu0 %3733
        %3737 = vset.pattern.permute.xlu0 32
        %3738 = vperm.xlu0 %3737, %v3684
        %v3739 = vpop.permute.xlu0 %3738
        %3742 = vset.pattern.permute.xlu0 32
        %3743 = vperm.xlu0 %3742, %v3685
        %v3744 = vpop.permute.xlu0 %3743
        %3747 = vset.pattern.permute.xlu0 32
        %3748 = vperm.xlu0 %3747, %v3686
        %v3749 = vpop.permute.xlu0 %3748
        %3752 = vset.pattern.permute.xlu0 32
        %3753 = vperm.xlu0 %3752, %v3687
        %v3754 = vpop.permute.xlu0 %3753
        %3757 = vset.pattern.permute.xlu0 32
        %3758 = vperm.xlu0 %3757, %v3688
        %v3759 = vpop.permute.xlu0 %3758
        %3762 = vset.pattern.permute.xlu0 32
        %3763 = vperm.xlu0 %3762, %v3689
        %v3764 = vpop.permute.xlu0 %3763
        %3767 = vset.pattern.permute.xlu0 32
        %3768 = vperm.xlu0 %3767, %v3690
        %v3769 = vpop.permute.xlu0 %3768
        %3772 = vset.pattern.permute.xlu0 32
        %3773 = vperm.xlu0 %3772, %v3691
        %v3774 = vpop.permute.xlu0 %3773
        %3777 = vset.pattern.permute.xlu0 32
        %3778 = vperm.xlu0 %3777, %v3692
        %v3779 = vpop.permute.xlu0 %3778
        %3782 = vset.pattern.permute.xlu0 32
        %3783 = vperm.xlu0 %3782, %v3693
        %v3784 = vpop.permute.xlu0 %3783
        %3787 = vset.pattern.permute.xlu0 32
        %3788 = vperm.xlu0 %3787, %v3694
        %v3789 = vpop.permute.xlu0 %3788
        %3792 = vset.pattern.permute.xlu0 32
        %3793 = vperm.xlu0 %3792, %v3695
        %v3794 = vpop.permute.xlu0 %3793
        %3797 = vset.pattern.permute.xlu0 32
        %3798 = vperm.xlu0 %3797, %v3696
        %v3799 = vpop.permute.xlu0 %3798
        %3802 = vset.pattern.permute.xlu0 32
        %3803 = vperm.xlu0 %3802, %v3697
        %v3804 = vpop.permute.xlu0 %3803
        %3807 = vset.pattern.permute.xlu0 32
        %3808 = vperm.xlu0 %3807, %v3698
        %v3809 = vpop.permute.xlu0 %3808
        %3812 = vset.pattern.permute.xlu0 32
        %3813 = vperm.xlu0 %3812, %v3699
        %v3814 = vpop.permute.xlu0 %3813
        %3817 = vset.pattern.permute.xlu0 32
        %3818 = vperm.xlu0 %3817, %v3700
        %v3819 = vpop.permute.xlu0 %3818
        %3822 = vset.pattern.permute.xlu0 32
        %3823 = vperm.xlu0 %3822, %v3701
        %v3824 = vpop.permute.xlu0 %3823
        %3827 = vset.pattern.permute.xlu0 32
        %3828 = vperm.xlu0 %3827, %v3702
        %v3829 = vpop.permute.xlu0 %3828
        %3832 = vset.pattern.permute.xlu0 32
        %3833 = vperm.xlu0 %3832, %v3703
        %v3834 = vpop.permute.xlu0 %3833
        %3837 = vset.pattern.permute.xlu0 32
        %3838 = vperm.xlu0 %3837, %v3704
        %v3839 = vpop.permute.xlu0 %3838
        %3842 = vset.pattern.permute.xlu0 32
        %3843 = vperm.xlu0 %3842, %v3705
        %v3844 = vpop.permute.xlu0 %3843
        %3847 = vset.pattern.permute.xlu0 32
        %3848 = vperm.xlu0 %3847, %v3706
        %v3849 = vpop.permute.xlu0 %3848
        %3852 = vset.pattern.permute.xlu0 32
        %3853 = vperm.xlu0 %3852, %v3707
        %v3854 = vpop.permute.xlu0 %3853
        %3857 = vset.pattern.permute.xlu0 32
        %3858 = vperm.xlu0 %3857, %v3708
        %v3859 = vpop.permute.xlu0 %3858
        %3862 = vset.pattern.permute.xlu0 32
        %3863 = vperm.xlu0 %3862, %v3709
        %v3864 = vpop.permute.xlu0 %3863
        %3867 = vset.pattern.permute.xlu0 32
        %3868 = vperm.xlu0 %3867, %v3710
        %v3869 = vpop.permute.xlu0 %3868
        %v3871 = vmul.f32 %v3714, %v3423
        %v3872 = vmul.f32 %v3719, %v3424
        %v3873 = vmul.f32 %v3724, %v3425
        %v3874 = vmul.f32 %v3729, %v3426
        %v3875 = vmul.f32 %v3734, %v3427
        %v3876 = vmul.f32 %v3739, %v3428
        %v3877 = vmul.f32 %v3744, %v3429
        %v3878 = vmul.f32 %v3749, %v3430
        %v3879 = vmul.f32 %v3754, %v3431
        %v3880 = vmul.f32 %v3759, %v3432
        %v3881 = vmul.f32 %v3764, %v3433
        %v3882 = vmul.f32 %v3769, %v3434
        %v3883 = vmul.f32 %v3774, %v3435
        %v3884 = vmul.f32 %v3779, %v3436
        %v3885 = vmul.f32 %v3784, %v3437
        %v3886 = vmul.f32 %v3789, %v3438
        %v3887 = vmul.f32 %v3794, %v3439
        %v3888 = vmul.f32 %v3799, %v3440
        %v3889 = vmul.f32 %v3804, %v3441
        %v3890 = vmul.f32 %v3809, %v3442
        %v3891 = vmul.f32 %v3814, %v3443
        %v3892 = vmul.f32 %v3819, %v3444
        %v3893 = vmul.f32 %v3824, %v3445
        %v3894 = vmul.f32 %v3829, %v3446
        %v3895 = vmul.f32 %v3834, %v3447
        %v3896 = vmul.f32 %v3839, %v3448
        %v3897 = vmul.f32 %v3844, %v3449
        %v3898 = vmul.f32 %v3849, %v3450
        %v3899 = vmul.f32 %v3854, %v3451
        %v3900 = vmul.f32 %v3859, %v3452
        %v3901 = vmul.f32 %v3864, %v3453
        %v3902 = vmul.f32 %v3869, %v3454
        %v3903 = vsel %vm1534, %v3871, 0.0
        %v3904 = vsel %vm1534, %v3872, 0.0
        %v3905 = vadd.f32 %v3903, %v3904
        %v3906 = vrot.slane %v3905, 4
        %v3907 = vadd.f32 %v3905, %v3906
        %v3908 = vrot.slane %v3907, 2
        %v3909 = vadd.f32 %v3907, %v3908
        %v3910 = vrot.slane %v3909, 1
        %v3911 = vadd.f32 %v3909, %v3910
        %v3912 = vsel %vm1534, %v3873, 0.0
        %v3913 = vsel %vm1534, %v3874, 0.0
        %v3914 = vadd.f32 %v3912, %v3913
        %v3915 = vrot.slane %v3914, 4
        %v3916 = vadd.f32 %v3914, %v3915
        %v3917 = vrot.slane %v3916, 2
        %v3918 = vadd.f32 %v3916, %v3917
        %v3919 = vrot.slane %v3918, 1
        %v3920 = vadd.f32 %v3918, %v3919
        %v3921 = vsel %vm1534, %v3875, 0.0
        %v3922 = vsel %vm1534, %v3876, 0.0
        %v3923 = vadd.f32 %v3921, %v3922
        %v3924 = vrot.slane %v3923, 4
        %v3925 = vadd.f32 %v3923, %v3924
        %v3926 = vrot.slane %v3925, 2
        %v3927 = vadd.f32 %v3925, %v3926
        %v3928 = vrot.slane %v3927, 1
        %v3929 = vadd.f32 %v3927, %v3928
        %v3930 = vsel %vm1534, %v3877, 0.0
        %v3931 = vsel %vm1534, %v3878, 0.0
        %v3932 = vadd.f32 %v3930, %v3931
        %v3933 = vrot.slane %v3932, 4
        %v3934 = vadd.f32 %v3932, %v3933
        %v3935 = vrot.slane %v3934, 2
        %v3936 = vadd.f32 %v3934, %v3935
        %v3937 = vrot.slane %v3936, 1
        %v3938 = vadd.f32 %v3936, %v3937
        %v3939 = vsel %vm1534, %v3879, 0.0
        %v3940 = vsel %vm1534, %v3880, 0.0
        %v3941 = vadd.f32 %v3939, %v3940
        %v3942 = vrot.slane %v3941, 4
        %v3943 = vadd.f32 %v3941, %v3942
        %v3944 = vrot.slane %v3943, 2
        %v3945 = vadd.f32 %v3943, %v3944
        %v3946 = vrot.slane %v3945, 1
        %v3947 = vadd.f32 %v3945, %v3946
        %v3948 = vsel %vm1534, %v3881, 0.0
        %v3949 = vsel %vm1534, %v3882, 0.0
        %v3950 = vadd.f32 %v3948, %v3949
        %v3951 = vrot.slane %v3950, 4
        %v3952 = vadd.f32 %v3950, %v3951
        %v3953 = vrot.slane %v3952, 2
        %v3954 = vadd.f32 %v3952, %v3953
        %v3955 = vrot.slane %v3954, 1
        %v3956 = vadd.f32 %v3954, %v3955
        %v3957 = vsel %vm1534, %v3883, 0.0
        %v3958 = vsel %vm1534, %v3884, 0.0
        %v3959 = vadd.f32 %v3957, %v3958
        %v3960 = vrot.slane %v3959, 4
        %v3961 = vadd.f32 %v3959, %v3960
        %v3962 = vrot.slane %v3961, 2
        %v3963 = vadd.f32 %v3961, %v3962
        %v3964 = vrot.slane %v3963, 1
        %v3965 = vadd.f32 %v3963, %v3964
        %v3966 = vsel %vm1534, %v3885, 0.0
        %v3967 = vsel %vm1534, %v3886, 0.0
        %v3968 = vadd.f32 %v3966, %v3967
        %v3969 = vrot.slane %v3968, 4
        %v3970 = vadd.f32 %v3968, %v3969
        %v3971 = vrot.slane %v3970, 2
        %v3972 = vadd.f32 %v3970, %v3971
        %v3973 = vrot.slane %v3972, 1
        %v3974 = vadd.f32 %v3972, %v3973
        %v3975 = vsel %vm1534, %v3887, 0.0
        %v3976 = vsel %vm1534, %v3888, 0.0
        %v3977 = vadd.f32 %v3975, %v3976
        %v3978 = vrot.slane %v3977, 4
        %v3979 = vadd.f32 %v3977, %v3978
        %v3980 = vrot.slane %v3979, 2
        %v3981 = vadd.f32 %v3979, %v3980
        %v3982 = vrot.slane %v3981, 1
        %v3983 = vadd.f32 %v3981, %v3982
        %v3984 = vsel %vm1534, %v3889, 0.0
        %v3985 = vsel %vm1534, %v3890, 0.0
        %v3986 = vadd.f32 %v3984, %v3985
        %v3987 = vrot.slane %v3986, 4
        %v3988 = vadd.f32 %v3986, %v3987
        %v3989 = vrot.slane %v3988, 2
        %v3990 = vadd.f32 %v3988, %v3989
        %v3991 = vrot.slane %v3990, 1
        %v3992 = vadd.f32 %v3990, %v3991
        %v3993 = vsel %vm1534, %v3891, 0.0
        %v3994 = vsel %vm1534, %v3892, 0.0
        %v3995 = vadd.f32 %v3993, %v3994
        %v3996 = vrot.slane %v3995, 4
        %v3997 = vadd.f32 %v3995, %v3996
        %v3998 = vrot.slane %v3997, 2
        %v3999 = vadd.f32 %v3997, %v3998
        %v4000 = vrot.slane %v3999, 1
        %v4001 = vadd.f32 %v3999, %v4000
        %v4002 = vsel %vm1534, %v3893, 0.0
        %v4003 = vsel %vm1534, %v3894, 0.0
        %v4004 = vadd.f32 %v4002, %v4003
        %v4005 = vrot.slane %v4004, 4
        %v4006 = vadd.f32 %v4004, %v4005
        %v4007 = vrot.slane %v4006, 2
        %v4008 = vadd.f32 %v4006, %v4007
        %v4009 = vrot.slane %v4008, 1
        %v4010 = vadd.f32 %v4008, %v4009
        %v4011 = vsel %vm1534, %v3895, 0.0
        %v4012 = vsel %vm1534, %v3896, 0.0
        %v4013 = vadd.f32 %v4011, %v4012
        %v4014 = vrot.slane %v4013, 4
        %v4015 = vadd.f32 %v4013, %v4014
        %v4016 = vrot.slane %v4015, 2
        %v4017 = vadd.f32 %v4015, %v4016
        %v4018 = vrot.slane %v4017, 1
        %v4019 = vadd.f32 %v4017, %v4018
        %v4020 = vsel %vm1534, %v3897, 0.0
        %v4021 = vsel %vm1534, %v3898, 0.0
        %v4022 = vadd.f32 %v4020, %v4021
        %v4023 = vrot.slane %v4022, 4
        %v4024 = vadd.f32 %v4022, %v4023
        %v4025 = vrot.slane %v4024, 2
        %v4026 = vadd.f32 %v4024, %v4025
        %v4027 = vrot.slane %v4026, 1
        %v4028 = vadd.f32 %v4026, %v4027
        %v4029 = vsel %vm1534, %v3899, 0.0
        %v4030 = vsel %vm1534, %v3900, 0.0
        %v4031 = vadd.f32 %v4029, %v4030
        %v4032 = vrot.slane %v4031, 4
        %v4033 = vadd.f32 %v4031, %v4032
        %v4034 = vrot.slane %v4033, 2
        %v4035 = vadd.f32 %v4033, %v4034
        %v4036 = vrot.slane %v4035, 1
        %v4037 = vadd.f32 %v4035, %v4036
        %v4038 = vsel %vm1534, %v3901, 0.0
        %v4039 = vsel %vm1534, %v3902, 0.0
        %v4040 = vadd.f32 %v4038, %v4039
        %v4041 = vrot.slane %v4040, 4
        %v4042 = vadd.f32 %v4040, %v4041
        %v4043 = vrot.slane %v4042, 2
        %v4044 = vadd.f32 %v4042, %v4043
        %v4045 = vrot.slane %v4044, 1
        %v4046 = vadd.f32 %v4044, %v4045
        %v4047 = vadd.f32 %v3911, 1e-06
        %v4048 = vadd.f32 %v3920, 1e-06
        %v4049 = vadd.f32 %v3929, 1e-06
        %v4050 = vadd.f32 %v3938, 1e-06
        %v4051 = vadd.f32 %v3947, 1e-06
        %v4052 = vadd.f32 %v3956, 1e-06
        %v4053 = vadd.f32 %v3965, 1e-06
        %v4054 = vadd.f32 %v3974, 1e-06
        %v4055 = vadd.f32 %v3983, 1e-06
        %v4056 = vadd.f32 %v3992, 1e-06
        %v4057 = vadd.f32 %v4001, 1e-06
        %v4058 = vadd.f32 %v4010, 1e-06
        %v4059 = vadd.f32 %v4019, 1e-06
        %v4060 = vadd.f32 %v4028, 1e-06
        %v4061 = vadd.f32 %v4037, 1e-06
        %v4062 = vadd.f32 %v4046, 1e-06
        %v4063 = vrcp.pop %v4047
        %v4064 = vmul.f32 1.0, %v4063
        %v4065 = vrcp.pop %v4048
        %v4066 = vmul.f32 1.0, %v4065
        %v4067 = vrcp.pop %v4049
        %v4068 = vmul.f32 1.0, %v4067
        %v4069 = vrcp.pop %v4050
        %v4070 = vmul.f32 1.0, %v4069
        %v4071 = vrcp.pop %v4051
        %v4072 = vmul.f32 1.0, %v4071
        %v4073 = vrcp.pop %v4052
        %v4074 = vmul.f32 1.0, %v4073
        %v4075 = vrcp.pop %v4053
        %v4076 = vmul.f32 1.0, %v4075
        %v4077 = vrcp.pop %v4054
        %v4078 = vmul.f32 1.0, %v4077
        %v4079 = vrcp.pop %v4055
        %v4080 = vmul.f32 1.0, %v4079
        %v4081 = vrcp.pop %v4056
        %v4082 = vmul.f32 1.0, %v4081
        %v4083 = vrcp.pop %v4057
        %v4084 = vmul.f32 1.0, %v4083
        %v4085 = vrcp.pop %v4058
        %v4086 = vmul.f32 1.0, %v4085
        %v4087 = vrcp.pop %v4059
        %v4088 = vmul.f32 1.0, %v4087
        %v4089 = vrcp.pop %v4060
        %v4090 = vmul.f32 1.0, %v4089
        %v4091 = vrcp.pop %v4061
        %v4092 = vmul.f32 1.0, %v4091
        %v4093 = vrcp.pop %v4062
        %v4094 = vmul.f32 1.0, %v4093
        %4096 = vset.pattern.permute.xlu0 34
        %4097 = vperm.xlu0 %4096, %v4064
        %v4098 = vpop.permute.xlu0 %4097
        %4101 = vset.pattern.permute.xlu0 34
        %4102 = vperm.xlu0 %4101, %v4066
        %v4103 = vpop.permute.xlu0 %4102
        %4106 = vset.pattern.permute.xlu0 34
        %4107 = vperm.xlu0 %4106, %v4068
        %v4108 = vpop.permute.xlu0 %4107
        %4111 = vset.pattern.permute.xlu0 34
        %4112 = vperm.xlu0 %4111, %v4070
        %v4113 = vpop.permute.xlu0 %4112
        %4116 = vset.pattern.permute.xlu0 34
        %4117 = vperm.xlu0 %4116, %v4072
        %v4118 = vpop.permute.xlu0 %4117
        %4121 = vset.pattern.permute.xlu0 34
        %4122 = vperm.xlu0 %4121, %v4074
        %v4123 = vpop.permute.xlu0 %4122
        %4126 = vset.pattern.permute.xlu0 34
        %4127 = vperm.xlu0 %4126, %v4076
        %v4128 = vpop.permute.xlu0 %4127
        %4131 = vset.pattern.permute.xlu0 34
        %4132 = vperm.xlu0 %4131, %v4078
        %v4133 = vpop.permute.xlu0 %4132
        %4136 = vset.pattern.permute.xlu0 34
        %4137 = vperm.xlu0 %4136, %v4080
        %v4138 = vpop.permute.xlu0 %4137
        %4141 = vset.pattern.permute.xlu0 34
        %4142 = vperm.xlu0 %4141, %v4082
        %v4143 = vpop.permute.xlu0 %4142
        %4146 = vset.pattern.permute.xlu0 34
        %4147 = vperm.xlu0 %4146, %v4084
        %v4148 = vpop.permute.xlu0 %4147
        %4151 = vset.pattern.permute.xlu0 34
        %4152 = vperm.xlu0 %4151, %v4086
        %v4153 = vpop.permute.xlu0 %4152
        %4156 = vset.pattern.permute.xlu0 34
        %4157 = vperm.xlu0 %4156, %v4088
        %v4158 = vpop.permute.xlu0 %4157
        %4161 = vset.pattern.permute.xlu0 34
        %4162 = vperm.xlu0 %4161, %v4090
        %v4163 = vpop.permute.xlu0 %4162
        %4166 = vset.pattern.permute.xlu0 34
        %4167 = vperm.xlu0 %4166, %v4092
        %v4168 = vpop.permute.xlu0 %4167
        %4171 = vset.pattern.permute.xlu0 34
        %4172 = vperm.xlu0 %4171, %v4094
        %v4173 = vpop.permute.xlu0 %4172
        %v4175 = vmul.f32 %v3911, %v4098
        %v4176 = vmul.f32 %v3920, %v4103
        %v4177 = vmul.f32 %v3929, %v4108
        %v4178 = vmul.f32 %v3938, %v4113
        %v4179 = vmul.f32 %v3947, %v4118
        %v4180 = vmul.f32 %v3956, %v4123
        %v4181 = vmul.f32 %v3965, %v4128
        %v4182 = vmul.f32 %v3974, %v4133
        %v4183 = vmul.f32 %v3983, %v4138
        %v4184 = vmul.f32 %v3992, %v4143
        %v4185 = vmul.f32 %v4001, %v4148
        %v4186 = vmul.f32 %v4010, %v4153
        %v4187 = vmul.f32 %v4019, %v4158
        %v4188 = vmul.f32 %v4028, %v4163
        %v4189 = vmul.f32 %v4037, %v4168
        %v4190 = vmul.f32 %v4046, %v4173
        %4191 = vrot.lane.b32.xlu0 %v4064, 127
        %v4192 = vpop.permute.xlu0 %4191
        %4193 = vrot.lane.b32.xlu0 %v4066, 127
        %v4194 = vpop.permute.xlu0 %4193
        %4195 = vrot.lane.b32.xlu0 %v4068, 127
        %v4196 = vpop.permute.xlu0 %4195
        %4197 = vrot.lane.b32.xlu0 %v4070, 127
        %v4198 = vpop.permute.xlu0 %4197
        %4199 = vrot.lane.b32.xlu0 %v4072, 127
        %v4200 = vpop.permute.xlu0 %4199
        %4201 = vrot.lane.b32.xlu0 %v4074, 127
        %v4202 = vpop.permute.xlu0 %4201
        %4203 = vrot.lane.b32.xlu0 %v4076, 127
        %v4204 = vpop.permute.xlu0 %4203
        %4205 = vrot.lane.b32.xlu0 %v4078, 127
        %v4206 = vpop.permute.xlu0 %4205
        %4207 = vrot.lane.b32.xlu0 %v4080, 127
        %v4208 = vpop.permute.xlu0 %4207
        %4209 = vrot.lane.b32.xlu0 %v4082, 127
        %v4210 = vpop.permute.xlu0 %4209
        %4211 = vrot.lane.b32.xlu0 %v4084, 127
        %v4212 = vpop.permute.xlu0 %4211
        %4213 = vrot.lane.b32.xlu0 %v4086, 127
        %v4214 = vpop.permute.xlu0 %4213
        %4215 = vrot.lane.b32.xlu0 %v4088, 127
        %v4216 = vpop.permute.xlu0 %4215
        %4217 = vrot.lane.b32.xlu0 %v4090, 127
        %v4218 = vpop.permute.xlu0 %4217
        %4219 = vrot.lane.b32.xlu0 %v4092, 127
        %v4220 = vpop.permute.xlu0 %4219
        %4221 = vrot.lane.b32.xlu0 %v4094, 127
        %v4222 = vpop.permute.xlu0 %4221
        %v4239 = vmul.f32 %v3911, %v4192
        %v4240 = vmul.f32 %v3920, %v4194
        %v4241 = vmul.f32 %v3929, %v4196
        %v4242 = vmul.f32 %v3938, %v4198
        %v4243 = vmul.f32 %v3947, %v4200
        %v4244 = vmul.f32 %v3956, %v4202
        %v4245 = vmul.f32 %v3965, %v4204
        %v4246 = vmul.f32 %v3974, %v4206
        %v4247 = vmul.f32 %v3983, %v4208
        %v4248 = vmul.f32 %v3992, %v4210
        %v4249 = vmul.f32 %v4001, %v4212
        %v4250 = vmul.f32 %v4010, %v4214
        %v4251 = vmul.f32 %v4019, %v4216
        %v4252 = vmul.f32 %v4028, %v4218
        %v4253 = vmul.f32 %v4037, %v4220
        %v4254 = vmul.f32 %v4046, %v4222
        %v4255 = vadd.f32 %v4239, %v1855
        %v4256 = vadd.f32 %v4240, %v1855
        %v4257 = vadd.f32 %v4241, %v1855
        %v4258 = vadd.f32 %v4242, %v1855
        %v4259 = vadd.f32 %v4243, %v1855
        %v4260 = vadd.f32 %v4244, %v1855
        %v4261 = vadd.f32 %v4245, %v1855
        %v4262 = vadd.f32 %v4246, %v1855
        %v4263 = vadd.f32 %v4247, %v1855
        %v4264 = vadd.f32 %v4248, %v1855
        %v4265 = vadd.f32 %v4249, %v1855
        %v4266 = vadd.f32 %v4250, %v1855
        %v4267 = vadd.f32 %v4251, %v1855
        %v4268 = vadd.f32 %v4252, %v1855
        %v4269 = vadd.f32 %v4253, %v1855
        %v4270 = vadd.f32 %v4254, %v1855
        %v4271 = vtanh.pop %v4255
        %v4272 = vtanh.pop %v4256
        %v4273 = vtanh.pop %v4257
        %v4274 = vtanh.pop %v4258
        %v4275 = vtanh.pop %v4259
        %v4276 = vtanh.pop %v4260
        %v4277 = vtanh.pop %v4261
        %v4278 = vtanh.pop %v4262
        %v4279 = vtanh.pop %v4263
        %v4280 = vtanh.pop %v4264
        %v4281 = vtanh.pop %v4265
        %v4282 = vtanh.pop %v4266
        %v4283 = vtanh.pop %v4267
        %v4284 = vtanh.pop %v4268
        %v4285 = vtanh.pop %v4269
        %v4286 = vtanh.pop %v4270
        %v4287 = vmul.f32 %v4271, 1.442695
        %v4288 = vpow.pop %v4287
        %v4289 = vmul.f32 %v4272, 1.442695
        %v4290 = vpow.pop %v4289
        %v4291 = vmul.f32 %v4273, 1.442695
        %v4292 = vpow.pop %v4291
        %v4293 = vmul.f32 %v4274, 1.442695
        %v4294 = vpow.pop %v4293
        %v4295 = vmul.f32 %v4275, 1.442695
        %v4296 = vpow.pop %v4295
        %v4297 = vmul.f32 %v4276, 1.442695
        %v4298 = vpow.pop %v4297
        %v4299 = vmul.f32 %v4277, 1.442695
        %v4300 = vpow.pop %v4299
        %v4301 = vmul.f32 %v4278, 1.442695
        %v4302 = vpow.pop %v4301
        %v4303 = vmul.f32 %v4279, 1.442695
        %v4304 = vpow.pop %v4303
        %v4305 = vmul.f32 %v4280, 1.442695
        %v4306 = vpow.pop %v4305
        %v4307 = vmul.f32 %v4281, 1.442695
        %v4308 = vpow.pop %v4307
        %v4309 = vmul.f32 %v4282, 1.442695
        %v4310 = vpow.pop %v4309
        %v4311 = vmul.f32 %v4283, 1.442695
        %v4312 = vpow.pop %v4311
        %v4313 = vmul.f32 %v4284, 1.442695
        %v4314 = vpow.pop %v4313
        %v4315 = vmul.f32 %v4285, 1.442695
        %v4316 = vpow.pop %v4315
        %v4317 = vmul.f32 %v4286, 1.442695
        %v4318 = vpow.pop %v4317
        %v4319 = vld [vmem:[%s368] sm:$0xf]
        %v4320 = vld [vmem:[%s368 + $0x4] sm:$0xf]
        %v4321 = vld [vmem:[%s5] sm:$0xf]
        %v4322 = vld [vmem:[%s5 + $0x4] sm:$0xf]
        %v4323 = vld [vmem:[%s5 + $0x8] sm:$0xf]
        %v4324 = vld [vmem:[%s5 + $0xc] sm:$0xf]
        %v4325 = vld [vmem:[%s6 + $0x2] sm:$0x1]
        %v4326 = vlaneseq
        %v4327 = vshrl.u32 %v4326, 7
        %v4328 = vsub.s32 0, %v4327
        %v4329 = vrot.slane %v4325, %v4328
        %v4332 = vunpack.c.l.b16 %v4319
        %v4333 = vunpack.c.l.b16 %v4320
        %v4334 = vpack.c.b16 %v4333, %v4332
        %v4339 = vunpack.c.l.b16 %v4321
        %v4340 = vunpack.c.l.b16 %v4322
        %v4341 = vunpack.c.l.b16 %v4323
        %v4342 = vunpack.c.l.b16 %v4324
        %v4343 = vpack.c.b16 %v4340, %v4339
        %v4344 = vpack.c.b16 %v4342, %v4341
        %vm4347 = vcmask 261120
        %v4349 = vsel %vm4347, %v4334, 0
        %4351 = vmatprep.subr.bf16.mxu0 0
        %4352 = vmatpush1.bf16.msra.mxu0 %v4343
        %4353 = vmatprep.subr.bf16.mxu0 0
        %4354 = vmatpush1.bf16.msra.mxu0 %v4344
        %4355 = vmatprep.subr.bf16.mxu0 0
        %4356 = vmatpush1.bf16.msra.mxu0 0
        %4357 = vmatprep.subr.bf16.mxu0 0
        %4358 = vmatpush1.bf16.msra.mxu0 0
        %4359 = vmatprep.subr.bf16.mxu0 0
        %4360 = vmatpush1.bf16.msra.mxu0 0
        %4361 = vmatprep.subr.bf16.mxu0 0
        %4362 = vmatpush1.bf16.msra.mxu0 0
        %4363 = vmatprep.subr.bf16.mxu0 0
        %4364 = vmatpush1.bf16.msra.mxu0 0
        %4365 = vmatprep.subr.bf16.mxu0 0
        %4366 = vmatpush1.bf16.msra.mxu0 0
        %4367 = vmatprep.subr.bf16.mxu0 0
        %4368 = vmatpush1.bf16.msra.mxu0 0
        %4369 = vmatprep.subr.bf16.mxu0 0
        %4370 = vmatpush1.bf16.msra.mxu0 0
        %4371 = vmatprep.subr.bf16.mxu0 0
        %4372 = vmatpush1.bf16.msra.mxu0 0
        %4373 = vmatprep.subr.bf16.mxu0 0
        %4374 = vmatpush1.bf16.msra.mxu0 0
        %4375 = vmatprep.subr.bf16.mxu0 0
        %4376 = vmatpush1.bf16.msra.mxu0 0
        %4377 = vmatprep.subr.bf16.mxu0 0
        %4378 = vmatpush1.bf16.msra.mxu0 0
        %4379 = vmatprep.subr.bf16.mxu0 0
        %4380 = vmatpush1.bf16.msra.mxu0 0
        %4381 = vmatprep.subr.bf16.mxu0 0
        %4382 = vmatpush1.bf16.msra.mxu0 0
        %4383 = vmatprep.mubr.bf16.mxu0 0
        %4384 = vmatmul.mubr.bf16.gmra.mrb[0].mxu0 %v4349
        %v4385 = vpop.f32.mrb[0].mxu0
        %v4386 = vadd.f32 %v4329, %v4385
        %v4387 = vpop.f32.mrb[0].mxu0
        %v4388 = vpop.f32.mrb[0].mxu0
        %v4389 = vadd.f32 %v4329, %v4388
        %v4390 = vpop.f32.mrb[0].mxu0
        %4391 = vdwg.mxu0
        %v4392 = vadd.f32 %v4386, %v1855
        %v4393 = vadd.f32 %v4389, %v1855
        %v4394 = vtanh.pop %v4392
        %v4395 = vtanh.pop %v4393
        %v4396 = vmul.f32 %v4394, 1.442695
        %v4397 = vpow.pop %v4396
        %v4398 = vmul.f32 %v4395, 1.442695
        %v4399 = vpow.pop %v4398
        %v4400 = vadd.f32 %v1889, %v4288
        %v4401 = vadd.f32 %v1891, %v4290
        %v4402 = vadd.f32 %v1893, %v4292
        %v4403 = vadd.f32 %v1895, %v4294
        %v4404 = vadd.f32 %v1897, %v4296
        %v4405 = vadd.f32 %v1899, %v4298
        %v4406 = vadd.f32 %v1901, %v4300
        %v4407 = vadd.f32 %v1903, %v4302
        %v4408 = vadd.f32 %v1905, %v4304
        %v4409 = vadd.f32 %v1907, %v4306
        %v4410 = vadd.f32 %v1909, %v4308
        %v4411 = vadd.f32 %v1911, %v4310
        %v4412 = vadd.f32 %v1913, %v4312
        %v4413 = vadd.f32 %v1915, %v4314
        %v4414 = vadd.f32 %v1917, %v4316
        %v4415 = vadd.f32 %v1919, %v4318
        %v4418 = vrot.slane %v4397, 1
        %v4419 = vrot.slane %v4397, 2
        %v4420 = vrot.slane %v4397, 3
        %v4421 = vrot.slane %v4397, 4
        %v4422 = vrot.slane %v4397, 5
        %v4423 = vrot.slane %v4397, 6
        %v4424 = vrot.slane %v4397, 7
        %v4425 = vrot.slane %v4399, 1
        %v4426 = vrot.slane %v4399, 2
        %v4427 = vrot.slane %v4399, 3
        %v4428 = vrot.slane %v4399, 4
        %v4429 = vrot.slane %v4399, 5
        %v4430 = vrot.slane %v4399, 6
        %v4431 = vrot.slane %v4399, 7
        %4432 = vrot.lane.b32.xlu0 %v4397, 97
        %v4433 = vpop.permute.xlu0 %4432
        %4434 = vrot.lane.b32.xlu0 %v4418, 97
        %v4435 = vpop.permute.xlu0 %4434
        %4436 = vrot.lane.b32.xlu0 %v4419, 97
        %v4437 = vpop.permute.xlu0 %4436
        %4438 = vrot.lane.b32.xlu0 %v4420, 97
        %v4439 = vpop.permute.xlu0 %4438
        %4440 = vrot.lane.b32.xlu0 %v4421, 97
        %v4441 = vpop.permute.xlu0 %4440
        %4442 = vrot.lane.b32.xlu0 %v4422, 97
        %v4443 = vpop.permute.xlu0 %4442
        %4444 = vrot.lane.b32.xlu0 %v4423, 97
        %v4445 = vpop.permute.xlu0 %4444
        %4446 = vrot.lane.b32.xlu0 %v4424, 97
        %v4447 = vpop.permute.xlu0 %4446
        %4448 = vrot.lane.b32.xlu0 %v4399, 97
        %v4449 = vpop.permute.xlu0 %4448
        %4450 = vrot.lane.b32.xlu0 %v4425, 97
        %v4451 = vpop.permute.xlu0 %4450
        %4452 = vrot.lane.b32.xlu0 %v4426, 97
        %v4453 = vpop.permute.xlu0 %4452
        %4454 = vrot.lane.b32.xlu0 %v4427, 97
        %v4455 = vpop.permute.xlu0 %4454
        %4456 = vrot.lane.b32.xlu0 %v4428, 97
        %v4457 = vpop.permute.xlu0 %4456
        %4458 = vrot.lane.b32.xlu0 %v4429, 97
        %v4459 = vpop.permute.xlu0 %4458
        %4460 = vrot.lane.b32.xlu0 %v4430, 97
        %v4461 = vpop.permute.xlu0 %4460
        %4462 = vrot.lane.b32.xlu0 %v4431, 97
        %v4463 = vpop.permute.xlu0 %4462
        %v4480 = vadd.f32 %v4400, %v4433
        %v4481 = vadd.f32 %v4401, %v4435
        %v4482 = vadd.f32 %v4402, %v4437
        %v4483 = vadd.f32 %v4403, %v4439
        %v4484 = vadd.f32 %v4404, %v4441
        %v4485 = vadd.f32 %v4405, %v4443
        %v4486 = vadd.f32 %v4406, %v4445
        %v4487 = vadd.f32 %v4407, %v4447
        %v4488 = vadd.f32 %v4408, %v4449
        %v4489 = vadd.f32 %v4409, %v4451
        %v4490 = vadd.f32 %v4410, %v4453
        %v4491 = vadd.f32 %v4411, %v4455
        %v4492 = vadd.f32 %v4412, %v4457
        %v4493 = vadd.f32 %v4413, %v4459
        %v4494 = vadd.f32 %v4414, %v4461
        %v4495 = vadd.f32 %v4415, %v4463
        %4496 = vrot.lane.b32.xlu0 %v4397, 96
        %v4497 = vpop.permute.xlu0 %4496
        %4498 = vrot.lane.b32.xlu0 %v4418, 96
        %v4499 = vpop.permute.xlu0 %4498
        %4500 = vrot.lane.b32.xlu0 %v4419, 96
        %v4501 = vpop.permute.xlu0 %4500
        %4502 = vrot.lane.b32.xlu0 %v4420, 96
        %v4503 = vpop.permute.xlu0 %4502
        %4504 = vrot.lane.b32.xlu0 %v4421, 96
        %v4505 = vpop.permute.xlu0 %4504
        %4506 = vrot.lane.b32.xlu0 %v4422, 96
        %v4507 = vpop.permute.xlu0 %4506
        %4508 = vrot.lane.b32.xlu0 %v4423, 96
        %v4509 = vpop.permute.xlu0 %4508
        %4510 = vrot.lane.b32.xlu0 %v4424, 96
        %v4511 = vpop.permute.xlu0 %4510
        %4512 = vrot.lane.b32.xlu0 %v4399, 96
        %v4513 = vpop.permute.xlu0 %4512
        %4514 = vrot.lane.b32.xlu0 %v4425, 96
        %v4515 = vpop.permute.xlu0 %4514
        %4516 = vrot.lane.b32.xlu0 %v4426, 96
        %v4517 = vpop.permute.xlu0 %4516
        %4518 = vrot.lane.b32.xlu0 %v4427, 96
        %v4519 = vpop.permute.xlu0 %4518
        %4520 = vrot.lane.b32.xlu0 %v4428, 96
        %v4521 = vpop.permute.xlu0 %4520
        %4522 = vrot.lane.b32.xlu0 %v4429, 96
        %v4523 = vpop.permute.xlu0 %4522
        %4524 = vrot.lane.b32.xlu0 %v4430, 96
        %v4525 = vpop.permute.xlu0 %4524
        %4526 = vrot.lane.b32.xlu0 %v4431, 96
        %v4527 = vpop.permute.xlu0 %4526
        %v4544 = vadd.f32 %v4480, %v4497
        %v4545 = vadd.f32 %v4481, %v4499
        %v4546 = vadd.f32 %v4482, %v4501
        %v4547 = vadd.f32 %v4483, %v4503
        %v4548 = vadd.f32 %v4484, %v4505
        %v4549 = vadd.f32 %v4485, %v4507
        %v4550 = vadd.f32 %v4486, %v4509
        %v4551 = vadd.f32 %v4487, %v4511
        %v4552 = vadd.f32 %v4488, %v4513
        %v4553 = vadd.f32 %v4489, %v4515
        %v4554 = vadd.f32 %v4490, %v4517
        %v4555 = vadd.f32 %v4491, %v4519
        %v4556 = vadd.f32 %v4492, %v4521
        %v4557 = vadd.f32 %v4493, %v4523
        %v4558 = vadd.f32 %v4494, %v4525
        %v4559 = vadd.f32 %v4495, %v4527
        %v4560 = vadd.f32 %v4544, 1e-06
        %v4561 = vadd.f32 %v4545, 1e-06
        %v4562 = vadd.f32 %v4546, 1e-06
        %v4563 = vadd.f32 %v4547, 1e-06
        %v4564 = vadd.f32 %v4548, 1e-06
        %v4565 = vadd.f32 %v4549, 1e-06
        %v4566 = vadd.f32 %v4550, 1e-06
        %v4567 = vadd.f32 %v4551, 1e-06
        %v4568 = vadd.f32 %v4552, 1e-06
        %v4569 = vadd.f32 %v4553, 1e-06
        %v4570 = vadd.f32 %v4554, 1e-06
        %v4571 = vadd.f32 %v4555, 1e-06
        %v4572 = vadd.f32 %v4556, 1e-06
        %v4573 = vadd.f32 %v4557, 1e-06
        %v4574 = vadd.f32 %v4558, 1e-06
        %v4575 = vadd.f32 %v4559, 1e-06
        %v4576 = vrcp.pop %v4560
        %v4577 = vmul.f32 1.0, %v4576
        %v4578 = vrcp.pop %v4561
        %v4579 = vmul.f32 1.0, %v4578
        %v4580 = vrcp.pop %v4562
        %v4581 = vmul.f32 1.0, %v4580
        %v4582 = vrcp.pop %v4563
        %v4583 = vmul.f32 1.0, %v4582
        %v4584 = vrcp.pop %v4564
        %v4585 = vmul.f32 1.0, %v4584
        %v4586 = vrcp.pop %v4565
        %v4587 = vmul.f32 1.0, %v4586
        %v4588 = vrcp.pop %v4566
        %v4589 = vmul.f32 1.0, %v4588
        %v4590 = vrcp.pop %v4567
        %v4591 = vmul.f32 1.0, %v4590
        %v4592 = vrcp.pop %v4568
        %v4593 = vmul.f32 1.0, %v4592
        %v4594 = vrcp.pop %v4569
        %v4595 = vmul.f32 1.0, %v4594
        %v4596 = vrcp.pop %v4570
        %v4597 = vmul.f32 1.0, %v4596
        %v4598 = vrcp.pop %v4571
        %v4599 = vmul.f32 1.0, %v4598
        %v4600 = vrcp.pop %v4572
        %v4601 = vmul.f32 1.0, %v4600
        %v4602 = vrcp.pop %v4573
        %v4603 = vmul.f32 1.0, %v4602
        %v4604 = vrcp.pop %v4574
        %v4605 = vmul.f32 1.0, %v4604
        %v4606 = vrcp.pop %v4575
        %v4607 = vmul.f32 1.0, %v4606
        %4609 = vset.pattern.permute.xlu0 33
        %4610 = vperm.xlu0 %4609, %v1889
        %v4611 = vpop.permute.xlu0 %4610
        %4614 = vset.pattern.permute.xlu0 33
        %4615 = vperm.xlu0 %4614, %v1891
        %v4616 = vpop.permute.xlu0 %4615
        %4619 = vset.pattern.permute.xlu0 33
        %4620 = vperm.xlu0 %4619, %v1893
        %v4621 = vpop.permute.xlu0 %4620
        %4624 = vset.pattern.permute.xlu0 33
        %4625 = vperm.xlu0 %4624, %v1895
        %v4626 = vpop.permute.xlu0 %4625
        %4629 = vset.pattern.permute.xlu0 33
        %4630 = vperm.xlu0 %4629, %v1897
        %v4631 = vpop.permute.xlu0 %4630
        %4634 = vset.pattern.permute.xlu0 33
        %4635 = vperm.xlu0 %4634, %v1899
        %v4636 = vpop.permute.xlu0 %4635
        %4639 = vset.pattern.permute.xlu0 33
        %4640 = vperm.xlu0 %4639, %v1901
        %v4641 = vpop.permute.xlu0 %4640
        %4644 = vset.pattern.permute.xlu0 33
        %4645 = vperm.xlu0 %4644, %v1903
        %v4646 = vpop.permute.xlu0 %4645
        %4649 = vset.pattern.permute.xlu0 33
        %4650 = vperm.xlu0 %4649, %v1905
        %v4651 = vpop.permute.xlu0 %4650
        %4654 = vset.pattern.permute.xlu0 33
        %4655 = vperm.xlu0 %4654, %v1907
        %v4656 = vpop.permute.xlu0 %4655
        %4659 = vset.pattern.permute.xlu0 33
        %4660 = vperm.xlu0 %4659, %v1909
        %v4661 = vpop.permute.xlu0 %4660
        %4664 = vset.pattern.permute.xlu0 33
        %4665 = vperm.xlu0 %4664, %v1911
        %v4666 = vpop.permute.xlu0 %4665
        %4669 = vset.pattern.permute.xlu0 33
        %4670 = vperm.xlu0 %4669, %v1913
        %v4671 = vpop.permute.xlu0 %4670
        %4674 = vset.pattern.permute.xlu0 33
        %4675 = vperm.xlu0 %4674, %v1915
        %v4676 = vpop.permute.xlu0 %4675
        %4679 = vset.pattern.permute.xlu0 33
        %4680 = vperm.xlu0 %4679, %v1917
        %v4681 = vpop.permute.xlu0 %4680
        %4684 = vset.pattern.permute.xlu0 33
        %4685 = vperm.xlu0 %4684, %v1919
        %v4686 = vpop.permute.xlu0 %4685
        %v4688 = vmul.f32 %v4611, %v1775
        %v4689 = vmul.f32 %v4616, %v1776
        %v4690 = vmul.f32 %v4621, %v1777
        %v4691 = vmul.f32 %v4626, %v1778
        %v4692 = vmul.f32 %v4631, %v1779
        %v4693 = vmul.f32 %v4636, %v1780
        %v4694 = vmul.f32 %v4641, %v1781
        %v4695 = vmul.f32 %v4646, %v1782
        %v4696 = vmul.f32 %v4651, %v1783
        %v4697 = vmul.f32 %v4656, %v1784
        %v4698 = vmul.f32 %v4661, %v1785
        %v4699 = vmul.f32 %v4666, %v1786
        %v4700 = vmul.f32 %v4671, %v1787
        %v4701 = vmul.f32 %v4676, %v1788
        %v4702 = vmul.f32 %v4681, %v1789
        %v4703 = vmul.f32 %v4686, %v1790
        %4705 = vset.pattern.permute.xlu0 33
        %4706 = vperm.xlu0 %4705, %v4288
        %v4707 = vpop.permute.xlu0 %4706
        %4710 = vset.pattern.permute.xlu0 33
        %4711 = vperm.xlu0 %4710, %v4290
        %v4712 = vpop.permute.xlu0 %4711
        %4715 = vset.pattern.permute.xlu0 33
        %4716 = vperm.xlu0 %4715, %v4292
        %v4717 = vpop.permute.xlu0 %4716
        %4720 = vset.pattern.permute.xlu0 33
        %4721 = vperm.xlu0 %4720, %v4294
        %v4722 = vpop.permute.xlu0 %4721
        %4725 = vset.pattern.permute.xlu0 33
        %4726 = vperm.xlu0 %4725, %v4296
        %v4727 = vpop.permute.xlu0 %4726
        %4730 = vset.pattern.permute.xlu0 33
        %4731 = vperm.xlu0 %4730, %v4298
        %v4732 = vpop.permute.xlu0 %4731
        %4735 = vset.pattern.permute.xlu0 33
        %4736 = vperm.xlu0 %4735, %v4300
        %v4737 = vpop.permute.xlu0 %4736
        %4740 = vset.pattern.permute.xlu0 33
        %4741 = vperm.xlu0 %4740, %v4302
        %v4742 = vpop.permute.xlu0 %4741
        %4745 = vset.pattern.permute.xlu0 33
        %4746 = vperm.xlu0 %4745, %v4304
        %v4747 = vpop.permute.xlu0 %4746
        %4750 = vset.pattern.permute.xlu0 33
        %4751 = vperm.xlu0 %4750, %v4306
        %v4752 = vpop.permute.xlu0 %4751
        %4755 = vset.pattern.permute.xlu0 33
        %4756 = vperm.xlu0 %4755, %v4308
        %v4757 = vpop.permute.xlu0 %4756
        %4760 = vset.pattern.permute.xlu0 33
        %4761 = vperm.xlu0 %4760, %v4310
        %v4762 = vpop.permute.xlu0 %4761
        %4765 = vset.pattern.permute.xlu0 33
        %4766 = vperm.xlu0 %4765, %v4312
        %v4767 = vpop.permute.xlu0 %4766
        %4770 = vset.pattern.permute.xlu0 33
        %4771 = vperm.xlu0 %4770, %v4314
        %v4772 = vpop.permute.xlu0 %4771
        %4775 = vset.pattern.permute.xlu0 33
        %4776 = vperm.xlu0 %4775, %v4316
        %v4777 = vpop.permute.xlu0 %4776
        %4780 = vset.pattern.permute.xlu0 33
        %4781 = vperm.xlu0 %4780, %v4318
        %v4782 = vpop.permute.xlu0 %4781
        %v4784 = vmul.f32 %v4707, %v4175
        %v4785 = vmul.f32 %v4712, %v4176
        %v4786 = vmul.f32 %v4717, %v4177
        %v4787 = vmul.f32 %v4722, %v4178
        %v4788 = vmul.f32 %v4727, %v4179
        %v4789 = vmul.f32 %v4732, %v4180
        %v4790 = vmul.f32 %v4737, %v4181
        %v4791 = vmul.f32 %v4742, %v4182
        %v4792 = vmul.f32 %v4747, %v4183
        %v4793 = vmul.f32 %v4752, %v4184
        %v4794 = vmul.f32 %v4757, %v4185
        %v4795 = vmul.f32 %v4762, %v4186
        %v4796 = vmul.f32 %v4767, %v4187
        %v4797 = vmul.f32 %v4772, %v4188
        %v4798 = vmul.f32 %v4777, %v4189
        %v4799 = vmul.f32 %v4782, %v4190
        %v4800 = vadd.f32 %v4688, %v4784
        %v4801 = vadd.f32 %v4689, %v4785
        %v4802 = vadd.f32 %v4690, %v4786
        %v4803 = vadd.f32 %v4691, %v4787
        %v4804 = vadd.f32 %v4692, %v4788
        %v4805 = vadd.f32 %v4693, %v4789
        %v4806 = vadd.f32 %v4694, %v4790
        %v4807 = vadd.f32 %v4695, %v4791
        %v4808 = vadd.f32 %v4696, %v4792
        %v4809 = vadd.f32 %v4697, %v4793
        %v4810 = vadd.f32 %v4698, %v4794
        %v4811 = vadd.f32 %v4699, %v4795
        %v4812 = vadd.f32 %v4700, %v4796
        %v4813 = vadd.f32 %v4701, %v4797
        %v4814 = vadd.f32 %v4702, %v4798
        %v4815 = vadd.f32 %v4703, %v4799
        %4816 = vset.pattern.permute.xlu0 64
        %4817 = vperm.xlu0 %4816, %v4397
        %v4818 = vpop.permute.xlu0 %4817
        %4820 = vset.pattern.permute.xlu0 64
        %4821 = vperm.xlu0 %4820, %v4399
        %v4822 = vpop.permute.xlu0 %4821
        %v4824 = vmul.f32 %v4818, %v4386
        %v4825 = vmul.f32 %v4822, %v4389
        %v4828 = vrot.slane %v4824, 1
        %v4829 = vrot.slane %v4824, 2
        %v4830 = vrot.slane %v4824, 3
        %v4831 = vrot.slane %v4824, 4
        %v4832 = vrot.slane %v4824, 5
        %v4833 = vrot.slane %v4824, 6
        %v4834 = vrot.slane %v4824, 7
        %v4835 = vrot.slane %v4825, 1
        %v4836 = vrot.slane %v4825, 2
        %v4837 = vrot.slane %v4825, 3
        %v4838 = vrot.slane %v4825, 4
        %v4839 = vrot.slane %v4825, 5
        %v4840 = vrot.slane %v4825, 6
        %v4841 = vrot.slane %v4825, 7
        %v4858 = vadd.f32 %v4800, %v4824
        %v4859 = vadd.f32 %v4801, %v4828
        %v4860 = vadd.f32 %v4802, %v4829
        %v4861 = vadd.f32 %v4803, %v4830
        %v4862 = vadd.f32 %v4804, %v4831
        %v4863 = vadd.f32 %v4805, %v4832
        %v4864 = vadd.f32 %v4806, %v4833
        %v4865 = vadd.f32 %v4807, %v4834
        %v4866 = vadd.f32 %v4808, %v4825
        %v4867 = vadd.f32 %v4809, %v4835
        %v4868 = vadd.f32 %v4810, %v4836
        %v4869 = vadd.f32 %v4811, %v4837
        %v4870 = vadd.f32 %v4812, %v4838
        %v4871 = vadd.f32 %v4813, %v4839
        %v4872 = vadd.f32 %v4814, %v4840
        %v4873 = vadd.f32 %v4815, %v4841
        %4874 = vset.pattern.permute.xlu0 65
        %4875 = vperm.xlu0 %4874, %v4397
        %v4876 = vpop.permute.xlu0 %4875
        %4878 = vset.pattern.permute.xlu0 65
        %4879 = vperm.xlu0 %4878, %v4399
        %v4880 = vpop.permute.xlu0 %4879
        %v4882 = vmul.f32 %v4876, %v4386
        %v4883 = vmul.f32 %v4880, %v4389
        %v4886 = vrot.slane %v4882, 1
        %v4887 = vrot.slane %v4882, 2
        %v4888 = vrot.slane %v4882, 3
        %v4889 = vrot.slane %v4882, 4
        %v4890 = vrot.slane %v4882, 5
        %v4891 = vrot.slane %v4882, 6
        %v4892 = vrot.slane %v4882, 7
        %v4893 = vrot.slane %v4883, 1
        %v4894 = vrot.slane %v4883, 2
        %v4895 = vrot.slane %v4883, 3
        %v4896 = vrot.slane %v4883, 4
        %v4897 = vrot.slane %v4883, 5
        %v4898 = vrot.slane %v4883, 6
        %v4899 = vrot.slane %v4883, 7
        %4900 = vrot.lane.b32.xlu0 %v4882, 96
        %v4901 = vpop.permute.xlu0 %4900
        %4902 = vrot.lane.b32.xlu0 %v4886, 96
        %v4903 = vpop.permute.xlu0 %4902
        %4904 = vrot.lane.b32.xlu0 %v4887, 96
        %v4905 = vpop.permute.xlu0 %4904
        %4906 = vrot.lane.b32.xlu0 %v4888, 96
        %v4907 = vpop.permute.xlu0 %4906
        %4908 = vrot.lane.b32.xlu0 %v4889, 96
        %v4909 = vpop.permute.xlu0 %4908
        %4910 = vrot.lane.b32.xlu0 %v4890, 96
        %v4911 = vpop.permute.xlu0 %4910
        %4912 = vrot.lane.b32.xlu0 %v4891, 96
        %v4913 = vpop.permute.xlu0 %4912
        %4914 = vrot.lane.b32.xlu0 %v4892, 96
        %v4915 = vpop.permute.xlu0 %4914
        %4916 = vrot.lane.b32.xlu0 %v4883, 96
        %v4917 = vpop.permute.xlu0 %4916
        %4918 = vrot.lane.b32.xlu0 %v4893, 96
        %v4919 = vpop.permute.xlu0 %4918
        %4920 = vrot.lane.b32.xlu0 %v4894, 96
        %v4921 = vpop.permute.xlu0 %4920
        %4922 = vrot.lane.b32.xlu0 %v4895, 96
        %v4923 = vpop.permute.xlu0 %4922
        %4924 = vrot.lane.b32.xlu0 %v4896, 96
        %v4925 = vpop.permute.xlu0 %4924
        %4926 = vrot.lane.b32.xlu0 %v4897, 96
        %v4927 = vpop.permute.xlu0 %4926
        %4928 = vrot.lane.b32.xlu0 %v4898, 96
        %v4929 = vpop.permute.xlu0 %4928
        %4930 = vrot.lane.b32.xlu0 %v4899, 96
        %v4931 = vpop.permute.xlu0 %4930
        %v4948 = vadd.f32 %v4858, %v4901
        %v4949 = vadd.f32 %v4859, %v4903
        %v4950 = vadd.f32 %v4860, %v4905
        %v4951 = vadd.f32 %v4861, %v4907
        %v4952 = vadd.f32 %v4862, %v4909
        %v4953 = vadd.f32 %v4863, %v4911
        %v4954 = vadd.f32 %v4864, %v4913
        %v4955 = vadd.f32 %v4865, %v4915
        %v4956 = vadd.f32 %v4866, %v4917
        %v4957 = vadd.f32 %v4867, %v4919
        %v4958 = vadd.f32 %v4868, %v4921
        %v4959 = vadd.f32 %v4869, %v4923
        %v4960 = vadd.f32 %v4870, %v4925
        %v4961 = vadd.f32 %v4871, %v4927
        %v4962 = vadd.f32 %v4872, %v4929
        %v4963 = vadd.f32 %v4873, %v4931
        %4965 = vset.pattern.permute.xlu0 33
        %4966 = vperm.xlu0 %4965, %v4577
        %v4967 = vpop.permute.xlu0 %4966
        %4970 = vset.pattern.permute.xlu0 33
        %4971 = vperm.xlu0 %4970, %v4579
        %v4972 = vpop.permute.xlu0 %4971
        %4975 = vset.pattern.permute.xlu0 33
        %4976 = vperm.xlu0 %4975, %v4581
        %v4977 = vpop.permute.xlu0 %4976
        %4980 = vset.pattern.permute.xlu0 33
        %4981 = vperm.xlu0 %4980, %v4583
        %v4982 = vpop.permute.xlu0 %4981
        %4985 = vset.pattern.permute.xlu0 33
        %4986 = vperm.xlu0 %4985, %v4585
        %v4987 = vpop.permute.xlu0 %4986
        %4990 = vset.pattern.permute.xlu0 33
        %4991 = vperm.xlu0 %4990, %v4587
        %v4992 = vpop.permute.xlu0 %4991
        %4995 = vset.pattern.permute.xlu0 33
        %4996 = vperm.xlu0 %4995, %v4589
        %v4997 = vpop.permute.xlu0 %4996
        %5000 = vset.pattern.permute.xlu0 33
        %5001 = vperm.xlu0 %5000, %v4591
        %v5002 = vpop.permute.xlu0 %5001
        %5005 = vset.pattern.permute.xlu0 33
        %5006 = vperm.xlu0 %5005, %v4593
        %v5007 = vpop.permute.xlu0 %5006
        %5010 = vset.pattern.permute.xlu0 33
        %5011 = vperm.xlu0 %5010, %v4595
        %v5012 = vpop.permute.xlu0 %5011
        %5015 = vset.pattern.permute.xlu0 33
        %5016 = vperm.xlu0 %5015, %v4597
        %v5017 = vpop.permute.xlu0 %5016
        %5020 = vset.pattern.permute.xlu0 33
        %5021 = vperm.xlu0 %5020, %v4599
        %v5022 = vpop.permute.xlu0 %5021
        %5025 = vset.pattern.permute.xlu0 33
        %5026 = vperm.xlu0 %5025, %v4601
        %v5027 = vpop.permute.xlu0 %5026
        %5030 = vset.pattern.permute.xlu0 33
        %5031 = vperm.xlu0 %5030, %v4603
        %v5032 = vpop.permute.xlu0 %5031
        %5035 = vset.pattern.permute.xlu0 33
        %5036 = vperm.xlu0 %5035, %v4605
        %v5037 = vpop.permute.xlu0 %5036
        %5040 = vset.pattern.permute.xlu0 33
        %5041 = vperm.xlu0 %5040, %v4607
        %v5042 = vpop.permute.xlu0 %5041
        %v5044 = vmul.f32 %v4948, %v4967
        %v5045 = vmul.f32 %v4949, %v4972
        %v5046 = vmul.f32 %v4950, %v4977
        %v5047 = vmul.f32 %v4951, %v4982
        %v5048 = vmul.f32 %v4952, %v4987
        %v5049 = vmul.f32 %v4953, %v4992
        %v5050 = vmul.f32 %v4954, %v4997
        %v5051 = vmul.f32 %v4955, %v5002
        %v5052 = vmul.f32 %v4956, %v5007
        %v5053 = vmul.f32 %v4957, %v5012
        %v5054 = vmul.f32 %v4958, %v5017
        %v5055 = vmul.f32 %v4959, %v5022
        %v5056 = vmul.f32 %v4960, %v5027
        %v5057 = vmul.f32 %v4961, %v5032
        %v5058 = vmul.f32 %v4962, %v5037
        %v5059 = vmul.f32 %v4963, %v5042
        %v5076 = vrot.slane %v5045, 7
        %vm5077 = vcmask 1041409
        %v5078 = vsel %vm5077, %v5076, %v5044
        %v5079 = vrot.slane %v5046, 6
        %vm5080 = vcmask 1042434
        %v5081 = vsel %vm5080, %v5079, %v5078
        %v5082 = vrot.slane %v5047, 5
        %vm5083 = vcmask 1043459
        %v5084 = vsel %vm5083, %v5082, %v5081
        %v5085 = vrot.slane %v5048, 4
        %vm5086 = vcmask 1044484
        %v5087 = vsel %vm5086, %v5085, %v5084
        %v5088 = vrot.slane %v5049, 3
        %vm5089 = vcmask 1045509
        %v5090 = vsel %vm5089, %v5088, %v5087
        %v5091 = vrot.slane %v5050, 2
        %vm5092 = vcmask 1046534
        %v5093 = vsel %vm5092, %v5091, %v5090
        %v5094 = vrot.slane %v5051, 1
        %vm5095 = vcmask 1047559
        %v5096 = vsel %vm5095, %v5094, %v5093
        %v5097 = vrot.slane %v5053, 7
        %v5098 = vsel %vm5077, %v5097, %v5052
        %v5099 = vrot.slane %v5054, 6
        %v5100 = vsel %vm5080, %v5099, %v5098
        %v5101 = vrot.slane %v5055, 5
        %v5102 = vsel %vm5083, %v5101, %v5100
        %v5103 = vrot.slane %v5056, 4
        %v5104 = vsel %vm5086, %v5103, %v5102
        %v5105 = vrot.slane %v5057, 3
        %v5106 = vsel %vm5089, %v5105, %v5104
        %v5107 = vrot.slane %v5058, 2
        %v5108 = vsel %vm5092, %v5107, %v5106
        %v5109 = vrot.slane %v5059, 1
        %v5110 = vsel %vm5095, %v5109, %v5108
        %5113 = vst.msk [vmem:[%s349] sm:$0xff] %vm4347, %v5096
        %5114 = vst.msk [vmem:[%s349 + $0x8] sm:$0xff] %vm4347, %v5110
        %vm5115 = vcmask 1047808
        %5116 = vst.msk [vmem:[%s349] sm:$0xff] %vm5115, 0.0
        %5117 = vst.msk [vmem:[%s349 + $0x8] sm:$0xff] %vm5115, 0.0
        %s5118 = sand.u32 %s214, 1
        %s5119 = scalar_lea.sflag [#allocation3], %s5118
        %s5120 = sand.u32 %s214, 1
        %s5121 = smul.addr %s5120, 16
        %s5122 = scalar_lea.vmem [#allocation5], %s5121
        // Predicated region
        $region57: #{tpu_custom_call.1} parent=51 // pred_check
          %p5123 = pneg %p224
        $region58: #{tpu_custom_call.1} parent=51 // pred_check_branch
          %5125 = sbr.rel (%p5123) target = $region60
        $region59: #{tpu_custom_call.1} parent=51 // pred_region
          %s5126 = smul.u32 2, %s23
          %s5128 = ssub.s32 256, 256
          %5129 = vsyncadd %s5119, %s5128
          %s5130 = smul.addr %s5126, 128
          %s5131 = scalar_lea.hbm %s8, %s5130
          %s5132 = sshll.u32 %s5122, 4
          %s5133 = int_to_ptr.vmem [resolvable:$true] %s5132
          %5138 = dma.vmem_to_hbm [thread:$0]  %s5133, 256, %s5131, %s5119, 128, 128, 8
        $region60: #{tpu_custom_call.1} parent=51 // pred_fallthru
          _
      $region52: #{tpu_custom_call.1} parent=5 // pred_fallthru
        _
      %p5139 = scmp.le.s32.totalorder 2, %s18
      // Predicated region
      $region61: #{tpu_custom_call.1} parent=5 // pred_check
        %p5140 = pneg %p5139
      $region62: #{tpu_custom_call.1} parent=5 // pred_check_branch
        %5142 = sbr.rel (%p5140) target = $region64
      $region63: #{tpu_custom_call.1} parent=5 // pred_region
        %s5143 = ssub.s32 %s18, 2
        // Predicated region
        $region65: #{tpu_custom_call.1} parent=63 // pred_check
          %p5144 = pneg %p230
        $region66: #{tpu_custom_call.1} parent=63 // pred_check_branch
          %5146 = sbr.rel (%p5144) target = $region68
        $region67: #{tpu_custom_call.1} parent=63 // pred_region
          %s5147 = sand.u32 %s215, 1
          %s5148 = scalar_lea.sflag [#allocation3], %s5147
          %s5149 = sand.u32 %s215, 1
          %s5150 = smul.addr %s5149, 16
          %s5151 = scalar_lea.vmem [#allocation5], %s5150
          %5152 = dma.done %s5148, 256
        $region68: #{tpu_custom_call.1} parent=63 // pred_fallthru
          _
      $region64: #{tpu_custom_call.1} parent=5 // pred_fallthru
        _
    $region6: #{tpu_custom_call.1} parent=1 // loop_footer
      %s22 = sadd.s32 1, %s18
    $region7: #{tpu_custom_call.1} parent=1 // loop_footer_branch
      %17 = sbr.rel target = $region3
    $region8: #{tpu_custom_call.1} parent=1 // loop_exit
      _
    %5153 = vsyncpa [#allocation3], 1
    %s5154 = scalar_lea.sflag [#allocation3], 1
    %5155 = vsyncpa %s5154, 1
    %5156 = vsyncpa [#allocation4], 1
    %s5157 = scalar_lea.sflag [#allocation4], 1
    %5158 = vsyncpa %s5157, 1

</llo_original>
